<compile_context>
chip_gen: v7x
topology: tpu7x:2x2x1
jax: 0.10.0
libtpu: 0.0.40
codegen_flags: <defaults>
</compile_context>

<pallas_src>
import functools

import jax
import jax.numpy as jnp
from jax.experimental import pallas as pl
from jax.experimental.pallas import tpu as pltpu


# ----------------------------- in-kernel helpers ----------------------------

def _ln(x, g, b, eps):
    """LayerNorm over the last dim, f32 math."""
    x = x.astype(jnp.float32)
    mu = jnp.mean(x, axis=-1, keepdims=True)
    xc = x - mu
    var = jnp.mean(xc * xc, axis=-1, keepdims=True)
    return xc * jax.lax.rsqrt(var + eps) * g + b


def _silu(x):
    """x * sigmoid(x), written in tanh form so it runs on the EUP slot."""
    return x * (0.5 * (jnp.tanh(0.5 * x) + 1.0))


def _full_spec(shape):
    """Whole-array VMEM block (single-step grid)."""
    return pl.BlockSpec(shape, lambda i: (0,) * len(shape))


_ARB = pltpu.CompilerParams(dimension_semantics=("arbitrary",))


# ----------------------------- fused Pallas kernels -------------------------

def _embed_kernel(src_ref, w_ref, b_ref, pos_ref, g_ref, beta_ref, o_ref, *,
                  batch, eps):
    # x_expand + positional embedding add + layer_norm_emb, all in VMEM.
    y = jnp.dot(src_ref[...], w_ref[...],
                preferred_element_type=jnp.float32) + b_ref[...]
    y = y + jnp.tile(pos_ref[...], (batch, 1))          # row r gets pos[r % L]
    o_ref[...] = _ln(y, g_ref[...], beta_ref[...], eps).astype(o_ref.dtype)


def embed(src2, w, b, pos, g, beta, *, batch, eps):
    M, _ = src2.shape
    D = w.shape[1]
    args = (src2, w, b, pos, g, beta)
    return pl.pallas_call(
        functools.partial(_embed_kernel, batch=batch, eps=eps),
        out_shape=jax.ShapeDtypeStruct((M, D), jnp.float32),
        grid=(1,),
        in_specs=[_full_spec(a.shape) for a in args],
        out_specs=_full_spec((M, D)),
        compiler_params=_ARB,
    )(*args)


def _encoder_layer_kernel(x_ref, bias_ref,
                          win_ref, bin_ref, wout_ref, bout_ref,
                          g1_ref, b1_ref, f1w_ref, f1b_ref, f2w_ref, f2b_ref,
                          g2_ref, b2_ref,
                          o_ref, attn_scr, *, heads, eps):
    """One post-norm nn.TransformerEncoderLayer (ReLU FFN, eval mode), fully fused."""
    x = x_ref[...]
    D = x.shape[-1]
    hd = D // heads
    scale = 1.0 / float(hd) ** 0.5

    # Fused QKV in-projection (stays in VMEM).
    qkv = jnp.dot(x, win_ref[...],
                  preferred_element_type=jnp.float32) + bin_ref[...]
    q = qkv[:, 0:D]
    k = qkv[:, D:2 * D]
    v = qkv[:, 2 * D:3 * D]
    bias = bias_ref[...]                 # 0 where same position, -1e30 otherwise

    # Per-head attention as 2-D MXU matmuls; heads are static lane slices.
    for h in range(heads):
        sl = slice(h * hd, (h + 1) * hd)
        qh = q[:, sl] * scale
        kh = k[:, sl]
        vh = v[:, sl]
        s = jnp.dot(qh, kh.T, preferred_element_type=jnp.float32) + bias
        m = jnp.max(s, axis=-1, keepdims=True)
        p = jnp.exp(s - m)
        p = p * pl.reciprocal(jnp.sum(p, axis=-1, keepdims=True), approx=True)
        attn_scr[:, sl] = jnp.dot(p, vh, preferred_element_type=jnp.float32)

    attn = attn_scr[...]
    o = jnp.dot(attn, wout_ref[...],
                preferred_element_type=jnp.float32) + bout_ref[...]

    # Residual + LN1 (post-norm), fused.
    h1 = _ln(x + o, g1_ref[...], b1_ref[...], eps)

    # ReLU FFN + residual + LN2, fused.
    ff = jnp.dot(h1, f1w_ref[...],
                 preferred_element_type=jnp.float32) + f1b_ref[...]
    ff = jnp.maximum(ff, 0.0)
    ff = jnp.dot(ff, f2w_ref[...],
                 preferred_element_type=jnp.float32) + f2b_ref[...]
    o_ref[...] = _ln(h1 + ff, g2_ref[...], b2_ref[...], eps).astype(o_ref.dtype)


def encoder_layer(x, attn_bias, p, *, heads, eps):
    M, D = x.shape
    args = (x, attn_bias,
            p["in_proj_w"], p["in_proj_b"], p["out_proj_w"], p["out_proj_b"],
            p["ln1_g"], p["ln1_b"], p["ff1_w"], p["ff1_b"],
            p["ff2_w"], p["ff2_b"], p["ln2_g"], p["ln2_b"])
    return pl.pallas_call(
        functools.partial(_encoder_layer_kernel, heads=heads, eps=eps),
        out_shape=jax.ShapeDtypeStruct((M, D), jnp.float32),
        grid=(1,),
        in_specs=[_full_spec(a.shape) for a in args],
        out_specs=_full_spec((M, D)),
        scratch_shapes=[pltpu.VMEM((M, D), jnp.float32)],
        compiler_params=_ARB,
    )(*args)


def _decoder_kernel(flat_ref, tgt_ref, lw_ref, lb_ref, ew_ref, eb_ref,
                    g_ref, beta_ref, w1_ref, b1_ref, w2_ref, b2_ref,
                    w3_ref, b3_ref, dw_ref, db_ref, o_ref, *, eps):
    # MyModel.linear1(flat) ; Decoder.expand(tgt) ; LN(s+t) ; GLU ; liner ; softmax.
    s = jnp.dot(flat_ref[...], lw_ref[...],
                preferred_element_type=jnp.float32) + lb_ref[...]
    t = jnp.dot(tgt_ref[...], ew_ref[...],
                preferred_element_type=jnp.float32) + eb_ref[...]
    h = _ln(s + t, g_ref[...], beta_ref[...], eps)

    u = _silu(jnp.dot(h, w1_ref[...],
                      preferred_element_type=jnp.float32) + b1_ref[...])
    v = jnp.dot(h, w2_ref[...],
                preferred_element_type=jnp.float32) + b2_ref[...]
    g = jnp.dot(u * v, w3_ref[...],
                preferred_element_type=jnp.float32) + b3_ref[...]

    logits = jnp.dot(g, dw_ref[...],
                     preferred_element_type=jnp.float32) + db_ref[...]
    m = jnp.max(logits, axis=-1, keepdims=True)
    e = jnp.exp(logits - m)
    o_ref[...] = (e / jnp.sum(e, axis=-1, keepdims=True)).astype(o_ref.dtype)


def decoder(flat, tgt, params, *, eps):
    B = flat.shape[0]
    O = params["dec_liner_w"].shape[1]
    args = (flat, tgt,
            params["lin1_w"], params["lin1_b"],
            params["dec_expand_w"], params["dec_expand_b"],
            params["dec_ln_g"], params["dec_ln_b"],
            params["glu_w1"], params["glu_b1"],
            params["glu_w2"], params["glu_b2"],
            params["glu_w3"], params["glu_b3"],
            params["dec_liner_w"], params["dec_liner_b"])
    return pl.pallas_call(
        functools.partial(_decoder_kernel, eps=eps),
        out_shape=jax.ShapeDtypeStruct((B, O), jnp.float32),
        grid=(1,),
        in_specs=[_full_spec(a.shape) for a in args],
        out_specs=_full_spec((B, O)),
        compiler_params=_ARB,
    )(*args)


# ------------------------------ Model forward --------------------------------

def my_model_forward(params, src, tgt, cfg):
    B, L, Fin = src.shape
    D = cfg["d_model"]
    eps = cfg["eps"]

    # --- TransformerEncoder front-end (x_expand + pos-emb + LN_emb), one kernel.
    x = embed(src.reshape(B * L, Fin),
              params["x_expand_w"], params["x_expand_b"],
              params["pos_emb"], params["ln_emb_g"], params["ln_emb_b"],
              batch=B, eps=eps)                                  # (B*L, D)

    # Additive attention mask: row (b, l) may only attend to rows (b', l).
    # (Reproduces torch batch_first=False semantics with the flattened (B*L, D) layout.)
    r = jnp.arange(B * L, dtype=jnp.int32)
    same = (r[:, None] % L) == (r[None, :] % L)
    attn_bias = jnp.where(same, 0.0, -1e30).astype(jnp.float32)  # constant-folded by XLA

    # --- Encoder layers: one fused pallas_call per layer.
    for p in params["layers"]:
        x = encoder_layer(x, attn_bias, p, heads=cfg["heads"], eps=eps)
    # note: encoder.layer_norm_out exists in __init__ but is never used in forward.

    # --- Flatten + fused decoder tail (lin1, expand, add, LN, GLU, liner, softmax).
    flat = x.reshape(B, L * D)
    return decoder(flat, tgt, params, eps=eps)


# ------------------------------ Parameter init --------------------------------

def init_params(key, cfg):
    D, L, dff = cfg["d_model"], cfg["max_len"], cfg["d_ff"]
    Fin, O = cfg["in_feat"], cfg["out_size"]
    it = iter(jax.random.split(key, 128))

    def W(shape, scale=0.05):
        return scale * jax.random.normal(next(it), shape, jnp.float32)

    bias = lambda n: W((1, n))
    ones = lambda n: jnp.ones((1, n), jnp.float32)
    zeros = lambda n: jnp.zeros((1, n), jnp.float32)

    layers = []
    for _ in range(cfg["layers"]):
        layers.append(dict(
            in_proj_w=W((D, 3 * D)), in_proj_b=bias(3 * D),
            out_proj_w=W((D, D)), out_proj_b=bias(D),
            ln1_g=ones(D), ln1_b=zeros(D),
            ff1_w=W((D, dff)), ff1_b=bias(dff),
            ff2_w=W((dff, D)), ff2_b=bias(D),
            ln2_g=ones(D), ln2_b=zeros(D),
        ))

    return dict(
        x_expand_w=W((Fin, D)), x_expand_b=bias(D),
        pos_emb=W((L, D)),
        ln_emb_g=ones(D), ln_emb_b=zeros(D),
        layers=layers,
        lin1_w=W((L * D, D)), lin1_b=bias(D),
        dec_expand_w=W((2, D)), dec_expand_b=bias(D),
        dec_ln_g=ones(D), dec_ln_b=zeros(D),
        glu_w1=W((D, D)), glu_b1=bias(D),
        glu_w2=W((D, D)), glu_b2=bias(D),
        glu_w3=W((D, D)), glu_b3=bias(D),
        dec_liner_w=W((D, O)), dec_liner_b=bias(O),
    )


# ---------------------------------- main ---------------------------------------

if __name__ == "__main__":
    # Small config consistent with the module's forward:
    #   src: (batch, max_len, 10), tgt: (batch, 2) -> out: (batch, out_size)
    # (PyTorch defaults are d_model=512, max_len=60, 6 layers, d_ff=2048; scaled down here.)
    cfg = dict(d_model=32, heads=4, d_ff=64, layers=2,
               max_len=8, out_size=16, in_feat=10, eps=1e-5)

    key = jax.random.PRNGKey(0)
    kp, ks, kt = jax.random.split(key, 3)
    params = init_params(kp, cfg)

    B = 2
    src = jax.random.normal(ks, (B, cfg["max_len"], cfg["in_feat"]), jnp.float32)
    tgt = jax.random.normal(kt, (B, 2), jnp.float32)

    fwd = jax.jit(functools.partial(my_model_forward, cfg=cfg))
    out = jax.block_until_ready(fwd(params, src, tgt))

    assert out.shape == (B, cfg["out_size"])
    assert bool(jnp.all(jnp.isfinite(out)))
    assert bool(jnp.allclose(jnp.sum(out, axis=-1), 1.0, atol=1e-4))
    print("KERNEL_OK")
</pallas_src>

<mosaic_0001>
module attributes {stable_mosaic.version = 11 : i64} {
  func.func @_embed_kernel(%arg0: i32, %arg1: memref<16x10xf32, #tpu.memory_space<vmem>>, %arg2: memref<10x32xf32, #tpu.memory_space<vmem>>, %arg3: memref<1x32xf32, #tpu.memory_space<vmem>>, %arg4: memref<8x32xf32, #tpu.memory_space<vmem>>, %arg5: memref<1x32xf32, #tpu.memory_space<vmem>>, %arg6: memref<1x32xf32, #tpu.memory_space<vmem>>, %arg7: memref<16x32xf32, #tpu.memory_space<vmem>>) attributes {dimension_semantics = [#tpu.dimension_semantics<arbitrary>], iteration_bounds = array<i64: 1>, scalar_prefetch = 0 : i64, scratch_operands = 0 : i64, tpu.core_type = #tpu.core_type<tc>, window_params = [{pipeline_mode = #tpu.pipeline_mode<synchronous>, transform_indices = @transform_0, window_bounds = array<i64: 16, 10>}, {pipeline_mode = #tpu.pipeline_mode<synchronous>, transform_indices = @transform_1, window_bounds = array<i64: 10, 32>}, {pipeline_mode = #tpu.pipeline_mode<synchronous>, transform_indices = @transform_2, window_bounds = array<i64: 1, 32>}, {pipeline_mode = #tpu.pipeline_mode<synchronous>, transform_indices = @transform_3, window_bounds = array<i64: 8, 32>}, {pipeline_mode = #tpu.pipeline_mode<synchronous>, transform_indices = @transform_4, window_bounds = array<i64: 1, 32>}, {pipeline_mode = #tpu.pipeline_mode<synchronous>, transform_indices = @transform_5, window_bounds = array<i64: 1, 32>}, {pipeline_mode = #tpu.pipeline_mode<synchronous>, transform_indices = @transform_6, window_bounds = array<i64: 16, 32>}]} {
    %c0 = arith.constant 0 : index
    %c0_0 = arith.constant 0 : index
    %0 = vector.load %arg1[%c0, %c0_0] : memref<16x10xf32, #tpu.memory_space<vmem>>, vector<16x10xf32>
    %c0_1 = arith.constant 0 : index
    %c0_2 = arith.constant 0 : index
    %1 = vector.load %arg2[%c0_1, %c0_2] : memref<10x32xf32, #tpu.memory_space<vmem>>, vector<10x32xf32>
    %cst = arith.constant dense<0.000000e+00> : vector<16x32xf32>
    %2 = tpu.matmul %0, %1, %cst {dimension_numbers = #tpu.dot_dimension_numbers<[1], [0], [0], [1], [0, 0, 1, 1], [], []>} : vector<16x10xf32>, vector<10x32xf32>, vector<16x32xf32> -> vector<16x32xf32>
    %c0_3 = arith.constant 0 : index
    %c0_4 = arith.constant 0 : index
    %3 = vector.load %arg3[%c0_3, %c0_4] : memref<1x32xf32, #tpu.memory_space<vmem>>, vector<1x32xf32>
    %4 = vector.broadcast %3 : vector<1x32xf32> to vector<16x32xf32>
    %5 = arith.addf %2, %4 : vector<16x32xf32>
    %c0_5 = arith.constant 0 : index
    %c0_6 = arith.constant 0 : index
    %6 = vector.load %arg4[%c0_5, %c0_6] : memref<8x32xf32, #tpu.memory_space<vmem>>, vector<8x32xf32>
    %7 = tpu.concatenate %6, %6 in 0 : vector<8x32xf32>, vector<8x32xf32> -> vector<16x32xf32>
    %8 = arith.addf %5, %7 : vector<16x32xf32>
    %c0_7 = arith.constant 0 : index
    %c0_8 = arith.constant 0 : index
    %9 = vector.load %arg5[%c0_7, %c0_8] : memref<1x32xf32, #tpu.memory_space<vmem>>, vector<1x32xf32>
    %c0_9 = arith.constant 0 : index
    %c0_10 = arith.constant 0 : index
    %10 = vector.load %arg6[%c0_9, %c0_10] : memref<1x32xf32, #tpu.memory_space<vmem>>, vector<1x32xf32>
    %cst_11 = arith.constant dense<0.000000e+00> : vector<16xf32>
    %11 = vector.multi_reduction <add>, %8, %cst_11 [1] : vector<16x32xf32> to vector<16xf32>
    %12 = vector.shape_cast %11 : vector<16xf32> to vector<16x1xf32>
    %cst_12 = arith.constant 3.200000e+01 : f32
    %13 = vector.broadcast %cst_12 : f32 to vector<16x1xf32>
    %14 = arith.divf %12, %13 : vector<16x1xf32>
    %15 = vector.broadcast %14 : vector<16x1xf32> to vector<16x32xf32>
    %16 = arith.subf %8, %15 : vector<16x32xf32>
    %17 = arith.mulf %16, %16 : vector<16x32xf32>
    %cst_13 = arith.constant dense<0.000000e+00> : vector<16xf32>
    %18 = vector.multi_reduction <add>, %17, %cst_13 [1] : vector<16x32xf32> to vector<16xf32>
    %19 = vector.shape_cast %18 : vector<16xf32> to vector<16x1xf32>
    %cst_14 = arith.constant 3.200000e+01 : f32
    %20 = vector.broadcast %cst_14 : f32 to vector<16x1xf32>
    %21 = arith.divf %19, %20 : vector<16x1xf32>
    %cst_15 = arith.constant 9.99999974E-6 : f32
    %22 = vector.broadcast %cst_15 : f32 to vector<16x1xf32>
    %23 = arith.addf %21, %22 : vector<16x1xf32>
    %24 = math.rsqrt %23 : vector<16x1xf32>
    %25 = vector.broadcast %24 : vector<16x1xf32> to vector<16x32xf32>
    %26 = arith.mulf %16, %25 : vector<16x32xf32>
    %27 = vector.broadcast %9 : vector<1x32xf32> to vector<16x32xf32>
    %28 = arith.mulf %26, %27 : vector<16x32xf32>
    %29 = vector.broadcast %10 : vector<1x32xf32> to vector<16x32xf32>
    %30 = arith.addf %28, %29 : vector<16x32xf32>
    %c0_16 = arith.constant 0 : index
    %c0_17 = arith.constant 0 : index
    %31 = vector.load %arg7[%c0_16, %c0_17] : memref<16x32xf32, #tpu.memory_space<vmem>>, vector<16x32xf32>
    tpu.vector_store %arg7[%c0_16, %c0_17], %30 {strides = array<i32>} : memref<16x32xf32, #tpu.memory_space<vmem>>, vector<16x32xf32>,
    return
  }
  func.func @transform_0(%arg0: i32) -> (i32, i32) {
    %c0_i32 = arith.constant 0 : i32
    %c0_i32_0 = arith.constant 0 : i32
    %c0_i32_1 = arith.constant 0 : i32
    return %c0_i32, %c0_i32_0 : i32, i32
  }
  func.func @transform_1(%arg0: i32) -> (i32, i32) {
    %c0_i32 = arith.constant 0 : i32
    %c0_i32_0 = arith.constant 0 : i32
    %c0_i32_1 = arith.constant 0 : i32
    return %c0_i32, %c0_i32_0 : i32, i32
  }
  func.func @transform_2(%arg0: i32) -> (i32, i32) {
    %c0_i32 = arith.constant 0 : i32
    %c0_i32_0 = arith.constant 0 : i32
    %c0_i32_1 = arith.constant 0 : i32
    return %c0_i32, %c0_i32_0 : i32, i32
  }
  func.func @transform_3(%arg0: i32) -> (i32, i32) {
    %c0_i32 = arith.constant 0 : i32
    %c0_i32_0 = arith.constant 0 : i32
    %c0_i32_1 = arith.constant 0 : i32
    return %c0_i32, %c0_i32_0 : i32, i32
  }
  func.func @transform_4(%arg0: i32) -> (i32, i32) {
    %c0_i32 = arith.constant 0 : i32
    %c0_i32_0 = arith.constant 0 : i32
    %c0_i32_1 = arith.constant 0 : i32
    return %c0_i32, %c0_i32_0 : i32, i32
  }
  func.func @transform_5(%arg0: i32) -> (i32, i32) {
    %c0_i32 = arith.constant 0 : i32
    %c0_i32_0 = arith.constant 0 : i32
    %c0_i32_1 = arith.constant 0 : i32
    return %c0_i32, %c0_i32_0 : i32, i32
  }
  func.func @transform_6(%arg0: i32) -> (i32, i32) {
    %c0_i32 = arith.constant 0 : i32
    %c0_i32_0 = arith.constant 0 : i32
    %c0_i32_1 = arith.constant 0 : i32
    return %c0_i32, %c0_i32_0 : i32, i32
  }
}

module attributes {stable_mosaic.version = 11 : i64} {
  func.func @_encoder_layer_kernel(%arg0: i32, %arg1: memref<16x32xf32, #tpu.memory_space<vmem>>, %arg2: memref<16x16xf32, #tpu.memory_space<vmem>>, %arg3: memref<32x96xf32, #tpu.memory_space<vmem>>, %arg4: memref<1x96xf32, #tpu.memory_space<vmem>>, %arg5: memref<32x32xf32, #tpu.memory_space<vmem>>, %arg6: memref<1x32xf32, #tpu.memory_space<vmem>>, %arg7: memref<1x32xf32, #tpu.memory_space<vmem>>, %arg8: memref<1x32xf32, #tpu.memory_space<vmem>>, %arg9: memref<32x64xf32, #tpu.memory_space<vmem>>, %arg10: memref<1x64xf32, #tpu.memory_space<vmem>>, %arg11: memref<64x32xf32, #tpu.memory_space<vmem>>, %arg12: memref<1x32xf32, #tpu.memory_space<vmem>>, %arg13: memref<1x32xf32, #tpu.memory_space<vmem>>, %arg14: memref<1x32xf32, #tpu.memory_space<vmem>>, %arg15: memref<16x32xf32, #tpu.memory_space<vmem>>, %arg16: memref<16x32xf32, #tpu.memory_space<vmem>>) attributes {dimension_semantics = [#tpu.dimension_semantics<arbitrary>], iteration_bounds = array<i64: 1>, scalar_prefetch = 0 : i64, scratch_operands = 1 : i64, tpu.core_type = #tpu.core_type<tc>, window_params = [{pipeline_mode = #tpu.pipeline_mode<synchronous>, transform_indices = @transform_0, window_bounds = array<i64: 16, 32>}, {pipeline_mode = #tpu.pipeline_mode<synchronous>, transform_indices = @transform_1, window_bounds = array<i64: 16, 16>}, {pipeline_mode = #tpu.pipeline_mode<synchronous>, transform_indices = @transform_2, window_bounds = array<i64: 32, 96>}, {pipeline_mode = #tpu.pipeline_mode<synchronous>, transform_indices = @transform_3, window_bounds = array<i64: 1, 96>}, {pipeline_mode = #tpu.pipeline_mode<synchronous>, transform_indices = @transform_4, window_bounds = array<i64: 32, 32>}, {pipeline_mode = #tpu.pipeline_mode<synchronous>, transform_indices = @transform_5, window_bounds = array<i64: 1, 32>}, {pipeline_mode = #tpu.pipeline_mode<synchronous>, transform_indices = @transform_6, window_bounds = array<i64: 1, 32>}, {pipeline_mode = #tpu.pipeline_mode<synchronous>, transform_indices = @transform_7, window_bounds = array<i64: 1, 32>}, {pipeline_mode = #tpu.pipeline_mode<synchronous>, transform_indices = @transform_8, window_bounds = array<i64: 32, 64>}, {pipeline_mode = #tpu.pipeline_mode<synchronous>, transform_indices = @transform_9, window_bounds = array<i64: 1, 64>}, {pipeline_mode = #tpu.pipeline_mode<synchronous>, transform_indices = @transform_10, window_bounds = array<i64: 64, 32>}, {pipeline_mode = #tpu.pipeline_mode<synchronous>, transform_indices = @transform_11, window_bounds = array<i64: 1, 32>}, {pipeline_mode = #tpu.pipeline_mode<synchronous>, transform_indices = @transform_12, window_bounds = array<i64: 1, 32>}, {pipeline_mode = #tpu.pipeline_mode<synchronous>, transform_indices = @transform_13, window_bounds = array<i64: 1, 32>}, {pipeline_mode = #tpu.pipeline_mode<synchronous>, transform_indices = @transform_14, window_bounds = array<i64: 16, 32>}]} {
    %c0 = arith.constant 0 : index
    %c0_0 = arith.constant 0 : index
    %0 = vector.load %arg1[%c0, %c0_0] : memref<16x32xf32, #tpu.memory_space<vmem>>, vector<16x32xf32>
    %c0_1 = arith.constant 0 : index
    %c0_2 = arith.constant 0 : index
    %1 = vector.load %arg3[%c0_1, %c0_2] : memref<32x96xf32, #tpu.memory_space<vmem>>, vector<32x96xf32>
    %cst = arith.constant dense<0.000000e+00> : vector<16x96xf32>
    %2 = tpu.matmul %0, %1, %cst {dimension_numbers = #tpu.dot_dimension_numbers<[1], [0], [0], [1], [0, 0, 1, 1], [], []>} : vector<16x32xf32>, vector<32x96xf32>, vector<16x96xf32> -> vector<16x96xf32>
    %c0_3 = arith.constant 0 : index
    %c0_4 = arith.constant 0 : index
    %3 = vector.load %arg4[%c0_3, %c0_4] : memref<1x96xf32, #tpu.memory_space<vmem>>, vector<1x96xf32>
    %4 = vector.broadcast %3 : vector<1x96xf32> to vector<16x96xf32>
    %5 = arith.addf %2, %4 : vector<16x96xf32>
    %6 = vector.extract_strided_slice %5 {offsets = [0, 0], sizes = [16, 32], strides = [1, 1]} : vector<16x96xf32> to vector<16x32xf32>
    %7 = vector.extract_strided_slice %5 {offsets = [0, 32], sizes = [16, 32], strides = [1, 1]} : vector<16x96xf32> to vector<16x32xf32>
    %8 = vector.extract_strided_slice %5 {offsets = [0, 64], sizes = [16, 32], strides = [1, 1]} : vector<16x96xf32> to vector<16x32xf32>
    %c0_5 = arith.constant 0 : index
    %c0_6 = arith.constant 0 : index
    %9 = vector.load %arg2[%c0_5, %c0_6] : memref<16x16xf32, #tpu.memory_space<vmem>>, vector<16x16xf32>
    %10 = vector.extract_strided_slice %6 {offsets = [0, 0], sizes = [16, 8], strides = [1, 1]} : vector<16x32xf32> to vector<16x8xf32>
    %cst_7 = arith.constant 0.353553385 : f32
    %11 = vector.broadcast %cst_7 : f32 to vector<16x8xf32>
    %12 = arith.mulf %10, %11 : vector<16x8xf32>
    %13 = vector.extract_strided_slice %7 {offsets = [0, 0], sizes = [16, 8], strides = [1, 1]} : vector<16x32xf32> to vector<16x8xf32>
    %14 = vector.extract_strided_slice %8 {offsets = [0, 0], sizes = [16, 8], strides = [1, 1]} : vector<16x32xf32> to vector<16x8xf32>
    %15 = tpu.transpose %13, [1, 0] : vector<16x8xf32> -> vector<8x16xf32>
    %cst_8 = arith.constant dense<0.000000e+00> : vector<16x16xf32>
    %16 = tpu.matmul %12, %15, %cst_8 {dimension_numbers = #tpu.dot_dimension_numbers<[1], [0], [0], [1], [0, 0, 1, 1], [], []>} : vector<16x8xf32>, vector<8x16xf32>, vector<16x16xf32> -> vector<16x16xf32>
    %17 = arith.addf %16, %9 : vector<16x16xf32>
    %cst_9 = arith.constant dense<0xFF800000> : vector<16xf32>
    %18 = vector.multi_reduction <maximumf>, %17, %cst_9 [1] : vector<16x16xf32> to vector<16xf32>
    %19 = vector.shape_cast %18 : vector<16xf32> to vector<16x1xf32>
    %20 = vector.broadcast %19 : vector<16x1xf32> to vector<16x16xf32>
    %21 = arith.subf %17, %20 : vector<16x16xf32>
    %22 = math.exp %21 : vector<16x16xf32>
    %cst_10 = arith.constant dense<0.000000e+00> : vector<16xf32>
    %23 = vector.multi_reduction <add>, %22, %cst_10 [1] : vector<16x16xf32> to vector<16xf32>
    %24 = vector.shape_cast %23 : vector<16xf32> to vector<16x1xf32>
    %25 = tpu.reciprocal %24 {approx = true} : vector<16x1xf32> -> vector<16x1xf32>
    %26 = vector.broadcast %25 : vector<16x1xf32> to vector<16x16xf32>
    %27 = arith.mulf %22, %26 : vector<16x16xf32>
    %cst_11 = arith.constant dense<0.000000e+00> : vector<16x8xf32>
    %28 = tpu.matmul %27, %14, %cst_11 {dimension_numbers = #tpu.dot_dimension_numbers<[1], [0], [0], [1], [0, 0, 1, 1], [], []>} : vector<16x16xf32>, vector<16x8xf32>, vector<16x8xf32> -> vector<16x8xf32>
    %c0_12 = arith.constant 0 : index
    %c0_13 = arith.constant 0 : index
    %29 = vector.load %arg16[%c0_12, %c0_13] : memref<16x32xf32, #tpu.memory_space<vmem>>, vector<16x8xf32>
    tpu.vector_store %arg16[%c0_12, %c0_13], %28 {strides = array<i32>} : memref<16x32xf32, #tpu.memory_space<vmem>>, vector<16x8xf32>,
    %30 = vector.extract_strided_slice %6 {offsets = [0, 8], sizes = [16, 8], strides = [1, 1]} : vector<16x32xf32> to vector<16x8xf32>
    %cst_14 = arith.constant 0.353553385 : f32
    %31 = vector.broadcast %cst_14 : f32 to vector<16x8xf32>
    %32 = arith.mulf %30, %31 : vector<16x8xf32>
    %33 = vector.extract_strided_slice %7 {offsets = [0, 8], sizes = [16, 8], strides = [1, 1]} : vector<16x32xf32> to vector<16x8xf32>
    %34 = vector.extract_strided_slice %8 {offsets = [0, 8], sizes = [16, 8], strides = [1, 1]} : vector<16x32xf32> to vector<16x8xf32>
    %35 = tpu.transpose %33, [1, 0] : vector<16x8xf32> -> vector<8x16xf32>
    %cst_15 = arith.constant dense<0.000000e+00> : vector<16x16xf32>
    %36 = tpu.matmul %32, %35, %cst_15 {dimension_numbers = #tpu.dot_dimension_numbers<[1], [0], [0], [1], [0, 0, 1, 1], [], []>} : vector<16x8xf32>, vector<8x16xf32>, vector<16x16xf32> -> vector<16x16xf32>
    %37 = arith.addf %36, %9 : vector<16x16xf32>
    %cst_16 = arith.constant dense<0xFF800000> : vector<16xf32>
    %38 = vector.multi_reduction <maximumf>, %37, %cst_16 [1] : vector<16x16xf32> to vector<16xf32>
    %39 = vector.shape_cast %38 : vector<16xf32> to vector<16x1xf32>
    %40 = vector.broadcast %39 : vector<16x1xf32> to vector<16x16xf32>
    %41 = arith.subf %37, %40 : vector<16x16xf32>
    %42 = math.exp %41 : vector<16x16xf32>
    %cst_17 = arith.constant dense<0.000000e+00> : vector<16xf32>
    %43 = vector.multi_reduction <add>, %42, %cst_17 [1] : vector<16x16xf32> to vector<16xf32>
    %44 = vector.shape_cast %43 : vector<16xf32> to vector<16x1xf32>
    %45 = tpu.reciprocal %44 {approx = true} : vector<16x1xf32> -> vector<16x1xf32>
    %46 = vector.broadcast %45 : vector<16x1xf32> to vector<16x16xf32>
    %47 = arith.mulf %42, %46 : vector<16x16xf32>
    %cst_18 = arith.constant dense<0.000000e+00> : vector<16x8xf32>
    %48 = tpu.matmul %47, %34, %cst_18 {dimension_numbers = #tpu.dot_dimension_numbers<[1], [0], [0], [1], [0, 0, 1, 1], [], []>} : vector<16x16xf32>, vector<16x8xf32>, vector<16x8xf32> -> vector<16x8xf32>
    %c0_19 = arith.constant 0 : index
    %c8 = arith.constant 8 : index
    %49 = vector.load %arg16[%c0_19, %c8] : memref<16x32xf32, #tpu.memory_space<vmem>>, vector<16x8xf32>
    tpu.vector_store %arg16[%c0_19, %c8], %48 {strides = array<i32>} : memref<16x32xf32, #tpu.memory_space<vmem>>, vector<16x8xf32>,
    %50 = vector.extract_strided_slice %6 {offsets = [0, 16], sizes = [16, 8], strides = [1, 1]} : vector<16x32xf32> to vector<16x8xf32>
    %cst_20 = arith.constant 0.353553385 : f32
    %51 = vector.broadcast %cst_20 : f32 to vector<16x8xf32>
    %52 = arith.mulf %50, %51 : vector<16x8xf32>
    %53 = vector.extract_strided_slice %7 {offsets = [0, 16], sizes = [16, 8], strides = [1, 1]} : vector<16x32xf32> to vector<16x8xf32>
    %54 = vector.extract_strided_slice %8 {offsets = [0, 16], sizes = [16, 8], strides = [1, 1]} : vector<16x32xf32> to vector<16x8xf32>
    %55 = tpu.transpose %53, [1, 0] : vector<16x8xf32> -> vector<8x16xf32>
    %cst_21 = arith.constant dense<0.000000e+00> : vector<16x16xf32>
    %56 = tpu.matmul %52, %55, %cst_21 {dimension_numbers = #tpu.dot_dimension_numbers<[1], [0], [0], [1], [0, 0, 1, 1], [], []>} : vector<16x8xf32>, vector<8x16xf32>, vector<16x16xf32> -> vector<16x16xf32>
    %57 = arith.addf %56, %9 : vector<16x16xf32>
    %cst_22 = arith.constant dense<0xFF800000> : vector<16xf32>
    %58 = vector.multi_reduction <maximumf>, %57, %cst_22 [1] : vector<16x16xf32> to vector<16xf32>
    %59 = vector.shape_cast %58 : vector<16xf32> to vector<16x1xf32>
    %60 = vector.broadcast %59 : vector<16x1xf32> to vector<16x16xf32>
    %61 = arith.subf %57, %60 : vector<16x16xf32>
    %62 = math.exp %61 : vector<16x16xf32>
    %cst_23 = arith.constant dense<0.000000e+00> : vector<16xf32>
    %63 = vector.multi_reduction <add>, %62, %cst_23 [1] : vector<16x16xf32> to vector<16xf32>
    %64 = vector.shape_cast %63 : vector<16xf32> to vector<16x1xf32>
    %65 = tpu.reciprocal %64 {approx = true} : vector<16x1xf32> -> vector<16x1xf32>
    %66 = vector.broadcast %65 : vector<16x1xf32> to vector<16x16xf32>
    %67 = arith.mulf %62, %66 : vector<16x16xf32>
    %cst_24 = arith.constant dense<0.000000e+00> : vector<16x8xf32>
    %68 = tpu.matmul %67, %54, %cst_24 {dimension_numbers = #tpu.dot_dimension_numbers<[1], [0], [0], [1], [0, 0, 1, 1], [], []>} : vector<16x16xf32>, vector<16x8xf32>, vector<16x8xf32> -> vector<16x8xf32>
    %c0_25 = arith.constant 0 : index
    %c16 = arith.constant 16 : index
    %69 = vector.load %arg16[%c0_25, %c16] : memref<16x32xf32, #tpu.memory_space<vmem>>, vector<16x8xf32>
    tpu.vector_store %arg16[%c0_25, %c16], %68 {strides = array<i32>} : memref<16x32xf32, #tpu.memory_space<vmem>>, vector<16x8xf32>,
    %70 = vector.extract_strided_slice %6 {offsets = [0, 24], sizes = [16, 8], strides = [1, 1]} : vector<16x32xf32> to vector<16x8xf32>
    %cst_26 = arith.constant 0.353553385 : f32
    %71 = vector.broadcast %cst_26 : f32 to vector<16x8xf32>
    %72 = arith.mulf %70, %71 : vector<16x8xf32>
    %73 = vector.extract_strided_slice %7 {offsets = [0, 24], sizes = [16, 8], strides = [1, 1]} : vector<16x32xf32> to vector<16x8xf32>
    %74 = vector.extract_strided_slice %8 {offsets = [0, 24], sizes = [16, 8], strides = [1, 1]} : vector<16x32xf32> to vector<16x8xf32>
    %75 = tpu.transpose %73, [1, 0] : vector<16x8xf32> -> vector<8x16xf32>
    %cst_27 = arith.constant dense<0.000000e+00> : vector<16x16xf32>
    %76 = tpu.matmul %72, %75, %cst_27 {dimension_numbers = #tpu.dot_dimension_numbers<[1], [0], [0], [1], [0, 0, 1, 1], [], []>} : vector<16x8xf32>, vector<8x16xf32>, vector<16x16xf32> -> vector<16x16xf32>
    %77 = arith.addf %76, %9 : vector<16x16xf32>
    %cst_28 = arith.constant dense<0xFF800000> : vector<16xf32>
    %78 = vector.multi_reduction <maximumf>, %77, %cst_28 [1] : vector<16x16xf32> to vector<16xf32>
    %79 = vector.shape_cast %78 : vector<16xf32> to vector<16x1xf32>
    %80 = vector.broadcast %79 : vector<16x1xf32> to vector<16x16xf32>
    %81 = arith.subf %77, %80 : vector<16x16xf32>
    %82 = math.exp %81 : vector<16x16xf32>
    %cst_29 = arith.constant dense<0.000000e+00> : vector<16xf32>
    %83 = vector.multi_reduction <add>, %82, %cst_29 [1] : vector<16x16xf32> to vector<16xf32>
    %84 = vector.shape_cast %83 : vector<16xf32> to vector<16x1xf32>
    %85 = tpu.reciprocal %84 {approx = true} : vector<16x1xf32> -> vector<16x1xf32>
    %86 = vector.broadcast %85 : vector<16x1xf32> to vector<16x16xf32>
    %87 = arith.mulf %82, %86 : vector<16x16xf32>
    %cst_30 = arith.constant dense<0.000000e+00> : vector<16x8xf32>
    %88 = tpu.matmul %87, %74, %cst_30 {dimension_numbers = #tpu.dot_dimension_numbers<[1], [0], [0], [1], [0, 0, 1, 1], [], []>} : vector<16x16xf32>, vector<16x8xf32>, vector<16x8xf32> -> vector<16x8xf32>
    %c0_31 = arith.constant 0 : index
    %c24 = arith.constant 24 : index
    %89 = vector.load %arg16[%c0_31, %c24] : memref<16x32xf32, #tpu.memory_space<vmem>>, vector<16x8xf32>
    tpu.vector_store %arg16[%c0_31, %c24], %88 {strides = array<i32>} : memref<16x32xf32, #tpu.memory_space<vmem>>, vector<16x8xf32>,
    %c0_32 = arith.constant 0 : index
    %c0_33 = arith.constant 0 : index
    %90 = vector.load %arg16[%c0_32, %c0_33] : memref<16x32xf32, #tpu.memory_space<vmem>>, vector<16x32xf32>
    %c0_34 = arith.constant 0 : index
    %c0_35 = arith.constant 0 : index
    %91 = vector.load %arg5[%c0_34, %c0_35] : memref<32x32xf32, #tpu.memory_space<vmem>>, vector<32x32xf32>
    %cst_36 = arith.constant dense<0.000000e+00> : vector<16x32xf32>
    %92 = tpu.matmul %90, %91, %cst_36 {dimension_numbers = #tpu.dot_dimension_numbers<[1], [0], [0], [1], [0, 0, 1, 1], [], []>} : vector<16x32xf32>, vector<32x32xf32>, vector<16x32xf32> -> vector<16x32xf32>
    %c0_37 = arith.constant 0 : index
    %c0_38 = arith.constant 0 : index
    %93 = vector.load %arg6[%c0_37, %c0_38] : memref<1x32xf32, #tpu.memory_space<vmem>>, vector<1x32xf32>
    %94 = vector.broadcast %93 : vector<1x32xf32> to vector<16x32xf32>
    %95 = arith.addf %92, %94 : vector<16x32xf32>
    %96 = arith.addf %0, %95 : vector<16x32xf32>
    %c0_39 = arith.constant 0 : index
    %c0_40 = arith.constant 0 : index
    %97 = vector.load %arg7[%c0_39, %c0_40] : memref<1x32xf32, #tpu.memory_space<vmem>>, vector<1x32xf32>
    %c0_41 = arith.constant 0 : index
    %c0_42 = arith.constant 0 : index
    %98 = vector.load %arg8[%c0_41, %c0_42] : memref<1x32xf32, #tpu.memory_space<vmem>>, vector<1x32xf32>
    %cst_43 = arith.constant dense<0.000000e+00> : vector<16xf32>
    %99 = vector.multi_reduction <add>, %96, %cst_43 [1] : vector<16x32xf32> to vector<16xf32>
    %100 = vector.shape_cast %99 : vector<16xf32> to vector<16x1xf32>
    %cst_44 = arith.constant 3.200000e+01 : f32
    %101 = vector.broadcast %cst_44 : f32 to vector<16x1xf32>
    %102 = arith.divf %100, %101 : vector<16x1xf32>
    %103 = vector.broadcast %102 : vector<16x1xf32> to vector<16x32xf32>
    %104 = arith.subf %96, %103 : vector<16x32xf32>
    %105 = arith.mulf %104, %104 : vector<16x32xf32>
    %cst_45 = arith.constant dense<0.000000e+00> : vector<16xf32>
    %106 = vector.multi_reduction <add>, %105, %cst_45 [1] : vector<16x32xf32> to vector<16xf32>
    %107 = vector.shape_cast %106 : vector<16xf32> to vector<16x1xf32>
    %cst_46 = arith.constant 3.200000e+01 : f32
    %108 = vector.broadcast %cst_46 : f32 to vector<16x1xf32>
    %109 = arith.divf %107, %108 : vector<16x1xf32>
    %cst_47 = arith.constant 9.99999974E-6 : f32
    %110 = vector.broadcast %cst_47 : f32 to vector<16x1xf32>
    %111 = arith.addf %109, %110 : vector<16x1xf32>
    %112 = math.rsqrt %111 : vector<16x1xf32>
    %113 = vector.broadcast %112 : vector<16x1xf32> to vector<16x32xf32>
    %114 = arith.mulf %104, %113 : vector<16x32xf32>
    %115 = vector.broadcast %97 : vector<1x32xf32> to vector<16x32xf32>
    %116 = arith.mulf %114, %115 : vector<16x32xf32>
    %117 = vector.broadcast %98 : vector<1x32xf32> to vector<16x32xf32>
    %118 = arith.addf %116, %117 : vector<16x32xf32>
    %c0_48 = arith.constant 0 : index
    %c0_49 = arith.constant 0 : index
    %119 = vector.load %arg9[%c0_48, %c0_49] : memref<32x64xf32, #tpu.memory_space<vmem>>, vector<32x64xf32>
    %cst_50 = arith.constant dense<0.000000e+00> : vector<16x64xf32>
    %120 = tpu.matmul %118, %119, %cst_50 {dimension_numbers = #tpu.dot_dimension_numbers<[1], [0], [0], [1], [0, 0, 1, 1], [], []>} : vector<16x32xf32>, vector<32x64xf32>, vector<16x64xf32> -> vector<16x64xf32>
    %c0_51 = arith.constant 0 : index
    %c0_52 = arith.constant 0 : index
    %121 = vector.load %arg10[%c0_51, %c0_52] : memref<1x64xf32, #tpu.memory_space<vmem>>, vector<1x64xf32>
    %122 = vector.broadcast %121 : vector<1x64xf32> to vector<16x64xf32>
    %123 = arith.addf %120, %122 : vector<16x64xf32>
    %cst_53 = arith.constant 0.000000e+00 : f32
    %124 = vector.broadcast %cst_53 : f32 to vector<16x64xf32>
    %125 = arith.maximumf %123, %124 : vector<16x64xf32>
    %c0_54 = arith.constant 0 : index
    %c0_55 = arith.constant 0 : index
    %126 = vector.load %arg11[%c0_54, %c0_55] : memref<64x32xf32, #tpu.memory_space<vmem>>, vector<64x32xf32>
    %cst_56 = arith.constant dense<0.000000e+00> : vector<16x32xf32>
    %127 = tpu.matmul %125, %126, %cst_56 {dimension_numbers = #tpu.dot_dimension_numbers<[1], [0], [0], [1], [0, 0, 1, 1], [], []>} : vector<16x64xf32>, vector<64x32xf32>, vector<16x32xf32> -> vector<16x32xf32>
    %c0_57 = arith.constant 0 : index
    %c0_58 = arith.constant 0 : index
    %128 = vector.load %arg12[%c0_57, %c0_58] : memref<1x32xf32, #tpu.memory_space<vmem>>, vector<1x32xf32>
    %129 = vector.broadcast %128 : vector<1x32xf32> to vector<16x32xf32>
    %130 = arith.addf %127, %129 : vector<16x32xf32>
    %131 = arith.addf %118, %130 : vector<16x32xf32>
    %c0_59 = arith.constant 0 : index
    %c0_60 = arith.constant 0 : index
    %132 = vector.load %arg13[%c0_59, %c0_60] : memref<1x32xf32, #tpu.memory_space<vmem>>, vector<1x32xf32>
    %c0_61 = arith.constant 0 : index
    %c0_62 = arith.constant 0 : index
    %133 = vector.load %arg14[%c0_61, %c0_62] : memref<1x32xf32, #tpu.memory_space<vmem>>, vector<1x32xf32>
    %cst_63 = arith.constant dense<0.000000e+00> : vector<16xf32>
    %134 = vector.multi_reduction <add>, %131, %cst_63 [1] : vector<16x32xf32> to vector<16xf32>
    %135 = vector.shape_cast %134 : vector<16xf32> to vector<16x1xf32>
    %cst_64 = arith.constant 3.200000e+01 : f32
    %136 = vector.broadcast %cst_64 : f32 to vector<16x1xf32>
    %137 = arith.divf %135, %136 : vector<16x1xf32>
    %138 = vector.broadcast %137 : vector<16x1xf32> to vector<16x32xf32>
    %139 = arith.subf %131, %138 : vector<16x32xf32>
    %140 = arith.mulf %139, %139 : vector<16x32xf32>
    %cst_65 = arith.constant dense<0.000000e+00> : vector<16xf32>
    %141 = vector.multi_reduction <add>, %140, %cst_65 [1] : vector<16x32xf32> to vector<16xf32>
    %142 = vector.shape_cast %141 : vector<16xf32> to vector<16x1xf32>
    %cst_66 = arith.constant 3.200000e+01 : f32
    %143 = vector.broadcast %cst_66 : f32 to vector<16x1xf32>
    %144 = arith.divf %142, %143 : vector<16x1xf32>
    %cst_67 = arith.constant 9.99999974E-6 : f32
    %145 = vector.broadcast %cst_67 : f32 to vector<16x1xf32>
    %146 = arith.addf %144, %145 : vector<16x1xf32>
    %147 = math.rsqrt %146 : vector<16x1xf32>
    %148 = vector.broadcast %147 : vector<16x1xf32> to vector<16x32xf32>
    %149 = arith.mulf %139, %148 : vector<16x32xf32>
    %150 = vector.broadcast %132 : vector<1x32xf32> to vector<16x32xf32>
    %151 = arith.mulf %149, %150 : vector<16x32xf32>
    %152 = vector.broadcast %133 : vector<1x32xf32> to vector<16x32xf32>
    %153 = arith.addf %151, %152 : vector<16x32xf32>
    %c0_68 = arith.constant 0 : index
    %c0_69 = arith.constant 0 : index
    %154 = vector.load %arg15[%c0_68, %c0_69] : memref<16x32xf32, #tpu.memory_space<vmem>>, vector<16x32xf32>
    tpu.vector_store %arg15[%c0_68, %c0_69], %153 {strides = array<i32>} : memref<16x32xf32, #tpu.memory_space<vmem>>, vector<16x32xf32>,
    return
  }
  func.func @transform_0(%arg0: i32) -> (i32, i32) {
    %c0_i32 = arith.constant 0 : i32
    %c0_i32_0 = arith.constant 0 : i32
    %c0_i32_1 = arith.constant 0 : i32
    return %c0_i32, %c0_i32_0 : i32, i32
  }
  func.func @transform_1(%arg0: i32) -> (i32, i32) {
    %c0_i32 = arith.constant 0 : i32
    %c0_i32_0 = arith.constant 0 : i32
    %c0_i32_1 = arith.constant 0 : i32
    return %c0_i32, %c0_i32_0 : i32, i32
  }
  func.func @transform_2(%arg0: i32) -> (i32, i32) {
    %c0_i32 = arith.constant 0 : i32
    %c0_i32_0 = arith.constant 0 : i32
    %c0_i32_1 = arith.constant 0 : i32
    return %c0_i32, %c0_i32_0 : i32, i32
  }
  func.func @transform_3(%arg0: i32) -> (i32, i32) {
    %c0_i32 = arith.constant 0 : i32
    %c0_i32_0 = arith.constant 0 : i32
    %c0_i32_1 = arith.constant 0 : i32
    return %c0_i32, %c0_i32_0 : i32, i32
  }
  func.func @transform_4(%arg0: i32) -> (i32, i32) {
    %c0_i32 = arith.constant 0 : i32
    %c0_i32_0 = arith.constant 0 : i32
    %c0_i32_1 = arith.constant 0 : i32
    return %c0_i32, %c0_i32_0 : i32, i32
  }
  func.func @transform_5(%arg0: i32) -> (i32, i32) {
    %c0_i32 = arith.constant 0 : i32
    %c0_i32_0 = arith.constant 0 : i32
    %c0_i32_1 = arith.constant 0 : i32
    return %c0_i32, %c0_i32_0 : i32, i32
  }
  func.func @transform_6(%arg0: i32) -> (i32, i32) {
    %c0_i32 = arith.constant 0 : i32
    %c0_i32_0 = arith.constant 0 : i32
    %c0_i32_1 = arith.constant 0 : i32
    return %c0_i32, %c0_i32_0 : i32, i32
  }
  func.func @transform_7(%arg0: i32) -> (i32, i32) {
    %c0_i32 = arith.constant 0 : i32
    %c0_i32_0 = arith.constant 0 : i32
    %c0_i32_1 = arith.constant 0 : i32
    return %c0_i32, %c0_i32_0 : i32, i32
  }
  func.func @transform_8(%arg0: i32) -> (i32, i32) {
    %c0_i32 = arith.constant 0 : i32
    %c0_i32_0 = arith.constant 0 : i32
    %c0_i32_1 = arith.constant 0 : i32
    return %c0_i32, %c0_i32_0 : i32, i32
  }
  func.func @transform_9(%arg0: i32) -> (i32, i32) {
    %c0_i32 = arith.constant 0 : i32
    %c0_i32_0 = arith.constant 0 : i32
    %c0_i32_1 = arith.constant 0 : i32
    return %c0_i32, %c0_i32_0 : i32, i32
  }
  func.func @transform_10(%arg0: i32) -> (i32, i32) {
    %c0_i32 = arith.constant 0 : i32
    %c0_i32_0 = arith.constant 0 : i32
    %c0_i32_1 = arith.constant 0 : i32
    return %c0_i32, %c0_i32_0 : i32, i32
  }
  func.func @transform_11(%arg0: i32) -> (i32, i32) {
    %c0_i32 = arith.constant 0 : i32
    %c0_i32_0 = arith.constant 0 : i32
    %c0_i32_1 = arith.constant 0 : i32
    return %c0_i32, %c0_i32_0 : i32, i32
  }
  func.func @transform_12(%arg0: i32) -> (i32, i32) {
    %c0_i32 = arith.constant 0 : i32
    %c0_i32_0 = arith.constant 0 : i32
    %c0_i32_1 = arith.constant 0 : i32
    return %c0_i32, %c0_i32_0 : i32, i32
  }
  func.func @transform_13(%arg0: i32) -> (i32, i32) {
    %c0_i32 = arith.constant 0 : i32
    %c0_i32_0 = arith.constant 0 : i32
    %c0_i32_1 = arith.constant 0 : i32
    return %c0_i32, %c0_i32_0 : i32, i32
  }
  func.func @transform_14(%arg0: i32) -> (i32, i32) {
    %c0_i32 = arith.constant 0 : i32
    %c0_i32_0 = arith.constant 0 : i32
    %c0_i32_1 = arith.constant 0 : i32
    return %c0_i32, %c0_i32_0 : i32, i32
  }
}

module attributes {stable_mosaic.version = 11 : i64} {
  func.func @_decoder_kernel(%arg0: i32, %arg1: memref<2x256xf32, #tpu.memory_space<vmem>>, %arg2: memref<2x2xf32, #tpu.memory_space<vmem>>, %arg3: memref<256x32xf32, #tpu.memory_space<vmem>>, %arg4: memref<1x32xf32, #tpu.memory_space<vmem>>, %arg5: memref<2x32xf32, #tpu.memory_space<vmem>>, %arg6: memref<1x32xf32, #tpu.memory_space<vmem>>, %arg7: memref<1x32xf32, #tpu.memory_space<vmem>>, %arg8: memref<1x32xf32, #tpu.memory_space<vmem>>, %arg9: memref<32x32xf32, #tpu.memory_space<vmem>>, %arg10: memref<1x32xf32, #tpu.memory_space<vmem>>, %arg11: memref<32x32xf32, #tpu.memory_space<vmem>>, %arg12: memref<1x32xf32, #tpu.memory_space<vmem>>, %arg13: memref<32x32xf32, #tpu.memory_space<vmem>>, %arg14: memref<1x32xf32, #tpu.memory_space<vmem>>, %arg15: memref<32x16xf32, #tpu.memory_space<vmem>>, %arg16: memref<1x16xf32, #tpu.memory_space<vmem>>, %arg17: memref<2x16xf32, #tpu.memory_space<vmem>>) attributes {dimension_semantics = [#tpu.dimension_semantics<arbitrary>], iteration_bounds = array<i64: 1>, scalar_prefetch = 0 : i64, scratch_operands = 0 : i64, tpu.core_type = #tpu.core_type<tc>, window_params = [{pipeline_mode = #tpu.pipeline_mode<synchronous>, transform_indices = @transform_0, window_bounds = array<i64: 2, 256>}, {pipeline_mode = #tpu.pipeline_mode<synchronous>, transform_indices = @transform_1, window_bounds = array<i64: 2, 2>}, {pipeline_mode = #tpu.pipeline_mode<synchronous>, transform_indices = @transform_2, window_bounds = array<i64: 256, 32>}, {pipeline_mode = #tpu.pipeline_mode<synchronous>, transform_indices = @transform_3, window_bounds = array<i64: 1, 32>}, {pipeline_mode = #tpu.pipeline_mode<synchronous>, transform_indices = @transform_4, window_bounds = array<i64: 2, 32>}, {pipeline_mode = #tpu.pipeline_mode<synchronous>, transform_indices = @transform_5, window_bounds = array<i64: 1, 32>}, {pipeline_mode = #tpu.pipeline_mode<synchronous>, transform_indices = @transform_6, window_bounds = array<i64: 1, 32>}, {pipeline_mode = #tpu.pipeline_mode<synchronous>, transform_indices = @transform_7, window_bounds = array<i64: 1, 32>}, {pipeline_mode = #tpu.pipeline_mode<synchronous>, transform_indices = @transform_8, window_bounds = array<i64: 32, 32>}, {pipeline_mode = #tpu.pipeline_mode<synchronous>, transform_indices = @transform_9, window_bounds = array<i64: 1, 32>}, {pipeline_mode = #tpu.pipeline_mode<synchronous>, transform_indices = @transform_10, window_bounds = array<i64: 32, 32>}, {pipeline_mode = #tpu.pipeline_mode<synchronous>, transform_indices = @transform_11, window_bounds = array<i64: 1, 32>}, {pipeline_mode = #tpu.pipeline_mode<synchronous>, transform_indices = @transform_12, window_bounds = array<i64: 32, 32>}, {pipeline_mode = #tpu.pipeline_mode<synchronous>, transform_indices = @transform_13, window_bounds = array<i64: 1, 32>}, {pipeline_mode = #tpu.pipeline_mode<synchronous>, transform_indices = @transform_14, window_bounds = array<i64: 32, 16>}, {pipeline_mode = #tpu.pipeline_mode<synchronous>, transform_indices = @transform_15, window_bounds = array<i64: 1, 16>}, {pipeline_mode = #tpu.pipeline_mode<synchronous>, transform_indices = @transform_16, window_bounds = array<i64: 2, 16>}]} {
    %c0 = arith.constant 0 : index
    %c0_0 = arith.constant 0 : index
    %0 = vector.load %arg1[%c0, %c0_0] : memref<2x256xf32, #tpu.memory_space<vmem>>, vector<2x256xf32>
    %c0_1 = arith.constant 0 : index
    %c0_2 = arith.constant 0 : index
    %1 = vector.load %arg3[%c0_1, %c0_2] : memref<256x32xf32, #tpu.memory_space<vmem>>, vector<256x32xf32>
    %cst = arith.constant dense<0.000000e+00> : vector<2x32xf32>
    %2 = tpu.matmul %0, %1, %cst {dimension_numbers = #tpu.dot_dimension_numbers<[1], [0], [0], [1], [0, 0, 1, 1], [], []>} : vector<2x256xf32>, vector<256x32xf32>, vector<2x32xf32> -> vector<2x32xf32>
    %c0_3 = arith.constant 0 : index
    %c0_4 = arith.constant 0 : index
    %3 = vector.load %arg4[%c0_3, %c0_4] : memref<1x32xf32, #tpu.memory_space<vmem>>, vector<1x32xf32>
    %4 = vector.broadcast %3 : vector<1x32xf32> to vector<2x32xf32>
    %5 = arith.addf %2, %4 : vector<2x32xf32>
    %c0_5 = arith.constant 0 : index
    %c0_6 = arith.constant 0 : index
    %6 = vector.load %arg2[%c0_5, %c0_6] : memref<2x2xf32, #tpu.memory_space<vmem>>, vector<2x2xf32>
    %c0_7 = arith.constant 0 : index
    %c0_8 = arith.constant 0 : index
    %7 = vector.load %arg5[%c0_7, %c0_8] : memref<2x32xf32, #tpu.memory_space<vmem>>, vector<2x32xf32>
    %cst_9 = arith.constant dense<0.000000e+00> : vector<2x32xf32>
    %8 = tpu.matmul %6, %7, %cst_9 {dimension_numbers = #tpu.dot_dimension_numbers<[1], [0], [0], [1], [0, 0, 1, 1], [], []>} : vector<2x2xf32>, vector<2x32xf32>, vector<2x32xf32> -> vector<2x32xf32>
    %c0_10 = arith.constant 0 : index
    %c0_11 = arith.constant 0 : index
    %9 = vector.load %arg6[%c0_10, %c0_11] : memref<1x32xf32, #tpu.memory_space<vmem>>, vector<1x32xf32>
    %10 = vector.broadcast %9 : vector<1x32xf32> to vector<2x32xf32>
    %11 = arith.addf %8, %10 : vector<2x32xf32>
    %12 = arith.addf %5, %11 : vector<2x32xf32>
    %c0_12 = arith.constant 0 : index
    %c0_13 = arith.constant 0 : index
    %13 = vector.load %arg7[%c0_12, %c0_13] : memref<1x32xf32, #tpu.memory_space<vmem>>, vector<1x32xf32>
    %c0_14 = arith.constant 0 : index
    %c0_15 = arith.constant 0 : index
    %14 = vector.load %arg8[%c0_14, %c0_15] : memref<1x32xf32, #tpu.memory_space<vmem>>, vector<1x32xf32>
    %cst_16 = arith.constant dense<0.000000e+00> : vector<2xf32>
    %15 = vector.multi_reduction <add>, %12, %cst_16 [1] : vector<2x32xf32> to vector<2xf32>
    %16 = vector.shape_cast %15 : vector<2xf32> to vector<2x1xf32>
    %cst_17 = arith.constant 3.200000e+01 : f32
    %17 = vector.broadcast %cst_17 : f32 to vector<2x1xf32>
    %18 = arith.divf %16, %17 : vector<2x1xf32>
    %19 = vector.broadcast %18 : vector<2x1xf32> to vector<2x32xf32>
    %20 = arith.subf %12, %19 : vector<2x32xf32>
    %21 = arith.mulf %20, %20 : vector<2x32xf32>
    %cst_18 = arith.constant dense<0.000000e+00> : vector<2xf32>
    %22 = vector.multi_reduction <add>, %21, %cst_18 [1] : vector<2x32xf32> to vector<2xf32>
    %23 = vector.shape_cast %22 : vector<2xf32> to vector<2x1xf32>
    %cst_19 = arith.constant 3.200000e+01 : f32
    %24 = vector.broadcast %cst_19 : f32 to vector<2x1xf32>
    %25 = arith.divf %23, %24 : vector<2x1xf32>
    %cst_20 = arith.constant 9.99999974E-6 : f32
    %26 = vector.broadcast %cst_20 : f32 to vector<2x1xf32>
    %27 = arith.addf %25, %26 : vector<2x1xf32>
    %28 = math.rsqrt %27 : vector<2x1xf32>
    %29 = vector.broadcast %28 : vector<2x1xf32> to vector<2x32xf32>
    %30 = arith.mulf %20, %29 : vector<2x32xf32>
    %31 = vector.broadcast %13 : vector<1x32xf32> to vector<2x32xf32>
    %32 = arith.mulf %30, %31 : vector<2x32xf32>
    %33 = vector.broadcast %14 : vector<1x32xf32> to vector<2x32xf32>
    %34 = arith.addf %32, %33 : vector<2x32xf32>
    %c0_21 = arith.constant 0 : index
    %c0_22 = arith.constant 0 : index
    %35 = vector.load %arg9[%c0_21, %c0_22] : memref<32x32xf32, #tpu.memory_space<vmem>>, vector<32x32xf32>
    %cst_23 = arith.constant dense<0.000000e+00> : vector<2x32xf32>
    %36 = tpu.matmul %34, %35, %cst_23 {dimension_numbers = #tpu.dot_dimension_numbers<[1], [0], [0], [1], [0, 0, 1, 1], [], []>} : vector<2x32xf32>, vector<32x32xf32>, vector<2x32xf32> -> vector<2x32xf32>
    %c0_24 = arith.constant 0 : index
    %c0_25 = arith.constant 0 : index
    %37 = vector.load %arg10[%c0_24, %c0_25] : memref<1x32xf32, #tpu.memory_space<vmem>>, vector<1x32xf32>
    %38 = vector.broadcast %37 : vector<1x32xf32> to vector<2x32xf32>
    %39 = arith.addf %36, %38 : vector<2x32xf32>
    %cst_26 = arith.constant 5.000000e-01 : f32
    %40 = vector.broadcast %cst_26 : f32 to vector<2x32xf32>
    %41 = arith.mulf %40, %39 : vector<2x32xf32>
    %42 = math.tanh %41 : vector<2x32xf32>
    %cst_27 = arith.constant 1.000000e+00 : f32
    %43 = vector.broadcast %cst_27 : f32 to vector<2x32xf32>
    %44 = arith.addf %42, %43 : vector<2x32xf32>
    %cst_28 = arith.constant 5.000000e-01 : f32
    %45 = vector.broadcast %cst_28 : f32 to vector<2x32xf32>
    %46 = arith.mulf %45, %44 : vector<2x32xf32>
    %47 = arith.mulf %39, %46 : vector<2x32xf32>
    %c0_29 = arith.constant 0 : index
    %c0_30 = arith.constant 0 : index
    %48 = vector.load %arg11[%c0_29, %c0_30] : memref<32x32xf32, #tpu.memory_space<vmem>>, vector<32x32xf32>
    %cst_31 = arith.constant dense<0.000000e+00> : vector<2x32xf32>
    %49 = tpu.matmul %34, %48, %cst_31 {dimension_numbers = #tpu.dot_dimension_numbers<[1], [0], [0], [1], [0, 0, 1, 1], [], []>} : vector<2x32xf32>, vector<32x32xf32>, vector<2x32xf32> -> vector<2x32xf32>
    %c0_32 = arith.constant 0 : index
    %c0_33 = arith.constant 0 : index
    %50 = vector.load %arg12[%c0_32, %c0_33] : memref<1x32xf32, #tpu.memory_space<vmem>>, vector<1x32xf32>
    %51 = vector.broadcast %50 : vector<1x32xf32> to vector<2x32xf32>
    %52 = arith.addf %49, %51 : vector<2x32xf32>
    %53 = arith.mulf %47, %52 : vector<2x32xf32>
    %c0_34 = arith.constant 0 : index
    %c0_35 = arith.constant 0 : index
    %54 = vector.load %arg13[%c0_34, %c0_35] : memref<32x32xf32, #tpu.memory_space<vmem>>, vector<32x32xf32>
    %cst_36 = arith.constant dense<0.000000e+00> : vector<2x32xf32>
    %55 = tpu.matmul %53, %54, %cst_36 {dimension_numbers = #tpu.dot_dimension_numbers<[1], [0], [0], [1], [0, 0, 1, 1], [], []>} : vector<2x32xf32>, vector<32x32xf32>, vector<2x32xf32> -> vector<2x32xf32>
    %c0_37 = arith.constant 0 : index
    %c0_38 = arith.constant 0 : index
    %56 = vector.load %arg14[%c0_37, %c0_38] : memref<1x32xf32, #tpu.memory_space<vmem>>, vector<1x32xf32>
    %57 = vector.broadcast %56 : vector<1x32xf32> to vector<2x32xf32>
    %58 = arith.addf %55, %57 : vector<2x32xf32>
    %c0_39 = arith.constant 0 : index
    %c0_40 = arith.constant 0 : index
    %59 = vector.load %arg15[%c0_39, %c0_40] : memref<32x16xf32, #tpu.memory_space<vmem>>, vector<32x16xf32>
    %cst_41 = arith.constant dense<0.000000e+00> : vector<2x16xf32>
    %60 = tpu.matmul %58, %59, %cst_41 {dimension_numbers = #tpu.dot_dimension_numbers<[1], [0], [0], [1], [0, 0, 1, 1], [], []>} : vector<2x32xf32>, vector<32x16xf32>, vector<2x16xf32> -> vector<2x16xf32>
    %c0_42 = arith.constant 0 : index
    %c0_43 = arith.constant 0 : index
    %61 = vector.load %arg16[%c0_42, %c0_43] : memref<1x16xf32, #tpu.memory_space<vmem>>, vector<1x16xf32>
    %62 = vector.broadcast %61 : vector<1x16xf32> to vector<2x16xf32>
    %63 = arith.addf %60, %62 : vector<2x16xf32>
    %cst_44 = arith.constant dense<0xFF800000> : vector<2xf32>
    %64 = vector.multi_reduction <maximumf>, %63, %cst_44 [1] : vector<2x16xf32> to vector<2xf32>
    %65 = vector.shape_cast %64 : vector<2xf32> to vector<2x1xf32>
    %66 = vector.broadcast %65 : vector<2x1xf32> to vector<2x16xf32>
    %67 = arith.subf %63, %66 : vector<2x16xf32>
    %68 = math.exp %67 : vector<2x16xf32>
    %cst_45 = arith.constant dense<0.000000e+00> : vector<2xf32>
    %69 = vector.multi_reduction <add>, %68, %cst_45 [1] : vector<2x16xf32> to vector<2xf32>
    %70 = vector.shape_cast %69 : vector<2xf32> to vector<2x1xf32>
    %71 = vector.broadcast %70 : vector<2x1xf32> to vector<2x16xf32>
    %72 = arith.divf %68, %71 : vector<2x16xf32>
    %c0_46 = arith.constant 0 : index
    %c0_47 = arith.constant 0 : index
    %73 = vector.load %arg17[%c0_46, %c0_47] : memref<2x16xf32, #tpu.memory_space<vmem>>, vector<2x16xf32>
    tpu.vector_store %arg17[%c0_46, %c0_47], %72 {strides = array<i32>} : memref<2x16xf32, #tpu.memory_space<vmem>>, vector<2x16xf32>,
    return
  }
  func.func @transform_0(%arg0: i32) -> (i32, i32) {
    %c0_i32 = arith.constant 0 : i32
    %c0_i32_0 = arith.constant 0 : i32
    %c0_i32_1 = arith.constant 0 : i32
    return %c0_i32, %c0_i32_0 : i32, i32
  }
  func.func @transform_1(%arg0: i32) -> (i32, i32) {
    %c0_i32 = arith.constant 0 : i32
    %c0_i32_0 = arith.constant 0 : i32
    %c0_i32_1 = arith.constant 0 : i32
    return %c0_i32, %c0_i32_0 : i32, i32
  }
  func.func @transform_2(%arg0: i32) -> (i32, i32) {
    %c0_i32 = arith.constant 0 : i32
    %c0_i32_0 = arith.constant 0 : i32
    %c0_i32_1 = arith.constant 0 : i32
    return %c0_i32, %c0_i32_0 : i32, i32
  }
  func.func @transform_3(%arg0: i32) -> (i32, i32) {
    %c0_i32 = arith.constant 0 : i32
    %c0_i32_0 = arith.constant 0 : i32
    %c0_i32_1 = arith.constant 0 : i32
    return %c0_i32, %c0_i32_0 : i32, i32
  }
  func.func @transform_4(%arg0: i32) -> (i32, i32) {
    %c0_i32 = arith.constant 0 : i32
    %c0_i32_0 = arith.constant 0 : i32
    %c0_i32_1 = arith.constant 0 : i32
    return %c0_i32, %c0_i32_0 : i32, i32
  }
  func.func @transform_5(%arg0: i32) -> (i32, i32) {
    %c0_i32 = arith.constant 0 : i32
    %c0_i32_0 = arith.constant 0 : i32
    %c0_i32_1 = arith.constant 0 : i32
    return %c0_i32, %c0_i32_0 : i32, i32
  }
  func.func @transform_6(%arg0: i32) -> (i32, i32) {
    %c0_i32 = arith.constant 0 : i32
    %c0_i32_0 = arith.constant 0 : i32
    %c0_i32_1 = arith.constant 0 : i32
    return %c0_i32, %c0_i32_0 : i32, i32
  }
  func.func @transform_7(%arg0: i32) -> (i32, i32) {
    %c0_i32 = arith.constant 0 : i32
    %c0_i32_0 = arith.constant 0 : i32
    %c0_i32_1 = arith.constant 0 : i32
    return %c0_i32, %c0_i32_0 : i32, i32
  }
  func.func @transform_8(%arg0: i32) -> (i32, i32) {
    %c0_i32 = arith.constant 0 : i32
    %c0_i32_0 = arith.constant 0 : i32
    %c0_i32_1 = arith.constant 0 : i32
    return %c0_i32, %c0_i32_0 : i32, i32
  }
  func.func @transform_9(%arg0: i32) -> (i32, i32) {
    %c0_i32 = arith.constant 0 : i32
    %c0_i32_0 = arith.constant 0 : i32
    %c0_i32_1 = arith.constant 0 : i32
    return %c0_i32, %c0_i32_0 : i32, i32
  }
  func.func @transform_10(%arg0: i32) -> (i32, i32) {
    %c0_i32 = arith.constant 0 : i32
    %c0_i32_0 = arith.constant 0 : i32
    %c0_i32_1 = arith.constant 0 : i32
    return %c0_i32, %c0_i32_0 : i32, i32
  }
  func.func @transform_11(%arg0: i32) -> (i32, i32) {
    %c0_i32 = arith.constant 0 : i32
    %c0_i32_0 = arith.constant 0 : i32
    %c0_i32_1 = arith.constant 0 : i32
    return %c0_i32, %c0_i32_0 : i32, i32
  }
  func.func @transform_12(%arg0: i32) -> (i32, i32) {
    %c0_i32 = arith.constant 0 : i32
    %c0_i32_0 = arith.constant 0 : i32
    %c0_i32_1 = arith.constant 0 : i32
    return %c0_i32, %c0_i32_0 : i32, i32
  }
  func.func @transform_13(%arg0: i32) -> (i32, i32) {
    %c0_i32 = arith.constant 0 : i32
    %c0_i32_0 = arith.constant 0 : i32
    %c0_i32_1 = arith.constant 0 : i32
    return %c0_i32, %c0_i32_0 : i32, i32
  }
  func.func @transform_14(%arg0: i32) -> (i32, i32) {
    %c0_i32 = arith.constant 0 : i32
    %c0_i32_0 = arith.constant 0 : i32
    %c0_i32_1 = arith.constant 0 : i32
    return %c0_i32, %c0_i32_0 : i32, i32
  }
  func.func @transform_15(%arg0: i32) -> (i32, i32) {
    %c0_i32 = arith.constant 0 : i32
    %c0_i32_0 = arith.constant 0 : i32
    %c0_i32_1 = arith.constant 0 : i32
    return %c0_i32, %c0_i32_0 : i32, i32
  }
  func.func @transform_16(%arg0: i32) -> (i32, i32) {
    %c0_i32 = arith.constant 0 : i32
    %c0_i32_0 = arith.constant 0 : i32
    %c0_i32_1 = arith.constant 0 : i32
    return %c0_i32, %c0_i32_0 : i32, i32
  }
}

</mosaic_0001>

<llo_original>
// kernel: my_model_forward.4
$region0: #{my_model_forward.4}
  #allocation0 [shape = 'u32[]', space=smem, size = 0x4, offset = 0x4, fixed_abs, tag = 'smem constant byte address 0x4 - core index']
  #allocation1 [shape = 'u32[144,128]{1,0:T(1,128)}', space=vmem, size = 0x12000, scoped, tag = 'internal scratch']
  %s0 = inlined_call_operand.vmem [shape: f32[16,10], index: 0, kind: input, shape index: {}]
  %s1 = inlined_call_operand.vmem [shape: f32[10,32], index: 1, kind: input, shape index: {}]
  %s2 = inlined_call_operand.vmem [shape: f32[1,32], index: 2, kind: input, shape index: {}]
  %s3 = inlined_call_operand.vmem [shape: f32[8,32], index: 3, kind: input, shape index: {}]
  %s4 = inlined_call_operand.vmem [shape: f32[1,32], index: 4, kind: input, shape index: {}]
  %s5 = inlined_call_operand.vmem [shape: f32[1,32], index: 5, kind: input, shape index: {}]
  %s6 = inlined_call_operand.vmem [shape: f32[16,32], index: 6, kind: output, shape index: {}]
  %s7 = sld [smem:[#allocation0]]
  $region34: #{my_model_forward.4} parent=0
    _
  %s9 = ssub.s32 1, %s7
  %s10 = scalar_select 0, %s9, %s7
  // Predicated region
  $region2: #{my_model_forward.4} parent=0 // pred_check
    _
  $region3: #{my_model_forward.4} parent=0 // pred_check_branch
    %12 = sbr.rel (0) target = $region5
  $region4: #{my_model_forward.4} parent=0 // pred_region
    _
  $region5: #{my_model_forward.4} parent=0 // pred_fallthru
    _
  // Predicated region
  $region6: #{my_model_forward.4} parent=0 // pred_check
    _
  $region7: #{my_model_forward.4} parent=0 // pred_check_branch
    %14 = sbr.rel (0) target = $region9
  $region8: #{my_model_forward.4} parent=0 // pred_region
    _
  $region9: #{my_model_forward.4} parent=0 // pred_fallthru
    _
  // Predicated region
  $region10: #{my_model_forward.4} parent=0 // pred_check
    _
  $region11: #{my_model_forward.4} parent=0 // pred_check_branch
    %16 = sbr.rel (0) target = $region13
  $region12: #{my_model_forward.4} parent=0 // pred_region
    _
  $region13: #{my_model_forward.4} parent=0 // pred_fallthru
    _
  // Predicated region
  $region14: #{my_model_forward.4} parent=0 // pred_check
    _
  $region15: #{my_model_forward.4} parent=0 // pred_check_branch
    %18 = sbr.rel (0) target = $region17
  $region16: #{my_model_forward.4} parent=0 // pred_region
    _
  $region17: #{my_model_forward.4} parent=0 // pred_fallthru
    _
  // Predicated region
  $region18: #{my_model_forward.4} parent=0 // pred_check
    _
  $region19: #{my_model_forward.4} parent=0 // pred_check_branch
    %20 = sbr.rel (0) target = $region21
  $region20: #{my_model_forward.4} parent=0 // pred_region
    _
  $region21: #{my_model_forward.4} parent=0 // pred_fallthru
    _
  // Predicated region
  $region22: #{my_model_forward.4} parent=0 // pred_check
    _
  $region23: #{my_model_forward.4} parent=0 // pred_check_branch
    %22 = sbr.rel (0) target = $region25
  $region24: #{my_model_forward.4} parent=0 // pred_region
    _
  $region25: #{my_model_forward.4} parent=0 // pred_fallthru
    _
  %v23 = vld [vmem:[%s0] sm:$0xff]
  %v24 = vld [vmem:[%s0 + $0x8] sm:$0xff]
  %v25 = vld [vmem:[%s1] sm:$0xff]
  %v26 = vld [vmem:[%s1 + $0x8] sm:$0x3]
  %v27 = vld [vmem:[%s2] sm:$0x1]
  %v29 = vlaneseq
  %v30 = vshrl.u32 %v29, 7
  %v31 = vsub.s32 0, %v30
  %v32 = vrot.slane %v27, %v31
  %vm34 = vcmask 80896
  %v36 = vsel %vm34, %v23, 0
  %v39 = vsel %vm34, %v24, 0
  %vm41 = vcmask 1041408
  %v43 = vsel %vm41, %v26, 0
  %45 = vmatprep.subr.mxu0 0.0
  %46 = vmatpush1.msra.mxu0 %v25
  %47 = vmatprep.subr.mxu0 0.0
  %48 = vmatpush1.msra.mxu0 %v43
  %49 = vmatprep.subr.mxu0 0.0
  %50 = vmatpush1.msra.mxu0 0.0
  %51 = vmatprep.subr.mxu0 0.0
  %52 = vmatpush1.msra.mxu0 0.0
  %53 = vmatprep.subr.mxu0 0.0
  %54 = vmatpush1.msra.mxu0 0.0
  %55 = vmatprep.subr.mxu0 0.0
  %56 = vmatpush1.msra.mxu0 0.0
  %57 = vmatprep.subr.mxu0 0.0
  %58 = vmatpush1.msra.mxu0 0.0
  %59 = vmatprep.subr.mxu0 0.0
  %60 = vmatpush1.msra.mxu0 0.0
  %61 = vmatprep.subr.mxu0 0.0
  %62 = vmatpush1.msra.mxu0 0.0
  %63 = vmatprep.subr.mxu0 0.0
  %64 = vmatpush1.msra.mxu0 0.0
  %65 = vmatprep.subr.mxu0 0.0
  %66 = vmatpush1.msra.mxu0 0.0
  %67 = vmatprep.subr.mxu0 0.0
  %68 = vmatpush1.msra.mxu0 0.0
  %69 = vmatprep.subr.mxu0 0.0
  %70 = vmatpush1.msra.mxu0 0.0
  %71 = vmatprep.subr.mxu0 0.0
  %72 = vmatpush1.msra.mxu0 0.0
  %73 = vmatprep.subr.mxu0 0.0
  %74 = vmatpush1.msra.mxu0 0.0
  %75 = vmatprep.subr.mxu0 0.0
  %76 = vmatpush1.msra.mxu0 0.0
  %77 = vmatprep.subr.mxu0 0.0
  %78 = vmatpush1.msra.mxu0 0.0
  %79 = vmatprep.subr.mxu0 0.0
  %80 = vmatpush1.msra.mxu0 0.0
  %81 = vmatprep.subr.mxu0 0.0
  %82 = vmatpush1.msra.mxu0 0.0
  %83 = vmatprep.subr.mxu0 0.0
  %84 = vmatpush1.msra.mxu0 0.0
  %85 = vmatprep.subr.mxu0 0.0
  %86 = vmatpush1.msra.mxu0 0.0
  %87 = vmatprep.subr.mxu0 0.0
  %88 = vmatpush1.msra.mxu0 0.0
  %89 = vmatprep.subr.mxu0 0.0
  %90 = vmatpush1.msra.mxu0 0.0
  %91 = vmatprep.subr.mxu0 0.0
  %92 = vmatpush1.msra.mxu0 0.0
  %93 = vmatprep.subr.mxu0 0.0
  %94 = vmatpush1.msra.mxu0 0.0
  %95 = vmatprep.subr.mxu0 0.0
  %96 = vmatpush1.msra.mxu0 0.0
  %97 = vmatprep.subr.mxu0 0.0
  %98 = vmatpush1.msra.mxu0 0.0
  %99 = vmatprep.subr.mxu0 0.0
  %100 = vmatpush1.msra.mxu0 0.0
  %101 = vmatprep.subr.mxu0 0.0
  %102 = vmatpush1.msra.mxu0 0.0
  %103 = vmatprep.subr.mxu0 0.0
  %104 = vmatpush1.msra.mxu0 0.0
  %105 = vmatprep.subr.mxu0 0.0
  %106 = vmatpush1.msra.mxu0 0.0
  %107 = vmatprep.subr.mxu0 0.0
  %108 = vmatpush1.msra.mxu0 0.0
  %109 = vmatprep.mubr.f32.mxu0 0.0
  %110 = vmatmul.mubr.f32.gmra.mrb[0].mxu0 %v36
  %v111 = vpop.f32.mrb[0].mxu0
  %v112 = vadd.f32 %v32, %v111
  %v113 = vpop.f32.mrb[0].mxu0
  %114 = vmatprep.mubr.f32.mxu0 0.0
  %115 = vmatmul.mubr.f32.gmra.mrb[0].mxu0 %v39
  %v116 = vpop.f32.mrb[0].mxu0
  %v117 = vadd.f32 %v32, %v116
  %v118 = vpop.f32.mrb[0].mxu0
  %119 = vdwg.mxu0
  %v120 = vld [vmem:[%s3] sm:$0xff]
  %v121 = vadd.f32 %v112, %v120
  %v122 = vadd.f32 %v117, %v120
  %v123 = vld [vmem:[%s4] sm:$0x1]
  %v124 = vld [vmem:[%s5] sm:$0x1]
  %vm125 = vcmask 261120
  %v126 = vsel %vm125, %v121, 0.0
  %127 = vadd.xlane.f32.xlu0 %v126
  %v128 = vpop.xlane.xlu0 %127
  %v129 = vsel %vm125, %v122, 0.0
  %130 = vadd.xlane.f32.xlu0 %v129
  %v131 = vpop.xlane.xlu0 %130
  %v132 = vrcp.pop 32.0
  %v133 = vmul.f32 %v128, %v132
  %v134 = vmul.f32 %v131, %v132
  %v135 = vsub.f32 %v121, %v133
  %v136 = vsub.f32 %v122, %v134
  %v137 = vmul.f32 %v135, %v135
  %v138 = vmul.f32 %v136, %v136
  %v139 = vsel %vm125, %v137, 0.0
  %140 = vadd.xlane.f32.xlu0 %v139
  %v141 = vpop.xlane.xlu0 %140
  %v142 = vsel %vm125, %v138, 0.0
  %143 = vadd.xlane.f32.xlu0 %v142
  %v144 = vpop.xlane.xlu0 %143
  %v145 = vmul.f32 %v141, %v132
  %v146 = vmul.f32 %v144, %v132
  %v147 = vadd.f32 %v145, 1e-05
  %v148 = vadd.f32 %v146, 1e-05
  %v149 = vrsqrt.pop %v147
  %v150 = vrsqrt.pop %v148
  %v151 = vmul.f32 %v135, %v149
  %v152 = vmul.f32 %v136, %v150
  %v154 = vlaneseq
  %v155 = vshrl.u32 %v154, 7
  %v156 = vsub.s32 0, %v155
  %v157 = vrot.slane %v123, %v156
  %v159 = vmul.f32 %v151, %v157
  %v160 = vmul.f32 %v152, %v157
  %v162 = vlaneseq
  %v163 = vshrl.u32 %v162, 7
  %v164 = vsub.s32 0, %v163
  %v165 = vrot.slane %v124, %v164
  %v167 = vadd.f32 %v159, %v165
  %v168 = vadd.f32 %v160, %v165
  %169 = vst.msk [vmem:[%s6] sm:$0xff] %vm125, %v167
  %170 = vst.msk [vmem:[%s6 + $0x8] sm:$0xff] %vm125, %v168
  // Predicated region
  $region26: #{my_model_forward.4} parent=0 // pred_check
    _
  $region27: #{my_model_forward.4} parent=0 // pred_check_branch
    %172 = sbr.rel (0) target = $region29
  $region28: #{my_model_forward.4} parent=0 // pred_region
    _
  $region29: #{my_model_forward.4} parent=0 // pred_fallthru
    _
  // Predicated region
  $region30: #{my_model_forward.4} parent=0 // pred_check
    _
  $region31: #{my_model_forward.4} parent=0 // pred_check_branch
    %174 = sbr.rel (0) target = $region33
  $region32: #{my_model_forward.4} parent=0 // pred_region
    _
  $region33: #{my_model_forward.4} parent=0 // pred_fallthru
    _

// kernel: my_model_forward.7
$region0: #{my_model_forward.7}
  #allocation0 [shape = 'u32[]', space=smem, size = 0x4, offset = 0x4, fixed_abs, tag = 'smem constant byte address 0x4 - core index']
  #allocation1 [shape = 'u32[144,128]{1,0:T(1,128)}', space=vmem, size = 0x12000, scoped, tag = 'internal scratch']
  %s0 = inlined_call_operand.vmem [shape: f32[2,256], index: 0, kind: input, shape index: {}]
  %s1 = inlined_call_operand.vmem [shape: f32[2,2], index: 1, kind: input, shape index: {}]
  %s2 = inlined_call_operand.vmem [shape: f32[256,32], index: 2, kind: input, shape index: {}]
  %s3 = inlined_call_operand.vmem [shape: f32[1,32], index: 3, kind: input, shape index: {}]
  %s4 = inlined_call_operand.vmem [shape: f32[2,32], index: 4, kind: input, shape index: {}]
  %s5 = inlined_call_operand.vmem [shape: f32[1,32], index: 5, kind: input, shape index: {}]
  %s6 = inlined_call_operand.vmem [shape: f32[1,32], index: 6, kind: input, shape index: {}]
  %s7 = inlined_call_operand.vmem [shape: f32[1,32], index: 7, kind: input, shape index: {}]
  %s8 = inlined_call_operand.vmem [shape: f32[32,32], index: 8, kind: input, shape index: {}]
  %s9 = inlined_call_operand.vmem [shape: f32[1,32], index: 9, kind: input, shape index: {}]
  %s10 = inlined_call_operand.vmem [shape: f32[32,32], index: 10, kind: input, shape index: {}]
  %s11 = inlined_call_operand.vmem [shape: f32[1,32], index: 11, kind: input, shape index: {}]
  %s12 = inlined_call_operand.vmem [shape: f32[32,32], index: 12, kind: input, shape index: {}]
  %s13 = inlined_call_operand.vmem [shape: f32[1,32], index: 13, kind: input, shape index: {}]
  %s14 = inlined_call_operand.vmem [shape: f32[32,16], index: 14, kind: input, shape index: {}]
  %s15 = inlined_call_operand.vmem [shape: f32[1,16], index: 15, kind: input, shape index: {}]
  %s16 = inlined_call_operand.hbm [shape: f32[2,16], index: 16, kind: output, shape index: {}]
  %s17 = sld [smem:[#allocation0]]
  $region74: #{my_model_forward.7} parent=0
    _
  %s19 = ssub.s32 1, %s17
  %s20 = scalar_select 0, %s19, %s17
  $region1: #{my_model_forward.7} parent=0
    #allocation2 [shape = 'u8[1024]{0}', space=vmem, size = 0x400, scoped, tag = 'output window, operand 0, single buffered']
    #allocation3 [shape = 's32[1]{0}', space=sflag, size = 0x4, scoped, tag = 'scoped memory for my_model_forward.7']
    %21 = vsyncpa [#allocation3], 0
    // Predicated region
    $region2: #{my_model_forward.7} parent=1 // pred_check
      _
    $region3: #{my_model_forward.7} parent=1 // pred_check_branch
      %23 = sbr.rel (0) target = $region5
    $region4: #{my_model_forward.7} parent=1 // pred_region
      _
    $region5: #{my_model_forward.7} parent=1 // pred_fallthru
      _
    // Predicated region
    $region6: #{my_model_forward.7} parent=1 // pred_check
      _
    $region7: #{my_model_forward.7} parent=1 // pred_check_branch
      %25 = sbr.rel (0) target = $region9
    $region8: #{my_model_forward.7} parent=1 // pred_region
      _
    $region9: #{my_model_forward.7} parent=1 // pred_fallthru
      _
    // Predicated region
    $region10: #{my_model_forward.7} parent=1 // pred_check
      _
    $region11: #{my_model_forward.7} parent=1 // pred_check_branch
      %27 = sbr.rel (0) target = $region13
    $region12: #{my_model_forward.7} parent=1 // pred_region
      _
    $region13: #{my_model_forward.7} parent=1 // pred_fallthru
      _
    // Predicated region
    $region14: #{my_model_forward.7} parent=1 // pred_check
      _
    $region15: #{my_model_forward.7} parent=1 // pred_check_branch
      %29 = sbr.rel (0) target = $region17
    $region16: #{my_model_forward.7} parent=1 // pred_region
      _
    $region17: #{my_model_forward.7} parent=1 // pred_fallthru
      _
    // Predicated region
    $region18: #{my_model_forward.7} parent=1 // pred_check
      _
    $region19: #{my_model_forward.7} parent=1 // pred_check_branch
      %31 = sbr.rel (0) target = $region21
    $region20: #{my_model_forward.7} parent=1 // pred_region
      _
    $region21: #{my_model_forward.7} parent=1 // pred_fallthru
      _
    // Predicated region
    $region22: #{my_model_forward.7} parent=1 // pred_check
      _
    $region23: #{my_model_forward.7} parent=1 // pred_check_branch
      %33 = sbr.rel (0) target = $region25
    $region24: #{my_model_forward.7} parent=1 // pred_region
      _
    $region25: #{my_model_forward.7} parent=1 // pred_fallthru
      _
    // Predicated region
    $region26: #{my_model_forward.7} parent=1 // pred_check
      _
    $region27: #{my_model_forward.7} parent=1 // pred_check_branch
      %35 = sbr.rel (0) target = $region29
    $region28: #{my_model_forward.7} parent=1 // pred_region
      _
    $region29: #{my_model_forward.7} parent=1 // pred_fallthru
      _
    // Predicated region
    $region30: #{my_model_forward.7} parent=1 // pred_check
      _
    $region31: #{my_model_forward.7} parent=1 // pred_check_branch
      %37 = sbr.rel (0) target = $region33
    $region32: #{my_model_forward.7} parent=1 // pred_region
      _
    $region33: #{my_model_forward.7} parent=1 // pred_fallthru
      _
    // Predicated region
    $region34: #{my_model_forward.7} parent=1 // pred_check
      _
    $region35: #{my_model_forward.7} parent=1 // pred_check_branch
      %39 = sbr.rel (0) target = $region37
    $region36: #{my_model_forward.7} parent=1 // pred_region
      _
    $region37: #{my_model_forward.7} parent=1 // pred_fallthru
      _
    // Predicated region
    $region38: #{my_model_forward.7} parent=1 // pred_check
      _
    $region39: #{my_model_forward.7} parent=1 // pred_check_branch
      %41 = sbr.rel (0) target = $region41
    $region40: #{my_model_forward.7} parent=1 // pred_region
      _
    $region41: #{my_model_forward.7} parent=1 // pred_fallthru
      _
    // Predicated region
    $region42: #{my_model_forward.7} parent=1 // pred_check
      _
    $region43: #{my_model_forward.7} parent=1 // pred_check_branch
      %43 = sbr.rel (0) target = $region45
    $region44: #{my_model_forward.7} parent=1 // pred_region
      _
    $region45: #{my_model_forward.7} parent=1 // pred_fallthru
      _
    // Predicated region
    $region46: #{my_model_forward.7} parent=1 // pred_check
      _
    $region47: #{my_model_forward.7} parent=1 // pred_check_branch
      %45 = sbr.rel (0) target = $region49
    $region48: #{my_model_forward.7} parent=1 // pred_region
      _
    $region49: #{my_model_forward.7} parent=1 // pred_fallthru
      _
    // Predicated region
    $region50: #{my_model_forward.7} parent=1 // pred_check
      _
    $region51: #{my_model_forward.7} parent=1 // pred_check_branch
      %47 = sbr.rel (0) target = $region53
    $region52: #{my_model_forward.7} parent=1 // pred_region
      _
    $region53: #{my_model_forward.7} parent=1 // pred_fallthru
      _
    // Predicated region
    $region54: #{my_model_forward.7} parent=1 // pred_check
      _
    $region55: #{my_model_forward.7} parent=1 // pred_check_branch
      %49 = sbr.rel (0) target = $region57
    $region56: #{my_model_forward.7} parent=1 // pred_region
      _
    $region57: #{my_model_forward.7} parent=1 // pred_fallthru
      _
    // Predicated region
    $region58: #{my_model_forward.7} parent=1 // pred_check
      _
    $region59: #{my_model_forward.7} parent=1 // pred_check_branch
      %51 = sbr.rel (0) target = $region61
    $region60: #{my_model_forward.7} parent=1 // pred_region
      _
    $region61: #{my_model_forward.7} parent=1 // pred_fallthru
      _
    // Predicated region
    $region62: #{my_model_forward.7} parent=1 // pred_check
      _
    $region63: #{my_model_forward.7} parent=1 // pred_check_branch
      %53 = sbr.rel (0) target = $region65
    $region64: #{my_model_forward.7} parent=1 // pred_region
      _
    $region65: #{my_model_forward.7} parent=1 // pred_fallthru
      _
    %v54 = vld [vmem:[%s0] sm:$0xf]
    %v55 = vld [vmem:[%s2] sm:$0xff]
    %v56 = vld [vmem:[%s2 + $0x8] sm:$0xff]
    %v57 = vld [vmem:[%s2 + $0x10] sm:$0xff]
    %v58 = vld [vmem:[%s2 + $0x18] sm:$0xff]
    %v59 = vld [vmem:[%s2 + $0x20] sm:$0xff]
    %v60 = vld [vmem:[%s2 + $0x28] sm:$0xff]
    %v61 = vld [vmem:[%s2 + $0x30] sm:$0xff]
    %v62 = vld [vmem:[%s2 + $0x38] sm:$0xff]
    %v63 = vld [vmem:[%s2 + $0x40] sm:$0xff]
    %v64 = vld [vmem:[%s2 + $0x48] sm:$0xff]
    %v65 = vld [vmem:[%s2 + $0x50] sm:$0xff]
    %v66 = vld [vmem:[%s2 + $0x58] sm:$0xff]
    %v67 = vld [vmem:[%s2 + $0x60] sm:$0xff]
    %v68 = vld [vmem:[%s2 + $0x68] sm:$0xff]
    %v69 = vld [vmem:[%s2 + $0x70] sm:$0xff]
    %v70 = vld [vmem:[%s2 + $0x78] sm:$0xff]
    %v71 = vld [vmem:[%s2 + $0x80] sm:$0xff]
    %v72 = vld [vmem:[%s2 + $0x88] sm:$0xff]
    %v73 = vld [vmem:[%s2 + $0x90] sm:$0xff]
    %v74 = vld [vmem:[%s2 + $0x98] sm:$0xff]
    %v75 = vld [vmem:[%s2 + $0xa0] sm:$0xff]
    %v76 = vld [vmem:[%s2 + $0xa8] sm:$0xff]
    %v77 = vld [vmem:[%s2 + $0xb0] sm:$0xff]
    %v78 = vld [vmem:[%s2 + $0xb8] sm:$0xff]
    %v79 = vld [vmem:[%s2 + $0xc0] sm:$0xff]
    %v80 = vld [vmem:[%s2 + $0xc8] sm:$0xff]
    %v81 = vld [vmem:[%s2 + $0xd0] sm:$0xff]
    %v82 = vld [vmem:[%s2 + $0xd8] sm:$0xff]
    %v83 = vld [vmem:[%s2 + $0xe0] sm:$0xff]
    %v84 = vld [vmem:[%s2 + $0xe8] sm:$0xff]
    %v85 = vld [vmem:[%s2 + $0xf0] sm:$0xff]
    %v86 = vld [vmem:[%s2 + $0xf8] sm:$0xff]
    %v87 = vld [vmem:[%s3] sm:$0x1]
    %v89 = vlaneseq
    %v90 = vshrl.u32 %v89, 7
    %v91 = vsub.s32 0, %v90
    %v92 = vrot.slane %v87, %v91
    %v96 = vunpack.c.l.s4 1983009808
    %v97 = vunpack.c.0.s8 %v96
    %v98 = vlaneseq
    %v99 = vshrl.u32 %v98, 7
    %v100 = vsub.s32 %v97, %v99
    %v101 = vrot.slane %v54, %v100
    %v102 = vcombine.high %v101, %v101
    %105 = vmatprep.subr.mxu0 0.0
    %106 = vmatpush1.msra.mxu0 %v55
    %107 = vmatprep.subr.mxu0 0.0
    %108 = vmatpush1.msra.mxu0 %v56
    %109 = vmatprep.subr.mxu0 0.0
    %110 = vmatpush1.msra.mxu0 %v57
    %111 = vmatprep.subr.mxu0 0.0
    %112 = vmatpush1.msra.mxu0 %v58
    %113 = vmatprep.subr.mxu0 0.0
    %114 = vmatpush1.msra.mxu0 %v59
    %115 = vmatprep.subr.mxu0 0.0
    %116 = vmatpush1.msra.mxu0 %v60
    %117 = vmatprep.subr.mxu0 0.0
    %118 = vmatpush1.msra.mxu0 %v61
    %119 = vmatprep.subr.mxu0 0.0
    %120 = vmatpush1.msra.mxu0 %v62
    %121 = vmatprep.subr.mxu0 0.0
    %122 = vmatpush1.msra.mxu0 %v63
    %123 = vmatprep.subr.mxu0 0.0
    %124 = vmatpush1.msra.mxu0 %v64
    %125 = vmatprep.subr.mxu0 0.0
    %126 = vmatpush1.msra.mxu0 %v65
    %127 = vmatprep.subr.mxu0 0.0
    %128 = vmatpush1.msra.mxu0 %v66
    %129 = vmatprep.subr.mxu0 0.0
    %130 = vmatpush1.msra.mxu0 %v67
    %131 = vmatprep.subr.mxu0 0.0
    %132 = vmatpush1.msra.mxu0 %v68
    %133 = vmatprep.subr.mxu0 0.0
    %134 = vmatpush1.msra.mxu0 %v69
    %135 = vmatprep.subr.mxu0 0.0
    %136 = vmatpush1.msra.mxu0 %v70
    %137 = vmatprep.subr.mxu0 0.0
    %138 = vmatpush1.msra.mxu0 %v71
    %139 = vmatprep.subr.mxu0 0.0
    %140 = vmatpush1.msra.mxu0 %v72
    %141 = vmatprep.subr.mxu0 0.0
    %142 = vmatpush1.msra.mxu0 %v73
    %143 = vmatprep.subr.mxu0 0.0
    %144 = vmatpush1.msra.mxu0 %v74
    %145 = vmatprep.subr.mxu0 0.0
    %146 = vmatpush1.msra.mxu0 %v75
    %147 = vmatprep.subr.mxu0 0.0
    %148 = vmatpush1.msra.mxu0 %v76
    %149 = vmatprep.subr.mxu0 0.0
    %150 = vmatpush1.msra.mxu0 %v77
    %151 = vmatprep.subr.mxu0 0.0
    %152 = vmatpush1.msra.mxu0 %v78
    %153 = vmatprep.subr.mxu0 0.0
    %154 = vmatpush1.msra.mxu0 %v79
    %155 = vmatprep.subr.mxu0 0.0
    %156 = vmatpush1.msra.mxu0 %v80
    %157 = vmatprep.subr.mxu0 0.0
    %158 = vmatpush1.msra.mxu0 %v81
    %159 = vmatprep.subr.mxu0 0.0
    %160 = vmatpush1.msra.mxu0 %v82
    %161 = vmatprep.subr.mxu0 0.0
    %162 = vmatpush1.msra.mxu0 %v83
    %163 = vmatprep.subr.mxu0 0.0
    %164 = vmatpush1.msra.mxu0 %v84
    %165 = vmatprep.subr.mxu0 0.0
    %166 = vmatpush1.msra.mxu0 %v85
    %167 = vmatprep.subr.mxu0 0.0
    %168 = vmatpush1.msra.mxu0 %v86
    %169 = vmatprep.mubr.f32.mxu0 %v102
    %170 = vmatmul.mubr.f32.gmra.mrb[0].mxu0 %v101
    %v171 = vpop.f32.mrb[0].mxu0
    %v172 = vadd.f32 %v92, %v171
    %v173 = vpop.f32.mrb[0].mxu0
    %174 = vdwg.mxu0
    %v175 = vld [vmem:[%s1] sm:$0x3]
    %v176 = vld [vmem:[%s4] sm:$0x3]
    %v177 = vld [vmem:[%s5] sm:$0x1]
    %v179 = vlaneseq
    %v180 = vshrl.u32 %v179, 7
    %v181 = vsub.s32 0, %v180
    %v182 = vrot.slane %v177, %v181
    %vm184 = vcmask 15360
    %v186 = vsel %vm184, %v175, 0
    %vm188 = vcmask 1041408
    %v190 = vsel %vm188, %v176, 0
    %192 = vmatprep.subr.mxu0 0.0
    %193 = vmatpush1.msra.mxu0 %v190
    %194 = vmatprep.subr.mxu0 0.0
    %195 = vmatpush1.msra.mxu0 0.0
    %196 = vmatprep.subr.mxu0 0.0
    %197 = vmatpush1.msra.mxu0 0.0
    %198 = vmatprep.subr.mxu0 0.0
    %199 = vmatpush1.msra.mxu0 0.0
    %200 = vmatprep.subr.mxu0 0.0
    %201 = vmatpush1.msra.mxu0 0.0
    %202 = vmatprep.subr.mxu0 0.0
    %203 = vmatpush1.msra.mxu0 0.0
    %204 = vmatprep.subr.mxu0 0.0
    %205 = vmatpush1.msra.mxu0 0.0
    %206 = vmatprep.subr.mxu0 0.0
    %207 = vmatpush1.msra.mxu0 0.0
    %208 = vmatprep.subr.mxu0 0.0
    %209 = vmatpush1.msra.mxu0 0.0
    %210 = vmatprep.subr.mxu0 0.0
    %211 = vmatpush1.msra.mxu0 0.0
    %212 = vmatprep.subr.mxu0 0.0
    %213 = vmatpush1.msra.mxu0 0.0
    %214 = vmatprep.subr.mxu0 0.0
    %215 = vmatpush1.msra.mxu0 0.0
    %216 = vmatprep.subr.mxu0 0.0
    %217 = vmatpush1.msra.mxu0 0.0
    %218 = vmatprep.subr.mxu0 0.0
    %219 = vmatpush1.msra.mxu0 0.0
    %220 = vmatprep.subr.mxu0 0.0
    %221 = vmatpush1.msra.mxu0 0.0
    %222 = vmatprep.subr.mxu0 0.0
    %223 = vmatpush1.msra.mxu0 0.0
    %224 = vmatprep.subr.mxu0 0.0
    %225 = vmatpush1.msra.mxu0 0.0
    %226 = vmatprep.subr.mxu0 0.0
    %227 = vmatpush1.msra.mxu0 0.0
    %228 = vmatprep.subr.mxu0 0.0
    %229 = vmatpush1.msra.mxu0 0.0
    %230 = vmatprep.subr.mxu0 0.0
    %231 = vmatpush1.msra.mxu0 0.0
    %232 = vmatprep.subr.mxu0 0.0
    %233 = vmatpush1.msra.mxu0 0.0
    %234 = vmatprep.subr.mxu0 0.0
    %235 = vmatpush1.msra.mxu0 0.0
    %236 = vmatprep.subr.mxu0 0.0
    %237 = vmatpush1.msra.mxu0 0.0
    %238 = vmatprep.subr.mxu0 0.0
    %239 = vmatpush1.msra.mxu0 0.0
    %240 = vmatprep.subr.mxu0 0.0
    %241 = vmatpush1.msra.mxu0 0.0
    %242 = vmatprep.subr.mxu0 0.0
    %243 = vmatpush1.msra.mxu0 0.0
    %244 = vmatprep.subr.mxu0 0.0
    %245 = vmatpush1.msra.mxu0 0.0
    %246 = vmatprep.subr.mxu0 0.0
    %247 = vmatpush1.msra.mxu0 0.0
    %248 = vmatprep.subr.mxu0 0.0
    %249 = vmatpush1.msra.mxu0 0.0
    %250 = vmatprep.subr.mxu0 0.0
    %251 = vmatpush1.msra.mxu0 0.0
    %252 = vmatprep.subr.mxu0 0.0
    %253 = vmatpush1.msra.mxu0 0.0
    %254 = vmatprep.subr.mxu0 0.0
    %255 = vmatpush1.msra.mxu0 0.0
    %256 = vmatprep.mubr.f32.mxu0 0.0
    %257 = vmatmul.mubr.f32.gmra.mrb[0].mxu0 %v186
    %v258 = vpop.f32.mrb[0].mxu0
    %v259 = vadd.f32 %v182, %v258
    %v260 = vpop.f32.mrb[0].mxu0
    %261 = vdwg.mxu0
    %v262 = vadd.f32 %v172, %v259
    %v263 = vld [vmem:[%s6] sm:$0x1]
    %v264 = vld [vmem:[%s7] sm:$0x1]
    %vm265 = vcmask 254976
    %v266 = vsel %vm265, %v262, 0.0
    %267 = vadd.xlane.f32.xlu0 %v266
    %v268 = vpop.xlane.xlu0 %267
    %v269 = vrcp.pop 32.0
    %v270 = vmul.f32 %v268, %v269
    %v271 = vsub.f32 %v262, %v270
    %v272 = vmul.f32 %v271, %v271
    %v273 = vsel %vm265, %v272, 0.0
    %274 = vadd.xlane.f32.xlu0 %v273
    %v275 = vpop.xlane.xlu0 %274
    %v276 = vmul.f32 %v275, %v269
    %v277 = vadd.f32 %v276, 1e-05
    %v278 = vrsqrt.pop %v277
    %v279 = vmul.f32 %v271, %v278
    %v281 = vlaneseq
    %v282 = vshrl.u32 %v281, 7
    %v283 = vsub.s32 0, %v282
    %v284 = vrot.slane %v263, %v283
    %v286 = vmul.f32 %v279, %v284
    %v288 = vlaneseq
    %v289 = vshrl.u32 %v288, 7
    %v290 = vsub.s32 0, %v289
    %v291 = vrot.slane %v264, %v290
    %v293 = vadd.f32 %v286, %v291
    %v294 = vld [vmem:[%s8] sm:$0xff]
    %v295 = vld [vmem:[%s8 + $0x8] sm:$0xff]
    %v296 = vld [vmem:[%s8 + $0x10] sm:$0xff]
    %v297 = vld [vmem:[%s8 + $0x18] sm:$0xff]
    %v298 = vld [vmem:[%s9] sm:$0x1]
    %v300 = vlaneseq
    %v301 = vshrl.u32 %v300, 7
    %v302 = vsub.s32 0, %v301
    %v303 = vrot.slane %v298, %v302
    %vm305 = vcmask 261120
    %v307 = vsel %vm305, %v293, 0
    %309 = vmatprep.subr.mxu0 0.0
    %310 = vmatpush1.msra.mxu0 %v294
    %311 = vmatprep.subr.mxu0 0.0
    %312 = vmatpush1.msra.mxu0 %v295
    %313 = vmatprep.subr.mxu0 0.0
    %314 = vmatpush1.msra.mxu0 %v296
    %315 = vmatprep.subr.mxu0 0.0
    %316 = vmatpush1.msra.mxu0 %v297
    %317 = vmatprep.subr.mxu0 0.0
    %318 = vmatpush1.msra.mxu0 0.0
    %319 = vmatprep.subr.mxu0 0.0
    %320 = vmatpush1.msra.mxu0 0.0
    %321 = vmatprep.subr.mxu0 0.0
    %322 = vmatpush1.msra.mxu0 0.0
    %323 = vmatprep.subr.mxu0 0.0
    %324 = vmatpush1.msra.mxu0 0.0
    %325 = vmatprep.subr.mxu0 0.0
    %326 = vmatpush1.msra.mxu0 0.0
    %327 = vmatprep.subr.mxu0 0.0
    %328 = vmatpush1.msra.mxu0 0.0
    %329 = vmatprep.subr.mxu0 0.0
    %330 = vmatpush1.msra.mxu0 0.0
    %331 = vmatprep.subr.mxu0 0.0
    %332 = vmatpush1.msra.mxu0 0.0
    %333 = vmatprep.subr.mxu0 0.0
    %334 = vmatpush1.msra.mxu0 0.0
    %335 = vmatprep.subr.mxu0 0.0
    %336 = vmatpush1.msra.mxu0 0.0
    %337 = vmatprep.subr.mxu0 0.0
    %338 = vmatpush1.msra.mxu0 0.0
    %339 = vmatprep.subr.mxu0 0.0
    %340 = vmatpush1.msra.mxu0 0.0
    %341 = vmatprep.subr.mxu0 0.0
    %342 = vmatpush1.msra.mxu0 0.0
    %343 = vmatprep.subr.mxu0 0.0
    %344 = vmatpush1.msra.mxu0 0.0
    %345 = vmatprep.subr.mxu0 0.0
    %346 = vmatpush1.msra.mxu0 0.0
    %347 = vmatprep.subr.mxu0 0.0
    %348 = vmatpush1.msra.mxu0 0.0
    %349 = vmatprep.subr.mxu0 0.0
    %350 = vmatpush1.msra.mxu0 0.0
    %351 = vmatprep.subr.mxu0 0.0
    %352 = vmatpush1.msra.mxu0 0.0
    %353 = vmatprep.subr.mxu0 0.0
    %354 = vmatpush1.msra.mxu0 0.0
    %355 = vmatprep.subr.mxu0 0.0
    %356 = vmatpush1.msra.mxu0 0.0
    %357 = vmatprep.subr.mxu0 0.0
    %358 = vmatpush1.msra.mxu0 0.0
    %359 = vmatprep.subr.mxu0 0.0
    %360 = vmatpush1.msra.mxu0 0.0
    %361 = vmatprep.subr.mxu0 0.0
    %362 = vmatpush1.msra.mxu0 0.0
    %363 = vmatprep.subr.mxu0 0.0
    %364 = vmatpush1.msra.mxu0 0.0
    %365 = vmatprep.subr.mxu0 0.0
    %366 = vmatpush1.msra.mxu0 0.0
    %367 = vmatprep.subr.mxu0 0.0
    %368 = vmatpush1.msra.mxu0 0.0
    %369 = vmatprep.subr.mxu0 0.0
    %370 = vmatpush1.msra.mxu0 0.0
    %371 = vmatprep.subr.mxu0 0.0
    %372 = vmatpush1.msra.mxu0 0.0
    %373 = vmatprep.mubr.f32.mxu0 0.0
    %374 = vmatmul.mubr.f32.gmra.mrb[0].mxu0 %v307
    %v375 = vpop.f32.mrb[0].mxu0
    %v376 = vadd.f32 %v303, %v375
    %v377 = vpop.f32.mrb[0].mxu0
    %378 = vdwg.mxu0
    %v379 = vmul.f32 %v376, 0.5
    %v380 = vtanh.pop %v379
    %v381 = vadd.f32 %v380, 1.0
    %v382 = vmul.f32 %v381, 0.5
    %v383 = vmul.f32 %v376, %v382
    %v384 = vld [vmem:[%s10] sm:$0xff]
    %v385 = vld [vmem:[%s10 + $0x8] sm:$0xff]
    %v386 = vld [vmem:[%s10 + $0x10] sm:$0xff]
    %v387 = vld [vmem:[%s10 + $0x18] sm:$0xff]
    %v388 = vld [vmem:[%s11] sm:$0x1]
    %v390 = vlaneseq
    %v391 = vshrl.u32 %v390, 7
    %v392 = vsub.s32 0, %v391
    %v393 = vrot.slane %v388, %v392
    %395 = vmatprep.subr.mxu0 0.0
    %396 = vmatpush1.msra.mxu0 %v384
    %397 = vmatprep.subr.mxu0 0.0
    %398 = vmatpush1.msra.mxu0 %v385
    %399 = vmatprep.subr.mxu0 0.0
    %400 = vmatpush1.msra.mxu0 %v386
    %401 = vmatprep.subr.mxu0 0.0
    %402 = vmatpush1.msra.mxu0 %v387
    %403 = vmatprep.subr.mxu0 0.0
    %404 = vmatpush1.msra.mxu0 0.0
    %405 = vmatprep.subr.mxu0 0.0
    %406 = vmatpush1.msra.mxu0 0.0
    %407 = vmatprep.subr.mxu0 0.0
    %408 = vmatpush1.msra.mxu0 0.0
    %409 = vmatprep.subr.mxu0 0.0
    %410 = vmatpush1.msra.mxu0 0.0
    %411 = vmatprep.subr.mxu0 0.0
    %412 = vmatpush1.msra.mxu0 0.0
    %413 = vmatprep.subr.mxu0 0.0
    %414 = vmatpush1.msra.mxu0 0.0
    %415 = vmatprep.subr.mxu0 0.0
    %416 = vmatpush1.msra.mxu0 0.0
    %417 = vmatprep.subr.mxu0 0.0
    %418 = vmatpush1.msra.mxu0 0.0
    %419 = vmatprep.subr.mxu0 0.0
    %420 = vmatpush1.msra.mxu0 0.0
    %421 = vmatprep.subr.mxu0 0.0
    %422 = vmatpush1.msra.mxu0 0.0
    %423 = vmatprep.subr.mxu0 0.0
    %424 = vmatpush1.msra.mxu0 0.0
    %425 = vmatprep.subr.mxu0 0.0
    %426 = vmatpush1.msra.mxu0 0.0
    %427 = vmatprep.subr.mxu0 0.0
    %428 = vmatpush1.msra.mxu0 0.0
    %429 = vmatprep.subr.mxu0 0.0
    %430 = vmatpush1.msra.mxu0 0.0
    %431 = vmatprep.subr.mxu0 0.0
    %432 = vmatpush1.msra.mxu0 0.0
    %433 = vmatprep.subr.mxu0 0.0
    %434 = vmatpush1.msra.mxu0 0.0
    %435 = vmatprep.subr.mxu0 0.0
    %436 = vmatpush1.msra.mxu0 0.0
    %437 = vmatprep.subr.mxu0 0.0
    %438 = vmatpush1.msra.mxu0 0.0
    %439 = vmatprep.subr.mxu0 0.0
    %440 = vmatpush1.msra.mxu0 0.0
    %441 = vmatprep.subr.mxu0 0.0
    %442 = vmatpush1.msra.mxu0 0.0
    %443 = vmatprep.subr.mxu0 0.0
    %444 = vmatpush1.msra.mxu0 0.0
    %445 = vmatprep.subr.mxu0 0.0
    %446 = vmatpush1.msra.mxu0 0.0
    %447 = vmatprep.subr.mxu0 0.0
    %448 = vmatpush1.msra.mxu0 0.0
    %449 = vmatprep.subr.mxu0 0.0
    %450 = vmatpush1.msra.mxu0 0.0
    %451 = vmatprep.subr.mxu0 0.0
    %452 = vmatpush1.msra.mxu0 0.0
    %453 = vmatprep.subr.mxu0 0.0
    %454 = vmatpush1.msra.mxu0 0.0
    %455 = vmatprep.subr.mxu0 0.0
    %456 = vmatpush1.msra.mxu0 0.0
    %457 = vmatprep.subr.mxu0 0.0
    %458 = vmatpush1.msra.mxu0 0.0
    %459 = vmatprep.mubr.f32.mxu0 0.0
    %460 = vmatmul.mubr.f32.gmra.mrb[0].mxu0 %v307
    %v461 = vpop.f32.mrb[0].mxu0
    %v462 = vadd.f32 %v393, %v461
    %v463 = vpop.f32.mrb[0].mxu0
    %464 = vdwg.mxu0
    %v465 = vmul.f32 %v383, %v462
    %v466 = vld [vmem:[%s12] sm:$0xff]
    %v467 = vld [vmem:[%s12 + $0x8] sm:$0xff]
    %v468 = vld [vmem:[%s12 + $0x10] sm:$0xff]
    %v469 = vld [vmem:[%s12 + $0x18] sm:$0xff]
    %v470 = vld [vmem:[%s13] sm:$0x1]
    %v472 = vlaneseq
    %v473 = vshrl.u32 %v472, 7
    %v474 = vsub.s32 0, %v473
    %v475 = vrot.slane %v470, %v474
    %v478 = vsel %vm305, %v465, 0
    %480 = vmatprep.subr.mxu0 0.0
    %481 = vmatpush1.msra.mxu0 %v466
    %482 = vmatprep.subr.mxu0 0.0
    %483 = vmatpush1.msra.mxu0 %v467
    %484 = vmatprep.subr.mxu0 0.0
    %485 = vmatpush1.msra.mxu0 %v468
    %486 = vmatprep.subr.mxu0 0.0
    %487 = vmatpush1.msra.mxu0 %v469
    %488 = vmatprep.subr.mxu0 0.0
    %489 = vmatpush1.msra.mxu0 0.0
    %490 = vmatprep.subr.mxu0 0.0
    %491 = vmatpush1.msra.mxu0 0.0
    %492 = vmatprep.subr.mxu0 0.0
    %493 = vmatpush1.msra.mxu0 0.0
    %494 = vmatprep.subr.mxu0 0.0
    %495 = vmatpush1.msra.mxu0 0.0
    %496 = vmatprep.subr.mxu0 0.0
    %497 = vmatpush1.msra.mxu0 0.0
    %498 = vmatprep.subr.mxu0 0.0
    %499 = vmatpush1.msra.mxu0 0.0
    %500 = vmatprep.subr.mxu0 0.0
    %501 = vmatpush1.msra.mxu0 0.0
    %502 = vmatprep.subr.mxu0 0.0
    %503 = vmatpush1.msra.mxu0 0.0
    %504 = vmatprep.subr.mxu0 0.0
    %505 = vmatpush1.msra.mxu0 0.0
    %506 = vmatprep.subr.mxu0 0.0
    %507 = vmatpush1.msra.mxu0 0.0
    %508 = vmatprep.subr.mxu0 0.0
    %509 = vmatpush1.msra.mxu0 0.0
    %510 = vmatprep.subr.mxu0 0.0
    %511 = vmatpush1.msra.mxu0 0.0
    %512 = vmatprep.subr.mxu0 0.0
    %513 = vmatpush1.msra.mxu0 0.0
    %514 = vmatprep.subr.mxu0 0.0
    %515 = vmatpush1.msra.mxu0 0.0
    %516 = vmatprep.subr.mxu0 0.0
    %517 = vmatpush1.msra.mxu0 0.0
    %518 = vmatprep.subr.mxu0 0.0
    %519 = vmatpush1.msra.mxu0 0.0
    %520 = vmatprep.subr.mxu0 0.0
    %521 = vmatpush1.msra.mxu0 0.0
    %522 = vmatprep.subr.mxu0 0.0
    %523 = vmatpush1.msra.mxu0 0.0
    %524 = vmatprep.subr.mxu0 0.0
    %525 = vmatpush1.msra.mxu0 0.0
    %526 = vmatprep.subr.mxu0 0.0
    %527 = vmatpush1.msra.mxu0 0.0
    %528 = vmatprep.subr.mxu0 0.0
    %529 = vmatpush1.msra.mxu0 0.0
    %530 = vmatprep.subr.mxu0 0.0
    %531 = vmatpush1.msra.mxu0 0.0
    %532 = vmatprep.subr.mxu0 0.0
    %533 = vmatpush1.msra.mxu0 0.0
    %534 = vmatprep.subr.mxu0 0.0
    %535 = vmatpush1.msra.mxu0 0.0
    %536 = vmatprep.subr.mxu0 0.0
    %537 = vmatpush1.msra.mxu0 0.0
    %538 = vmatprep.subr.mxu0 0.0
    %539 = vmatpush1.msra.mxu0 0.0
    %540 = vmatprep.subr.mxu0 0.0
    %541 = vmatpush1.msra.mxu0 0.0
    %542 = vmatprep.subr.mxu0 0.0
    %543 = vmatpush1.msra.mxu0 0.0
    %544 = vmatprep.mubr.f32.mxu0 0.0
    %545 = vmatmul.mubr.f32.gmra.mrb[0].mxu0 %v478
    %v546 = vpop.f32.mrb[0].mxu0
    %v547 = vadd.f32 %v475, %v546
    %v548 = vpop.f32.mrb[0].mxu0
    %549 = vdwg.mxu0
    %v550 = vld [vmem:[%s14] sm:$0xff]
    %v551 = vld [vmem:[%s14 + $0x8] sm:$0xff]
    %v552 = vld [vmem:[%s14 + $0x10] sm:$0xff]
    %v553 = vld [vmem:[%s14 + $0x18] sm:$0xff]
    %v554 = vld [vmem:[%s15] sm:$0x1]
    %v556 = vlaneseq
    %v557 = vshrl.u32 %v556, 7
    %v558 = vsub.s32 0, %v557
    %v559 = vrot.slane %v554, %v558
    %v562 = vsel %vm305, %v547, 0
    %564 = vmatprep.subr.mxu0 0.0
    %565 = vmatpush1.msra.mxu0 %v550
    %566 = vmatprep.subr.mxu0 0.0
    %567 = vmatpush1.msra.mxu0 %v551
    %568 = vmatprep.subr.mxu0 0.0
    %569 = vmatpush1.msra.mxu0 %v552
    %570 = vmatprep.subr.mxu0 0.0
    %571 = vmatpush1.msra.mxu0 %v553
    %572 = vmatprep.subr.mxu0 0.0
    %573 = vmatpush1.msra.mxu0 0.0
    %574 = vmatprep.subr.mxu0 0.0
    %575 = vmatpush1.msra.mxu0 0.0
    %576 = vmatprep.subr.mxu0 0.0
    %577 = vmatpush1.msra.mxu0 0.0
    %578 = vmatprep.subr.mxu0 0.0
    %579 = vmatpush1.msra.mxu0 0.0
    %580 = vmatprep.subr.mxu0 0.0
    %581 = vmatpush1.msra.mxu0 0.0
    %582 = vmatprep.subr.mxu0 0.0
    %583 = vmatpush1.msra.mxu0 0.0
    %584 = vmatprep.subr.mxu0 0.0
    %585 = vmatpush1.msra.mxu0 0.0
    %586 = vmatprep.subr.mxu0 0.0
    %587 = vmatpush1.msra.mxu0 0.0
    %588 = vmatprep.subr.mxu0 0.0
    %589 = vmatpush1.msra.mxu0 0.0
    %590 = vmatprep.subr.mxu0 0.0
    %591 = vmatpush1.msra.mxu0 0.0
    %592 = vmatprep.subr.mxu0 0.0
    %593 = vmatpush1.msra.mxu0 0.0
    %594 = vmatprep.subr.mxu0 0.0
    %595 = vmatpush1.msra.mxu0 0.0
    %596 = vmatprep.subr.mxu0 0.0
    %597 = vmatpush1.msra.mxu0 0.0
    %598 = vmatprep.subr.mxu0 0.0
    %599 = vmatpush1.msra.mxu0 0.0
    %600 = vmatprep.subr.mxu0 0.0
    %601 = vmatpush1.msra.mxu0 0.0
    %602 = vmatprep.subr.mxu0 0.0
    %603 = vmatpush1.msra.mxu0 0.0
    %604 = vmatprep.subr.mxu0 0.0
    %605 = vmatpush1.msra.mxu0 0.0
    %606 = vmatprep.subr.mxu0 0.0
    %607 = vmatpush1.msra.mxu0 0.0
    %608 = vmatprep.subr.mxu0 0.0
    %609 = vmatpush1.msra.mxu0 0.0
    %610 = vmatprep.subr.mxu0 0.0
    %611 = vmatpush1.msra.mxu0 0.0
    %612 = vmatprep.subr.mxu0 0.0
    %613 = vmatpush1.msra.mxu0 0.0
    %614 = vmatprep.subr.mxu0 0.0
    %615 = vmatpush1.msra.mxu0 0.0
    %616 = vmatprep.subr.mxu0 0.0
    %617 = vmatpush1.msra.mxu0 0.0
    %618 = vmatprep.subr.mxu0 0.0
    %619 = vmatpush1.msra.mxu0 0.0
    %620 = vmatprep.subr.mxu0 0.0
    %621 = vmatpush1.msra.mxu0 0.0
    %622 = vmatprep.subr.mxu0 0.0
    %623 = vmatpush1.msra.mxu0 0.0
    %624 = vmatprep.subr.mxu0 0.0
    %625 = vmatpush1.msra.mxu0 0.0
    %626 = vmatprep.subr.mxu0 0.0
    %627 = vmatpush1.msra.mxu0 0.0
    %628 = vmatprep.mubr.f32.mxu0 0.0
    %629 = vmatmul.mubr.f32.gmra.mrb[0].mxu0 %v562
    %v630 = vpop.f32.mrb[0].mxu0
    %v631 = vadd.f32 %v559, %v630
    %v632 = vpop.f32.mrb[0].mxu0
    %633 = vdwg.mxu0
    %vm634 = vcmask 123904
    %v635 = vsel %vm634, %v631, -inf
    %636 = vmax.xlane.f32.xlu0 %v635
    %v637 = vpop.xlane.xlu0 %636
    %v638 = vsub.f32 %v631, %v637
    %v639 = vmul.f32 %v638, 1.442695
    %v640 = vpow.pop %v639
    %v641 = vsel %vm634, %v640, 0.0
    %642 = vadd.xlane.f32.xlu0 %v641
    %v643 = vpop.xlane.xlu0 %642
    %v644 = vrcp.pop %v643
    %v645 = vmul.f32 %v640, %v644
    %646 = vst.msk [vmem:[#allocation2] sm:$0x3] %vm634, %v645
    // Predicated region
    $region66: #{my_model_forward.7} parent=1 // pred_check
      _
    $region67: #{my_model_forward.7} parent=1 // pred_check_branch
      %648 = sbr.rel (0) target = $region69
    $region68: #{my_model_forward.7} parent=1 // pred_region
      %s650 = ssub.s32 32, 32
      %651 = vsyncadd [#allocation3], %s650
      %s653 = sshll.u32 [#allocation2], 4
      %s654 = int_to_ptr.vmem [resolvable:$true] %s653
      %656 = dma.vmem_to_hbm [thread:$0]  %s654, 32, %s16, [#allocation3]
    $region69: #{my_model_forward.7} parent=1 // pred_fallthru
      _
    // Predicated region
    $region70: #{my_model_forward.7} parent=1 // pred_check
      _
    $region71: #{my_model_forward.7} parent=1 // pred_check_branch
      %658 = sbr.rel (0) target = $region73
    $region72: #{my_model_forward.7} parent=1 // pred_region
      %659 = dma.done [#allocation3], 32
    $region73: #{my_model_forward.7} parent=1 // pred_fallthru
      _
    %660 = vsyncpa [#allocation3], 1

// kernel: my_model_forward.5
$region0: #{my_model_forward.5}
  #allocation0 [shape = 'u32[]', space=smem, size = 0x4, offset = 0x4, fixed_abs, tag = 'smem constant byte address 0x4 - core index']
  #allocation1 [shape = 'u32[144,128]{1,0:T(1,128)}', space=vmem, size = 0x12000, scoped, tag = 'internal scratch']
  #allocation2 [shape = 'f32[16,32]{1,0:T(8,128)}', space=vmem, size = 0x2000, scoped, tag = 'scratch operand']
  %s0 = inlined_call_operand.vmem [shape: f32[16,32], index: 0, kind: input, shape index: {}]
  %s1 = inlined_call_operand.vmem [shape: f32[16,16], index: 1, kind: input, shape index: {}]
  %s2 = inlined_call_operand.vmem [shape: f32[32,96], index: 2, kind: input, shape index: {}]
  %s3 = inlined_call_operand.vmem [shape: f32[1,96], index: 3, kind: input, shape index: {}]
  %s4 = inlined_call_operand.vmem [shape: f32[32,32], index: 4, kind: input, shape index: {}]
  %s5 = inlined_call_operand.vmem [shape: f32[1,32], index: 5, kind: input, shape index: {}]
  %s6 = inlined_call_operand.vmem [shape: f32[1,32], index: 6, kind: input, shape index: {}]
  %s7 = inlined_call_operand.vmem [shape: f32[1,32], index: 7, kind: input, shape index: {}]
  %s8 = inlined_call_operand.vmem [shape: f32[32,64], index: 8, kind: input, shape index: {}]
  %s9 = inlined_call_operand.vmem [shape: f32[1,64], index: 9, kind: input, shape index: {}]
  %s10 = inlined_call_operand.vmem [shape: f32[64,32], index: 10, kind: input, shape index: {}]
  %s11 = inlined_call_operand.vmem [shape: f32[1,32], index: 11, kind: input, shape index: {}]
  %s12 = inlined_call_operand.vmem [shape: f32[1,32], index: 12, kind: input, shape index: {}]
  %s13 = inlined_call_operand.vmem [shape: f32[1,32], index: 13, kind: input, shape index: {}]
  %s14 = inlined_call_operand.vmem [shape: f32[16,32], index: 14, kind: output, shape index: {}]
  %s15 = sld [smem:[#allocation0]]
  $region66: #{my_model_forward.5} parent=0
    _
  %s17 = ssub.s32 1, %s15
  %s18 = scalar_select 0, %s17, %s15
  // Predicated region
  $region2: #{my_model_forward.5} parent=0 // pred_check
    _
  $region3: #{my_model_forward.5} parent=0 // pred_check_branch
    %20 = sbr.rel (0) target = $region5
  $region4: #{my_model_forward.5} parent=0 // pred_region
    _
  $region5: #{my_model_forward.5} parent=0 // pred_fallthru
    _
  // Predicated region
  $region6: #{my_model_forward.5} parent=0 // pred_check
    _
  $region7: #{my_model_forward.5} parent=0 // pred_check_branch
    %22 = sbr.rel (0) target = $region9
  $region8: #{my_model_forward.5} parent=0 // pred_region
    _
  $region9: #{my_model_forward.5} parent=0 // pred_fallthru
    _
  // Predicated region
  $region10: #{my_model_forward.5} parent=0 // pred_check
    _
  $region11: #{my_model_forward.5} parent=0 // pred_check_branch
    %24 = sbr.rel (0) target = $region13
  $region12: #{my_model_forward.5} parent=0 // pred_region
    _
  $region13: #{my_model_forward.5} parent=0 // pred_fallthru
    _
  // Predicated region
  $region14: #{my_model_forward.5} parent=0 // pred_check
    _
  $region15: #{my_model_forward.5} parent=0 // pred_check_branch
    %26 = sbr.rel (0) target = $region17
  $region16: #{my_model_forward.5} parent=0 // pred_region
    _
  $region17: #{my_model_forward.5} parent=0 // pred_fallthru
    _
  // Predicated region
  $region18: #{my_model_forward.5} parent=0 // pred_check
    _
  $region19: #{my_model_forward.5} parent=0 // pred_check_branch
    %28 = sbr.rel (0) target = $region21
  $region20: #{my_model_forward.5} parent=0 // pred_region
    _
  $region21: #{my_model_forward.5} parent=0 // pred_fallthru
    _
  // Predicated region
  $region22: #{my_model_forward.5} parent=0 // pred_check
    _
  $region23: #{my_model_forward.5} parent=0 // pred_check_branch
    %30 = sbr.rel (0) target = $region25
  $region24: #{my_model_forward.5} parent=0 // pred_region
    _
  $region25: #{my_model_forward.5} parent=0 // pred_fallthru
    _
  // Predicated region
  $region26: #{my_model_forward.5} parent=0 // pred_check
    _
  $region27: #{my_model_forward.5} parent=0 // pred_check_branch
    %32 = sbr.rel (0) target = $region29
  $region28: #{my_model_forward.5} parent=0 // pred_region
    _
  $region29: #{my_model_forward.5} parent=0 // pred_fallthru
    _
  // Predicated region
  $region30: #{my_model_forward.5} parent=0 // pred_check
    _
  $region31: #{my_model_forward.5} parent=0 // pred_check_branch
    %34 = sbr.rel (0) target = $region33
  $region32: #{my_model_forward.5} parent=0 // pred_region
    _
  $region33: #{my_model_forward.5} parent=0 // pred_fallthru
    _
  // Predicated region
  $region34: #{my_model_forward.5} parent=0 // pred_check
    _
  $region35: #{my_model_forward.5} parent=0 // pred_check_branch
    %36 = sbr.rel (0) target = $region37
  $region36: #{my_model_forward.5} parent=0 // pred_region
    _
  $region37: #{my_model_forward.5} parent=0 // pred_fallthru
    _
  // Predicated region
  $region38: #{my_model_forward.5} parent=0 // pred_check
    _
  $region39: #{my_model_forward.5} parent=0 // pred_check_branch
    %38 = sbr.rel (0) target = $region41
  $region40: #{my_model_forward.5} parent=0 // pred_region
    _
  $region41: #{my_model_forward.5} parent=0 // pred_fallthru
    _
  // Predicated region
  $region42: #{my_model_forward.5} parent=0 // pred_check
    _
  $region43: #{my_model_forward.5} parent=0 // pred_check_branch
    %40 = sbr.rel (0) target = $region45
  $region44: #{my_model_forward.5} parent=0 // pred_region
    _
  $region45: #{my_model_forward.5} parent=0 // pred_fallthru
    _
  // Predicated region
  $region46: #{my_model_forward.5} parent=0 // pred_check
    _
  $region47: #{my_model_forward.5} parent=0 // pred_check_branch
    %42 = sbr.rel (0) target = $region49
  $region48: #{my_model_forward.5} parent=0 // pred_region
    _
  $region49: #{my_model_forward.5} parent=0 // pred_fallthru
    _
  // Predicated region
  $region50: #{my_model_forward.5} parent=0 // pred_check
    _
  $region51: #{my_model_forward.5} parent=0 // pred_check_branch
    %44 = sbr.rel (0) target = $region53
  $region52: #{my_model_forward.5} parent=0 // pred_region
    _
  $region53: #{my_model_forward.5} parent=0 // pred_fallthru
    _
  // Predicated region
  $region54: #{my_model_forward.5} parent=0 // pred_check
    _
  $region55: #{my_model_forward.5} parent=0 // pred_check_branch
    %46 = sbr.rel (0) target = $region57
  $region56: #{my_model_forward.5} parent=0 // pred_region
    _
  $region57: #{my_model_forward.5} parent=0 // pred_fallthru
    _
  %v47 = vld [vmem:[%s0] sm:$0xff]
  %v48 = vld [vmem:[%s0 + $0x8] sm:$0xff]
  %v49 = vld [vmem:[%s2] sm:$0xff]
  %v50 = vld [vmem:[%s2 + $0x8] sm:$0xff]
  %v51 = vld [vmem:[%s2 + $0x10] sm:$0xff]
  %v52 = vld [vmem:[%s2 + $0x18] sm:$0xff]
  %v53 = vld [vmem:[%s3] sm:$0x1]
  %v55 = vlaneseq
  %v56 = vshrl.u32 %v55, 7
  %v57 = vsub.s32 0, %v56
  %v58 = vrot.slane %v53, %v57
  %vm60 = vcmask 261120
  %v62 = vsel %vm60, %v47, 0
  %v65 = vsel %vm60, %v48, 0
  %67 = vmatprep.subr.mxu0 0.0
  %68 = vmatpush1.msra.mxu0 %v49
  %69 = vmatprep.subr.mxu0 0.0
  %70 = vmatpush1.msra.mxu0 %v50
  %71 = vmatprep.subr.mxu0 0.0
  %72 = vmatpush1.msra.mxu0 %v51
  %73 = vmatprep.subr.mxu0 0.0
  %74 = vmatpush1.msra.mxu0 %v52
  %75 = vmatprep.subr.mxu0 0.0
  %76 = vmatpush1.msra.mxu0 0.0
  %77 = vmatprep.subr.mxu0 0.0
  %78 = vmatpush1.msra.mxu0 0.0
  %79 = vmatprep.subr.mxu0 0.0
  %80 = vmatpush1.msra.mxu0 0.0
  %81 = vmatprep.subr.mxu0 0.0
  %82 = vmatpush1.msra.mxu0 0.0
  %83 = vmatprep.subr.mxu0 0.0
  %84 = vmatpush1.msra.mxu0 0.0
  %85 = vmatprep.subr.mxu0 0.0
  %86 = vmatpush1.msra.mxu0 0.0
  %87 = vmatprep.subr.mxu0 0.0
  %88 = vmatpush1.msra.mxu0 0.0
  %89 = vmatprep.subr.mxu0 0.0
  %90 = vmatpush1.msra.mxu0 0.0
  %91 = vmatprep.subr.mxu0 0.0
  %92 = vmatpush1.msra.mxu0 0.0
  %93 = vmatprep.subr.mxu0 0.0
  %94 = vmatpush1.msra.mxu0 0.0
  %95 = vmatprep.subr.mxu0 0.0
  %96 = vmatpush1.msra.mxu0 0.0
  %97 = vmatprep.subr.mxu0 0.0
  %98 = vmatpush1.msra.mxu0 0.0
  %99 = vmatprep.subr.mxu0 0.0
  %100 = vmatpush1.msra.mxu0 0.0
  %101 = vmatprep.subr.mxu0 0.0
  %102 = vmatpush1.msra.mxu0 0.0
  %103 = vmatprep.subr.mxu0 0.0
  %104 = vmatpush1.msra.mxu0 0.0
  %105 = vmatprep.subr.mxu0 0.0
  %106 = vmatpush1.msra.mxu0 0.0
  %107 = vmatprep.subr.mxu0 0.0
  %108 = vmatpush1.msra.mxu0 0.0
  %109 = vmatprep.subr.mxu0 0.0
  %110 = vmatpush1.msra.mxu0 0.0
  %111 = vmatprep.subr.mxu0 0.0
  %112 = vmatpush1.msra.mxu0 0.0
  %113 = vmatprep.subr.mxu0 0.0
  %114 = vmatpush1.msra.mxu0 0.0
  %115 = vmatprep.subr.mxu0 0.0
  %116 = vmatpush1.msra.mxu0 0.0
  %117 = vmatprep.subr.mxu0 0.0
  %118 = vmatpush1.msra.mxu0 0.0
  %119 = vmatprep.subr.mxu0 0.0
  %120 = vmatpush1.msra.mxu0 0.0
  %121 = vmatprep.subr.mxu0 0.0
  %122 = vmatpush1.msra.mxu0 0.0
  %123 = vmatprep.subr.mxu0 0.0
  %124 = vmatpush1.msra.mxu0 0.0
  %125 = vmatprep.subr.mxu0 0.0
  %126 = vmatpush1.msra.mxu0 0.0
  %127 = vmatprep.subr.mxu0 0.0
  %128 = vmatpush1.msra.mxu0 0.0
  %129 = vmatprep.subr.mxu0 0.0
  %130 = vmatpush1.msra.mxu0 0.0
  %131 = vmatprep.mubr.f32.mxu0 0.0
  %132 = vmatmul.mubr.f32.gmra.mrb[0].mxu0 %v62
  %v133 = vpop.f32.mrb[0].mxu0
  %v134 = vadd.f32 %v58, %v133
  %v135 = vpop.f32.mrb[0].mxu0
  %136 = vmatprep.mubr.f32.mxu0 0.0
  %137 = vmatmul.mubr.f32.gmra.mrb[0].mxu0 %v65
  %v138 = vpop.f32.mrb[0].mxu0
  %v139 = vadd.f32 %v58, %v138
  %v140 = vpop.f32.mrb[0].mxu0
  %141 = vdwg.mxu0
  %v142 = vld [vmem:[%s1] sm:$0xff]
  %v143 = vld [vmem:[%s1 + $0x8] sm:$0xff]
  %v144 = vmul.f32 %v134, 0.35355338
  %v145 = vmul.f32 %v139, 0.35355338
  %148 = vrot.lane.b32.xlu0 %v134, 96
  %v149 = vpop.permute.xlu0 %148
  %150 = vrot.lane.b32.xlu0 %v139, 96
  %v151 = vpop.permute.xlu0 %150
  %vm152 = vcmask 64512
  %v154 = vsel %vm152, %v144, 0
  %v157 = vsel %vm152, %v145, 0
  %v159 = vsel %vm152, %v149, 0
  %v161 = vsel %vm152, %v151, 0
  %163 = vmatprep.subr.mxu0 0.0
  %164 = vmatpush1.xpose.msra.mxu0 %v159
  %165 = vmatprep.subr.mxu0 0.0
  %166 = vmatpush1.xpose.msra.mxu0 %v161
  %167 = vmatprep.subr.mxu0 0.0
  %168 = vmatpush1.xpose.msra.mxu0 0.0
  %169 = vmatprep.subr.mxu0 0.0
  %170 = vmatpush1.xpose.msra.mxu0 0.0
  %171 = vmatprep.subr.mxu0 0.0
  %172 = vmatpush1.xpose.msra.mxu0 0.0
  %173 = vmatprep.subr.mxu0 0.0
  %174 = vmatpush1.xpose.msra.mxu0 0.0
  %175 = vmatprep.subr.mxu0 0.0
  %176 = vmatpush1.xpose.msra.mxu0 0.0
  %177 = vmatprep.subr.mxu0 0.0
  %178 = vmatpush1.xpose.msra.mxu0 0.0
  %179 = vmatprep.subr.mxu0 0.0
  %180 = vmatpush1.xpose.msra.mxu0 0.0
  %181 = vmatprep.subr.mxu0 0.0
  %182 = vmatpush1.xpose.msra.mxu0 0.0
  %183 = vmatprep.subr.mxu0 0.0
  %184 = vmatpush1.xpose.msra.mxu0 0.0
  %185 = vmatprep.subr.mxu0 0.0
  %186 = vmatpush1.xpose.msra.mxu0 0.0
  %187 = vmatprep.subr.mxu0 0.0
  %188 = vmatpush1.xpose.msra.mxu0 0.0
  %189 = vmatprep.subr.mxu0 0.0
  %190 = vmatpush1.xpose.msra.mxu0 0.0
  %191 = vmatprep.subr.mxu0 0.0
  %192 = vmatpush1.xpose.msra.mxu0 0.0
  %193 = vmatprep.subr.mxu0 0.0
  %194 = vmatpush1.xpose.msra.mxu0 0.0
  %195 = vmatprep.subr.mxu0 0.0
  %196 = vmatpush1.xpose.msra.mxu0 0.0
  %197 = vmatprep.subr.mxu0 0.0
  %198 = vmatpush1.xpose.msra.mxu0 0.0
  %199 = vmatprep.subr.mxu0 0.0
  %200 = vmatpush1.xpose.msra.mxu0 0.0
  %201 = vmatprep.subr.mxu0 0.0
  %202 = vmatpush1.xpose.msra.mxu0 0.0
  %203 = vmatprep.subr.mxu0 0.0
  %204 = vmatpush1.xpose.msra.mxu0 0.0
  %205 = vmatprep.subr.mxu0 0.0
  %206 = vmatpush1.xpose.msra.mxu0 0.0
  %207 = vmatprep.subr.mxu0 0.0
  %208 = vmatpush1.xpose.msra.mxu0 0.0
  %209 = vmatprep.subr.mxu0 0.0
  %210 = vmatpush1.xpose.msra.mxu0 0.0
  %211 = vmatprep.subr.mxu0 0.0
  %212 = vmatpush1.xpose.msra.mxu0 0.0
  %213 = vmatprep.subr.mxu0 0.0
  %214 = vmatpush1.xpose.msra.mxu0 0.0
  %215 = vmatprep.subr.mxu0 0.0
  %216 = vmatpush1.xpose.msra.mxu0 0.0
  %217 = vmatprep.subr.mxu0 0.0
  %218 = vmatpush1.xpose.msra.mxu0 0.0
  %219 = vmatprep.subr.mxu0 0.0
  %220 = vmatpush1.xpose.msra.mxu0 0.0
  %221 = vmatprep.subr.mxu0 0.0
  %222 = vmatpush1.xpose.msra.mxu0 0.0
  %223 = vmatprep.subr.mxu0 0.0
  %224 = vmatpush1.xpose.msra.mxu0 0.0
  %225 = vmatprep.subr.mxu0 0.0
  %226 = vmatpush1.xpose.msra.mxu0 0.0
  %227 = vmatprep.mubr.f32.mxu0 0.0
  %228 = vmatmul.mubr.f32.gmra.mrb[0].mxu0 %v154
  %v229 = vpop.f32.mrb[0].mxu0
  %v230 = vadd.f32 %v142, %v229
  %v231 = vpop.f32.mrb[0].mxu0
  %232 = vmatprep.mubr.f32.mxu0 0.0
  %233 = vmatmul.mubr.f32.gmra.mrb[0].mxu0 %v157
  %v234 = vpop.f32.mrb[0].mxu0
  %v235 = vadd.f32 %v143, %v234
  %v236 = vpop.f32.mrb[0].mxu0
  %237 = vdwg.mxu0
  %vm238 = vcmask 130048
  %v239 = vsel %vm238, %v230, -inf
  %240 = vmax.xlane.f32.xlu0 %v239
  %v241 = vpop.xlane.xlu0 %240
  %v242 = vsel %vm238, %v235, -inf
  %243 = vmax.xlane.f32.xlu0 %v242
  %v244 = vpop.xlane.xlu0 %243
  %v245 = vsub.f32 %v230, %v241
  %v246 = vsub.f32 %v235, %v244
  %v247 = vmul.f32 %v245, 1.442695
  %v248 = vpow.pop %v247
  %v249 = vmul.f32 %v246, 1.442695
  %v250 = vpow.pop %v249
  %v251 = vsel %vm238, %v248, 0.0
  %252 = vadd.xlane.f32.xlu0 %v251
  %v253 = vpop.xlane.xlu0 %252
  %v254 = vsel %vm238, %v250, 0.0
  %255 = vadd.xlane.f32.xlu0 %v254
  %v256 = vpop.xlane.xlu0 %255
  %v257 = vrcp.pop %v253
  %v258 = vrcp.pop %v256
  %v259 = vmul.f32 %v248, %v257
  %v260 = vmul.f32 %v250, %v258
  %261 = vrot.lane.b32.xlu0 %v134, 64
  %v262 = vpop.permute.xlu0 %261
  %263 = vrot.lane.b32.xlu0 %v139, 64
  %v264 = vpop.permute.xlu0 %263
  %v268 = vsel %vm238, %v259, 0
  %v271 = vsel %vm238, %v260, 0
  %273 = vmatprep.subr.mxu0 0.0
  %274 = vmatpush1.msra.mxu0 %v262
  %275 = vmatprep.subr.mxu0 0.0
  %276 = vmatpush1.msra.mxu0 %v264
  %277 = vmatprep.subr.mxu0 0.0
  %278 = vmatpush1.msra.mxu0 0.0
  %279 = vmatprep.subr.mxu0 0.0
  %280 = vmatpush1.msra.mxu0 0.0
  %281 = vmatprep.subr.mxu0 0.0
  %282 = vmatpush1.msra.mxu0 0.0
  %283 = vmatprep.subr.mxu0 0.0
  %284 = vmatpush1.msra.mxu0 0.0
  %285 = vmatprep.subr.mxu0 0.0
  %286 = vmatpush1.msra.mxu0 0.0
  %287 = vmatprep.subr.mxu0 0.0
  %288 = vmatpush1.msra.mxu0 0.0
  %289 = vmatprep.subr.mxu0 0.0
  %290 = vmatpush1.msra.mxu0 0.0
  %291 = vmatprep.subr.mxu0 0.0
  %292 = vmatpush1.msra.mxu0 0.0
  %293 = vmatprep.subr.mxu0 0.0
  %294 = vmatpush1.msra.mxu0 0.0
  %295 = vmatprep.subr.mxu0 0.0
  %296 = vmatpush1.msra.mxu0 0.0
  %297 = vmatprep.subr.mxu0 0.0
  %298 = vmatpush1.msra.mxu0 0.0
  %299 = vmatprep.subr.mxu0 0.0
  %300 = vmatpush1.msra.mxu0 0.0
  %301 = vmatprep.subr.mxu0 0.0
  %302 = vmatpush1.msra.mxu0 0.0
  %303 = vmatprep.subr.mxu0 0.0
  %304 = vmatpush1.msra.mxu0 0.0
  %305 = vmatprep.subr.mxu0 0.0
  %306 = vmatpush1.msra.mxu0 0.0
  %307 = vmatprep.subr.mxu0 0.0
  %308 = vmatpush1.msra.mxu0 0.0
  %309 = vmatprep.subr.mxu0 0.0
  %310 = vmatpush1.msra.mxu0 0.0
  %311 = vmatprep.subr.mxu0 0.0
  %312 = vmatpush1.msra.mxu0 0.0
  %313 = vmatprep.subr.mxu0 0.0
  %314 = vmatpush1.msra.mxu0 0.0
  %315 = vmatprep.subr.mxu0 0.0
  %316 = vmatpush1.msra.mxu0 0.0
  %317 = vmatprep.subr.mxu0 0.0
  %318 = vmatpush1.msra.mxu0 0.0
  %319 = vmatprep.subr.mxu0 0.0
  %320 = vmatpush1.msra.mxu0 0.0
  %321 = vmatprep.subr.mxu0 0.0
  %322 = vmatpush1.msra.mxu0 0.0
  %323 = vmatprep.subr.mxu0 0.0
  %324 = vmatpush1.msra.mxu0 0.0
  %325 = vmatprep.subr.mxu0 0.0
  %326 = vmatpush1.msra.mxu0 0.0
  %327 = vmatprep.subr.mxu0 0.0
  %328 = vmatpush1.msra.mxu0 0.0
  %329 = vmatprep.subr.mxu0 0.0
  %330 = vmatpush1.msra.mxu0 0.0
  %331 = vmatprep.subr.mxu0 0.0
  %332 = vmatpush1.msra.mxu0 0.0
  %333 = vmatprep.subr.mxu0 0.0
  %334 = vmatpush1.msra.mxu0 0.0
  %335 = vmatprep.subr.mxu0 0.0
  %336 = vmatpush1.msra.mxu0 0.0
  %337 = vmatprep.mubr.f32.mxu0 0.0
  %338 = vmatmul.mubr.f32.gmra.mrb[0].mxu0 %v268
  %v339 = vpop.f32.mrb[0].mxu0
  %v340 = vadd.f32 0.0, %v339
  %v341 = vpop.f32.mrb[0].mxu0
  %342 = vmatprep.mubr.f32.mxu0 0.0
  %343 = vmatmul.mubr.f32.gmra.mrb[0].mxu0 %v271
  %v344 = vpop.f32.mrb[0].mxu0
  %v345 = vadd.f32 0.0, %v344
  %v346 = vpop.f32.mrb[0].mxu0
  %347 = vdwg.mxu0
  %348 = vst.msk [vmem:[#allocation2] sm:$0xff] %vm152, %v340
  %349 = vst.msk [vmem:[#allocation2 + $0x8] sm:$0xff] %vm152, %v345
  %350 = vrot.lane.b32.xlu0 %v144, 120
  %v351 = vpop.permute.xlu0 %350
  %352 = vrot.lane.b32.xlu0 %v145, 120
  %v353 = vpop.permute.xlu0 %352
  %354 = vrot.lane.b32.xlu0 %v134, 88
  %v355 = vpop.permute.xlu0 %354
  %356 = vrot.lane.b32.xlu0 %v139, 88
  %v357 = vpop.permute.xlu0 %356
  %v358 = vsel %vm152, %v351, 0
  %v360 = vsel %vm152, %v353, 0
  %v362 = vsel %vm152, %v355, 0
  %v364 = vsel %vm152, %v357, 0
  %366 = vmatprep.subr.mxu0 0.0
  %367 = vmatpush1.xpose.msra.mxu0 %v362
  %368 = vmatprep.subr.mxu0 0.0
  %369 = vmatpush1.xpose.msra.mxu0 %v364
  %370 = vmatprep.subr.mxu0 0.0
  %371 = vmatpush1.xpose.msra.mxu0 0.0
  %372 = vmatprep.subr.mxu0 0.0
  %373 = vmatpush1.xpose.msra.mxu0 0.0
  %374 = vmatprep.subr.mxu0 0.0
  %375 = vmatpush1.xpose.msra.mxu0 0.0
  %376 = vmatprep.subr.mxu0 0.0
  %377 = vmatpush1.xpose.msra.mxu0 0.0
  %378 = vmatprep.subr.mxu0 0.0
  %379 = vmatpush1.xpose.msra.mxu0 0.0
  %380 = vmatprep.subr.mxu0 0.0
  %381 = vmatpush1.xpose.msra.mxu0 0.0
  %382 = vmatprep.subr.mxu0 0.0
  %383 = vmatpush1.xpose.msra.mxu0 0.0
  %384 = vmatprep.subr.mxu0 0.0
  %385 = vmatpush1.xpose.msra.mxu0 0.0
  %386 = vmatprep.subr.mxu0 0.0
  %387 = vmatpush1.xpose.msra.mxu0 0.0
  %388 = vmatprep.subr.mxu0 0.0
  %389 = vmatpush1.xpose.msra.mxu0 0.0
  %390 = vmatprep.subr.mxu0 0.0
  %391 = vmatpush1.xpose.msra.mxu0 0.0
  %392 = vmatprep.subr.mxu0 0.0
  %393 = vmatpush1.xpose.msra.mxu0 0.0
  %394 = vmatprep.subr.mxu0 0.0
  %395 = vmatpush1.xpose.msra.mxu0 0.0
  %396 = vmatprep.subr.mxu0 0.0
  %397 = vmatpush1.xpose.msra.mxu0 0.0
  %398 = vmatprep.subr.mxu0 0.0
  %399 = vmatpush1.xpose.msra.mxu0 0.0
  %400 = vmatprep.subr.mxu0 0.0
  %401 = vmatpush1.xpose.msra.mxu0 0.0
  %402 = vmatprep.subr.mxu0 0.0
  %403 = vmatpush1.xpose.msra.mxu0 0.0
  %404 = vmatprep.subr.mxu0 0.0
  %405 = vmatpush1.xpose.msra.mxu0 0.0
  %406 = vmatprep.subr.mxu0 0.0
  %407 = vmatpush1.xpose.msra.mxu0 0.0
  %408 = vmatprep.subr.mxu0 0.0
  %409 = vmatpush1.xpose.msra.mxu0 0.0
  %410 = vmatprep.subr.mxu0 0.0
  %411 = vmatpush1.xpose.msra.mxu0 0.0
  %412 = vmatprep.subr.mxu0 0.0
  %413 = vmatpush1.xpose.msra.mxu0 0.0
  %414 = vmatprep.subr.mxu0 0.0
  %415 = vmatpush1.xpose.msra.mxu0 0.0
  %416 = vmatprep.subr.mxu0 0.0
  %417 = vmatpush1.xpose.msra.mxu0 0.0
  %418 = vmatprep.subr.mxu0 0.0
  %419 = vmatpush1.xpose.msra.mxu0 0.0
  %420 = vmatprep.subr.mxu0 0.0
  %421 = vmatpush1.xpose.msra.mxu0 0.0
  %422 = vmatprep.subr.mxu0 0.0
  %423 = vmatpush1.xpose.msra.mxu0 0.0
  %424 = vmatprep.subr.mxu0 0.0
  %425 = vmatpush1.xpose.msra.mxu0 0.0
  %426 = vmatprep.subr.mxu0 0.0
  %427 = vmatpush1.xpose.msra.mxu0 0.0
  %428 = vmatprep.subr.mxu0 0.0
  %429 = vmatpush1.xpose.msra.mxu0 0.0
  %430 = vmatprep.mubr.f32.mxu0 0.0
  %431 = vmatmul.mubr.f32.gmra.mrb[0].mxu0 %v358
  %v432 = vpop.f32.mrb[0].mxu0
  %v433 = vadd.f32 %v142, %v432
  %v434 = vpop.f32.mrb[0].mxu0
  %435 = vmatprep.mubr.f32.mxu0 0.0
  %436 = vmatmul.mubr.f32.gmra.mrb[0].mxu0 %v360
  %v437 = vpop.f32.mrb[0].mxu0
  %v438 = vadd.f32 %v143, %v437
  %v439 = vpop.f32.mrb[0].mxu0
  %440 = vdwg.mxu0
  %v441 = vsel %vm238, %v433, -inf
  %442 = vmax.xlane.f32.xlu0 %v441
  %v443 = vpop.xlane.xlu0 %442
  %v444 = vsel %vm238, %v438, -inf
  %445 = vmax.xlane.f32.xlu0 %v444
  %v446 = vpop.xlane.xlu0 %445
  %v447 = vsub.f32 %v433, %v443
  %v448 = vsub.f32 %v438, %v446
  %v449 = vmul.f32 %v447, 1.442695
  %v450 = vpow.pop %v449
  %v451 = vmul.f32 %v448, 1.442695
  %v452 = vpow.pop %v451
  %v453 = vsel %vm238, %v450, 0.0
  %454 = vadd.xlane.f32.xlu0 %v453
  %v455 = vpop.xlane.xlu0 %454
  %v456 = vsel %vm238, %v452, 0.0
  %457 = vadd.xlane.f32.xlu0 %v456
  %v458 = vpop.xlane.xlu0 %457
  %v459 = vrcp.pop %v455
  %v460 = vrcp.pop %v458
  %v461 = vmul.f32 %v450, %v459
  %v462 = vmul.f32 %v452, %v460
  %463 = vrot.lane.b32.xlu0 %v134, 56
  %v464 = vpop.permute.xlu0 %463
  %465 = vrot.lane.b32.xlu0 %v139, 56
  %v466 = vpop.permute.xlu0 %465
  %v470 = vsel %vm238, %v461, 0
  %v473 = vsel %vm238, %v462, 0
  %475 = vmatprep.subr.mxu0 0.0
  %476 = vmatpush1.msra.mxu0 %v464
  %477 = vmatprep.subr.mxu0 0.0
  %478 = vmatpush1.msra.mxu0 %v466
  %479 = vmatprep.subr.mxu0 0.0
  %480 = vmatpush1.msra.mxu0 0.0
  %481 = vmatprep.subr.mxu0 0.0
  %482 = vmatpush1.msra.mxu0 0.0
  %483 = vmatprep.subr.mxu0 0.0
  %484 = vmatpush1.msra.mxu0 0.0
  %485 = vmatprep.subr.mxu0 0.0
  %486 = vmatpush1.msra.mxu0 0.0
  %487 = vmatprep.subr.mxu0 0.0
  %488 = vmatpush1.msra.mxu0 0.0
  %489 = vmatprep.subr.mxu0 0.0
  %490 = vmatpush1.msra.mxu0 0.0
  %491 = vmatprep.subr.mxu0 0.0
  %492 = vmatpush1.msra.mxu0 0.0
  %493 = vmatprep.subr.mxu0 0.0
  %494 = vmatpush1.msra.mxu0 0.0
  %495 = vmatprep.subr.mxu0 0.0
  %496 = vmatpush1.msra.mxu0 0.0
  %497 = vmatprep.subr.mxu0 0.0
  %498 = vmatpush1.msra.mxu0 0.0
  %499 = vmatprep.subr.mxu0 0.0
  %500 = vmatpush1.msra.mxu0 0.0
  %501 = vmatprep.subr.mxu0 0.0
  %502 = vmatpush1.msra.mxu0 0.0
  %503 = vmatprep.subr.mxu0 0.0
  %504 = vmatpush1.msra.mxu0 0.0
  %505 = vmatprep.subr.mxu0 0.0
  %506 = vmatpush1.msra.mxu0 0.0
  %507 = vmatprep.subr.mxu0 0.0
  %508 = vmatpush1.msra.mxu0 0.0
  %509 = vmatprep.subr.mxu0 0.0
  %510 = vmatpush1.msra.mxu0 0.0
  %511 = vmatprep.subr.mxu0 0.0
  %512 = vmatpush1.msra.mxu0 0.0
  %513 = vmatprep.subr.mxu0 0.0
  %514 = vmatpush1.msra.mxu0 0.0
  %515 = vmatprep.subr.mxu0 0.0
  %516 = vmatpush1.msra.mxu0 0.0
  %517 = vmatprep.subr.mxu0 0.0
  %518 = vmatpush1.msra.mxu0 0.0
  %519 = vmatprep.subr.mxu0 0.0
  %520 = vmatpush1.msra.mxu0 0.0
  %521 = vmatprep.subr.mxu0 0.0
  %522 = vmatpush1.msra.mxu0 0.0
  %523 = vmatprep.subr.mxu0 0.0
  %524 = vmatpush1.msra.mxu0 0.0
  %525 = vmatprep.subr.mxu0 0.0
  %526 = vmatpush1.msra.mxu0 0.0
  %527 = vmatprep.subr.mxu0 0.0
  %528 = vmatpush1.msra.mxu0 0.0
  %529 = vmatprep.subr.mxu0 0.0
  %530 = vmatpush1.msra.mxu0 0.0
  %531 = vmatprep.subr.mxu0 0.0
  %532 = vmatpush1.msra.mxu0 0.0
  %533 = vmatprep.subr.mxu0 0.0
  %534 = vmatpush1.msra.mxu0 0.0
  %535 = vmatprep.subr.mxu0 0.0
  %536 = vmatpush1.msra.mxu0 0.0
  %537 = vmatprep.subr.mxu0 0.0
  %538 = vmatpush1.msra.mxu0 0.0
  %539 = vmatprep.mubr.f32.mxu0 0.0
  %540 = vmatmul.mubr.f32.gmra.mrb[0].mxu0 %v470
  %v541 = vpop.f32.mrb[0].mxu0
  %v542 = vadd.f32 0.0, %v541
  %v543 = vpop.f32.mrb[0].mxu0
  %544 = vmatprep.mubr.f32.mxu0 0.0
  %545 = vmatmul.mubr.f32.gmra.mrb[0].mxu0 %v473
  %v546 = vpop.f32.mrb[0].mxu0
  %v547 = vadd.f32 0.0, %v546
  %v548 = vpop.f32.mrb[0].mxu0
  %549 = vdwg.mxu0
  %552 = vrot.lane.b32.xlu0 %v542, 8
  %v553 = vpop.permute.xlu0 %552
  %554 = vrot.lane.b32.xlu0 %v547, 8
  %v555 = vpop.permute.xlu0 %554
  %vm558 = vcmask 130112
  %559 = vst.msk [vmem:[#allocation2] sm:$0xff] %vm558, %v553
  %560 = vst.msk [vmem:[#allocation2 + $0x8] sm:$0xff] %vm558, %v555
  %561 = vrot.lane.b32.xlu0 %v144, 112
  %v562 = vpop.permute.xlu0 %561
  %563 = vrot.lane.b32.xlu0 %v145, 112
  %v564 = vpop.permute.xlu0 %563
  %565 = vrot.lane.b32.xlu0 %v134, 80
  %v566 = vpop.permute.xlu0 %565
  %567 = vrot.lane.b32.xlu0 %v139, 80
  %v568 = vpop.permute.xlu0 %567
  %v569 = vsel %vm152, %v562, 0
  %v571 = vsel %vm152, %v564, 0
  %v573 = vsel %vm152, %v566, 0
  %v575 = vsel %vm152, %v568, 0
  %577 = vmatprep.subr.mxu0 0.0
  %578 = vmatpush1.xpose.msra.mxu0 %v573
  %579 = vmatprep.subr.mxu0 0.0
  %580 = vmatpush1.xpose.msra.mxu0 %v575
  %581 = vmatprep.subr.mxu0 0.0
  %582 = vmatpush1.xpose.msra.mxu0 0.0
  %583 = vmatprep.subr.mxu0 0.0
  %584 = vmatpush1.xpose.msra.mxu0 0.0
  %585 = vmatprep.subr.mxu0 0.0
  %586 = vmatpush1.xpose.msra.mxu0 0.0
  %587 = vmatprep.subr.mxu0 0.0
  %588 = vmatpush1.xpose.msra.mxu0 0.0
  %589 = vmatprep.subr.mxu0 0.0
  %590 = vmatpush1.xpose.msra.mxu0 0.0
  %591 = vmatprep.subr.mxu0 0.0
  %592 = vmatpush1.xpose.msra.mxu0 0.0
  %593 = vmatprep.subr.mxu0 0.0
  %594 = vmatpush1.xpose.msra.mxu0 0.0
  %595 = vmatprep.subr.mxu0 0.0
  %596 = vmatpush1.xpose.msra.mxu0 0.0
  %597 = vmatprep.subr.mxu0 0.0
  %598 = vmatpush1.xpose.msra.mxu0 0.0
  %599 = vmatprep.subr.mxu0 0.0
  %600 = vmatpush1.xpose.msra.mxu0 0.0
  %601 = vmatprep.subr.mxu0 0.0
  %602 = vmatpush1.xpose.msra.mxu0 0.0
  %603 = vmatprep.subr.mxu0 0.0
  %604 = vmatpush1.xpose.msra.mxu0 0.0
  %605 = vmatprep.subr.mxu0 0.0
  %606 = vmatpush1.xpose.msra.mxu0 0.0
  %607 = vmatprep.subr.mxu0 0.0
  %608 = vmatpush1.xpose.msra.mxu0 0.0
  %609 = vmatprep.subr.mxu0 0.0
  %610 = vmatpush1.xpose.msra.mxu0 0.0
  %611 = vmatprep.subr.mxu0 0.0
  %612 = vmatpush1.xpose.msra.mxu0 0.0
  %613 = vmatprep.subr.mxu0 0.0
  %614 = vmatpush1.xpose.msra.mxu0 0.0
  %615 = vmatprep.subr.mxu0 0.0
  %616 = vmatpush1.xpose.msra.mxu0 0.0
  %617 = vmatprep.subr.mxu0 0.0
  %618 = vmatpush1.xpose.msra.mxu0 0.0
  %619 = vmatprep.subr.mxu0 0.0
  %620 = vmatpush1.xpose.msra.mxu0 0.0
  %621 = vmatprep.subr.mxu0 0.0
  %622 = vmatpush1.xpose.msra.mxu0 0.0
  %623 = vmatprep.subr.mxu0 0.0
  %624 = vmatpush1.xpose.msra.mxu0 0.0
  %625 = vmatprep.subr.mxu0 0.0
  %626 = vmatpush1.xpose.msra.mxu0 0.0
  %627 = vmatprep.subr.mxu0 0.0
  %628 = vmatpush1.xpose.msra.mxu0 0.0
  %629 = vmatprep.subr.mxu0 0.0
  %630 = vmatpush1.xpose.msra.mxu0 0.0
  %631 = vmatprep.subr.mxu0 0.0
  %632 = vmatpush1.xpose.msra.mxu0 0.0
  %633 = vmatprep.subr.mxu0 0.0
  %634 = vmatpush1.xpose.msra.mxu0 0.0
  %635 = vmatprep.subr.mxu0 0.0
  %636 = vmatpush1.xpose.msra.mxu0 0.0
  %637 = vmatprep.subr.mxu0 0.0
  %638 = vmatpush1.xpose.msra.mxu0 0.0
  %639 = vmatprep.subr.mxu0 0.0
  %640 = vmatpush1.xpose.msra.mxu0 0.0
  %641 = vmatprep.mubr.f32.mxu0 0.0
  %642 = vmatmul.mubr.f32.gmra.mrb[0].mxu0 %v569
  %v643 = vpop.f32.mrb[0].mxu0
  %v644 = vadd.f32 %v142, %v643
  %v645 = vpop.f32.mrb[0].mxu0
  %646 = vmatprep.mubr.f32.mxu0 0.0
  %647 = vmatmul.mubr.f32.gmra.mrb[0].mxu0 %v571
  %v648 = vpop.f32.mrb[0].mxu0
  %v649 = vadd.f32 %v143, %v648
  %v650 = vpop.f32.mrb[0].mxu0
  %651 = vdwg.mxu0
  %v652 = vsel %vm238, %v644, -inf
  %653 = vmax.xlane.f32.xlu0 %v652
  %v654 = vpop.xlane.xlu0 %653
  %v655 = vsel %vm238, %v649, -inf
  %656 = vmax.xlane.f32.xlu0 %v655
  %v657 = vpop.xlane.xlu0 %656
  %v658 = vsub.f32 %v644, %v654
  %v659 = vsub.f32 %v649, %v657
  %v660 = vmul.f32 %v658, 1.442695
  %v661 = vpow.pop %v660
  %v662 = vmul.f32 %v659, 1.442695
  %v663 = vpow.pop %v662
  %v664 = vsel %vm238, %v661, 0.0
  %665 = vadd.xlane.f32.xlu0 %v664
  %v666 = vpop.xlane.xlu0 %665
  %v667 = vsel %vm238, %v663, 0.0
  %668 = vadd.xlane.f32.xlu0 %v667
  %v669 = vpop.xlane.xlu0 %668
  %v670 = vrcp.pop %v666
  %v671 = vrcp.pop %v669
  %v672 = vmul.f32 %v661, %v670
  %v673 = vmul.f32 %v663, %v671
  %674 = vrot.lane.b32.xlu0 %v134, 48
  %v675 = vpop.permute.xlu0 %674
  %676 = vrot.lane.b32.xlu0 %v139, 48
  %v677 = vpop.permute.xlu0 %676
  %v681 = vsel %vm238, %v672, 0
  %v684 = vsel %vm238, %v673, 0
  %686 = vmatprep.subr.mxu0 0.0
  %687 = vmatpush1.msra.mxu0 %v675
  %688 = vmatprep.subr.mxu0 0.0
  %689 = vmatpush1.msra.mxu0 %v677
  %690 = vmatprep.subr.mxu0 0.0
  %691 = vmatpush1.msra.mxu0 0.0
  %692 = vmatprep.subr.mxu0 0.0
  %693 = vmatpush1.msra.mxu0 0.0
  %694 = vmatprep.subr.mxu0 0.0
  %695 = vmatpush1.msra.mxu0 0.0
  %696 = vmatprep.subr.mxu0 0.0
  %697 = vmatpush1.msra.mxu0 0.0
  %698 = vmatprep.subr.mxu0 0.0
  %699 = vmatpush1.msra.mxu0 0.0
  %700 = vmatprep.subr.mxu0 0.0
  %701 = vmatpush1.msra.mxu0 0.0
  %702 = vmatprep.subr.mxu0 0.0
  %703 = vmatpush1.msra.mxu0 0.0
  %704 = vmatprep.subr.mxu0 0.0
  %705 = vmatpush1.msra.mxu0 0.0
  %706 = vmatprep.subr.mxu0 0.0
  %707 = vmatpush1.msra.mxu0 0.0
  %708 = vmatprep.subr.mxu0 0.0
  %709 = vmatpush1.msra.mxu0 0.0
  %710 = vmatprep.subr.mxu0 0.0
  %711 = vmatpush1.msra.mxu0 0.0
  %712 = vmatprep.subr.mxu0 0.0
  %713 = vmatpush1.msra.mxu0 0.0
  %714 = vmatprep.subr.mxu0 0.0
  %715 = vmatpush1.msra.mxu0 0.0
  %716 = vmatprep.subr.mxu0 0.0
  %717 = vmatpush1.msra.mxu0 0.0
  %718 = vmatprep.subr.mxu0 0.0
  %719 = vmatpush1.msra.mxu0 0.0
  %720 = vmatprep.subr.mxu0 0.0
  %721 = vmatpush1.msra.mxu0 0.0
  %722 = vmatprep.subr.mxu0 0.0
  %723 = vmatpush1.msra.mxu0 0.0
  %724 = vmatprep.subr.mxu0 0.0
  %725 = vmatpush1.msra.mxu0 0.0
  %726 = vmatprep.subr.mxu0 0.0
  %727 = vmatpush1.msra.mxu0 0.0
  %728 = vmatprep.subr.mxu0 0.0
  %729 = vmatpush1.msra.mxu0 0.0
  %730 = vmatprep.subr.mxu0 0.0
  %731 = vmatpush1.msra.mxu0 0.0
  %732 = vmatprep.subr.mxu0 0.0
  %733 = vmatpush1.msra.mxu0 0.0
  %734 = vmatprep.subr.mxu0 0.0
  %735 = vmatpush1.msra.mxu0 0.0
  %736 = vmatprep.subr.mxu0 0.0
  %737 = vmatpush1.msra.mxu0 0.0
  %738 = vmatprep.subr.mxu0 0.0
  %739 = vmatpush1.msra.mxu0 0.0
  %740 = vmatprep.subr.mxu0 0.0
  %741 = vmatpush1.msra.mxu0 0.0
  %742 = vmatprep.subr.mxu0 0.0
  %743 = vmatpush1.msra.mxu0 0.0
  %744 = vmatprep.subr.mxu0 0.0
  %745 = vmatpush1.msra.mxu0 0.0
  %746 = vmatprep.subr.mxu0 0.0
  %747 = vmatpush1.msra.mxu0 0.0
  %748 = vmatprep.subr.mxu0 0.0
  %749 = vmatpush1.msra.mxu0 0.0
  %750 = vmatprep.mubr.f32.mxu0 0.0
  %751 = vmatmul.mubr.f32.gmra.mrb[0].mxu0 %v681
  %v752 = vpop.f32.mrb[0].mxu0
  %v753 = vadd.f32 0.0, %v752
  %v754 = vpop.f32.mrb[0].mxu0
  %755 = vmatprep.mubr.f32.mxu0 0.0
  %756 = vmatmul.mubr.f32.gmra.mrb[0].mxu0 %v684
  %v757 = vpop.f32.mrb[0].mxu0
  %v758 = vadd.f32 0.0, %v757
  %v759 = vpop.f32.mrb[0].mxu0
  %760 = vdwg.mxu0
  %763 = vrot.lane.b32.xlu0 %v753, 16
  %v764 = vpop.permute.xlu0 %763
  %765 = vrot.lane.b32.xlu0 %v758, 16
  %v766 = vpop.permute.xlu0 %765
  %vm769 = vcmask 195712
  %770 = vst.msk [vmem:[#allocation2] sm:$0xff] %vm769, %v764
  %771 = vst.msk [vmem:[#allocation2 + $0x8] sm:$0xff] %vm769, %v766
  %772 = vrot.lane.b32.xlu0 %v144, 104
  %v773 = vpop.permute.xlu0 %772
  %774 = vrot.lane.b32.xlu0 %v145, 104
  %v775 = vpop.permute.xlu0 %774
  %776 = vrot.lane.b32.xlu0 %v134, 72
  %v777 = vpop.permute.xlu0 %776
  %778 = vrot.lane.b32.xlu0 %v139, 72
  %v779 = vpop.permute.xlu0 %778
  %v780 = vsel %vm152, %v773, 0
  %v782 = vsel %vm152, %v775, 0
  %v784 = vsel %vm152, %v777, 0
  %v786 = vsel %vm152, %v779, 0
  %788 = vmatprep.subr.mxu0 0.0
  %789 = vmatpush1.xpose.msra.mxu0 %v784
  %790 = vmatprep.subr.mxu0 0.0
  %791 = vmatpush1.xpose.msra.mxu0 %v786
  %792 = vmatprep.subr.mxu0 0.0
  %793 = vmatpush1.xpose.msra.mxu0 0.0
  %794 = vmatprep.subr.mxu0 0.0
  %795 = vmatpush1.xpose.msra.mxu0 0.0
  %796 = vmatprep.subr.mxu0 0.0
  %797 = vmatpush1.xpose.msra.mxu0 0.0
  %798 = vmatprep.subr.mxu0 0.0
  %799 = vmatpush1.xpose.msra.mxu0 0.0
  %800 = vmatprep.subr.mxu0 0.0
  %801 = vmatpush1.xpose.msra.mxu0 0.0
  %802 = vmatprep.subr.mxu0 0.0
  %803 = vmatpush1.xpose.msra.mxu0 0.0
  %804 = vmatprep.subr.mxu0 0.0
  %805 = vmatpush1.xpose.msra.mxu0 0.0
  %806 = vmatprep.subr.mxu0 0.0
  %807 = vmatpush1.xpose.msra.mxu0 0.0
  %808 = vmatprep.subr.mxu0 0.0
  %809 = vmatpush1.xpose.msra.mxu0 0.0
  %810 = vmatprep.subr.mxu0 0.0
  %811 = vmatpush1.xpose.msra.mxu0 0.0
  %812 = vmatprep.subr.mxu0 0.0
  %813 = vmatpush1.xpose.msra.mxu0 0.0
  %814 = vmatprep.subr.mxu0 0.0
  %815 = vmatpush1.xpose.msra.mxu0 0.0
  %816 = vmatprep.subr.mxu0 0.0
  %817 = vmatpush1.xpose.msra.mxu0 0.0
  %818 = vmatprep.subr.mxu0 0.0
  %819 = vmatpush1.xpose.msra.mxu0 0.0
  %820 = vmatprep.subr.mxu0 0.0
  %821 = vmatpush1.xpose.msra.mxu0 0.0
  %822 = vmatprep.subr.mxu0 0.0
  %823 = vmatpush1.xpose.msra.mxu0 0.0
  %824 = vmatprep.subr.mxu0 0.0
  %825 = vmatpush1.xpose.msra.mxu0 0.0
  %826 = vmatprep.subr.mxu0 0.0
  %827 = vmatpush1.xpose.msra.mxu0 0.0
  %828 = vmatprep.subr.mxu0 0.0
  %829 = vmatpush1.xpose.msra.mxu0 0.0
  %830 = vmatprep.subr.mxu0 0.0
  %831 = vmatpush1.xpose.msra.mxu0 0.0
  %832 = vmatprep.subr.mxu0 0.0
  %833 = vmatpush1.xpose.msra.mxu0 0.0
  %834 = vmatprep.subr.mxu0 0.0
  %835 = vmatpush1.xpose.msra.mxu0 0.0
  %836 = vmatprep.subr.mxu0 0.0
  %837 = vmatpush1.xpose.msra.mxu0 0.0
  %838 = vmatprep.subr.mxu0 0.0
  %839 = vmatpush1.xpose.msra.mxu0 0.0
  %840 = vmatprep.subr.mxu0 0.0
  %841 = vmatpush1.xpose.msra.mxu0 0.0
  %842 = vmatprep.subr.mxu0 0.0
  %843 = vmatpush1.xpose.msra.mxu0 0.0
  %844 = vmatprep.subr.mxu0 0.0
  %845 = vmatpush1.xpose.msra.mxu0 0.0
  %846 = vmatprep.subr.mxu0 0.0
  %847 = vmatpush1.xpose.msra.mxu0 0.0
  %848 = vmatprep.subr.mxu0 0.0
  %849 = vmatpush1.xpose.msra.mxu0 0.0
  %850 = vmatprep.subr.mxu0 0.0
  %851 = vmatpush1.xpose.msra.mxu0 0.0
  %852 = vmatprep.mubr.f32.mxu0 0.0
  %853 = vmatmul.mubr.f32.gmra.mrb[0].mxu0 %v780
  %v854 = vpop.f32.mrb[0].mxu0
  %v855 = vadd.f32 %v142, %v854
  %v856 = vpop.f32.mrb[0].mxu0
  %857 = vmatprep.mubr.f32.mxu0 0.0
  %858 = vmatmul.mubr.f32.gmra.mrb[0].mxu0 %v782
  %v859 = vpop.f32.mrb[0].mxu0
  %v860 = vadd.f32 %v143, %v859
  %v861 = vpop.f32.mrb[0].mxu0
  %862 = vdwg.mxu0
  %v863 = vsel %vm238, %v855, -inf
  %864 = vmax.xlane.f32.xlu0 %v863
  %v865 = vpop.xlane.xlu0 %864
  %v866 = vsel %vm238, %v860, -inf
  %867 = vmax.xlane.f32.xlu0 %v866
  %v868 = vpop.xlane.xlu0 %867
  %v869 = vsub.f32 %v855, %v865
  %v870 = vsub.f32 %v860, %v868
  %v871 = vmul.f32 %v869, 1.442695
  %v872 = vpow.pop %v871
  %v873 = vmul.f32 %v870, 1.442695
  %v874 = vpow.pop %v873
  %v875 = vsel %vm238, %v872, 0.0
  %876 = vadd.xlane.f32.xlu0 %v875
  %v877 = vpop.xlane.xlu0 %876
  %v878 = vsel %vm238, %v874, 0.0
  %879 = vadd.xlane.f32.xlu0 %v878
  %v880 = vpop.xlane.xlu0 %879
  %v881 = vrcp.pop %v877
  %v882 = vrcp.pop %v880
  %v883 = vmul.f32 %v872, %v881
  %v884 = vmul.f32 %v874, %v882
  %885 = vrot.lane.b32.xlu0 %v134, 40
  %v886 = vpop.permute.xlu0 %885
  %887 = vrot.lane.b32.xlu0 %v139, 40
  %v888 = vpop.permute.xlu0 %887
  %v892 = vsel %vm238, %v883, 0
  %v895 = vsel %vm238, %v884, 0
  %897 = vmatprep.subr.mxu0 0.0
  %898 = vmatpush1.msra.mxu0 %v886
  %899 = vmatprep.subr.mxu0 0.0
  %900 = vmatpush1.msra.mxu0 %v888
  %901 = vmatprep.subr.mxu0 0.0
  %902 = vmatpush1.msra.mxu0 0.0
  %903 = vmatprep.subr.mxu0 0.0
  %904 = vmatpush1.msra.mxu0 0.0
  %905 = vmatprep.subr.mxu0 0.0
  %906 = vmatpush1.msra.mxu0 0.0
  %907 = vmatprep.subr.mxu0 0.0
  %908 = vmatpush1.msra.mxu0 0.0
  %909 = vmatprep.subr.mxu0 0.0
  %910 = vmatpush1.msra.mxu0 0.0
  %911 = vmatprep.subr.mxu0 0.0
  %912 = vmatpush1.msra.mxu0 0.0
  %913 = vmatprep.subr.mxu0 0.0
  %914 = vmatpush1.msra.mxu0 0.0
  %915 = vmatprep.subr.mxu0 0.0
  %916 = vmatpush1.msra.mxu0 0.0
  %917 = vmatprep.subr.mxu0 0.0
  %918 = vmatpush1.msra.mxu0 0.0
  %919 = vmatprep.subr.mxu0 0.0
  %920 = vmatpush1.msra.mxu0 0.0
  %921 = vmatprep.subr.mxu0 0.0
  %922 = vmatpush1.msra.mxu0 0.0
  %923 = vmatprep.subr.mxu0 0.0
  %924 = vmatpush1.msra.mxu0 0.0
  %925 = vmatprep.subr.mxu0 0.0
  %926 = vmatpush1.msra.mxu0 0.0
  %927 = vmatprep.subr.mxu0 0.0
  %928 = vmatpush1.msra.mxu0 0.0
  %929 = vmatprep.subr.mxu0 0.0
  %930 = vmatpush1.msra.mxu0 0.0
  %931 = vmatprep.subr.mxu0 0.0
  %932 = vmatpush1.msra.mxu0 0.0
  %933 = vmatprep.subr.mxu0 0.0
  %934 = vmatpush1.msra.mxu0 0.0
  %935 = vmatprep.subr.mxu0 0.0
  %936 = vmatpush1.msra.mxu0 0.0
  %937 = vmatprep.subr.mxu0 0.0
  %938 = vmatpush1.msra.mxu0 0.0
  %939 = vmatprep.subr.mxu0 0.0
  %940 = vmatpush1.msra.mxu0 0.0
  %941 = vmatprep.subr.mxu0 0.0
  %942 = vmatpush1.msra.mxu0 0.0
  %943 = vmatprep.subr.mxu0 0.0
  %944 = vmatpush1.msra.mxu0 0.0
  %945 = vmatprep.subr.mxu0 0.0
  %946 = vmatpush1.msra.mxu0 0.0
  %947 = vmatprep.subr.mxu0 0.0
  %948 = vmatpush1.msra.mxu0 0.0
  %949 = vmatprep.subr.mxu0 0.0
  %950 = vmatpush1.msra.mxu0 0.0
  %951 = vmatprep.subr.mxu0 0.0
  %952 = vmatpush1.msra.mxu0 0.0
  %953 = vmatprep.subr.mxu0 0.0
  %954 = vmatpush1.msra.mxu0 0.0
  %955 = vmatprep.subr.mxu0 0.0
  %956 = vmatpush1.msra.mxu0 0.0
  %957 = vmatprep.subr.mxu0 0.0
  %958 = vmatpush1.msra.mxu0 0.0
  %959 = vmatprep.subr.mxu0 0.0
  %960 = vmatpush1.msra.mxu0 0.0
  %961 = vmatprep.mubr.f32.mxu0 0.0
  %962 = vmatmul.mubr.f32.gmra.mrb[0].mxu0 %v892
  %v963 = vpop.f32.mrb[0].mxu0
  %v964 = vadd.f32 0.0, %v963
  %v965 = vpop.f32.mrb[0].mxu0
  %966 = vmatprep.mubr.f32.mxu0 0.0
  %967 = vmatmul.mubr.f32.gmra.mrb[0].mxu0 %v895
  %v968 = vpop.f32.mrb[0].mxu0
  %v969 = vadd.f32 0.0, %v968
  %v970 = vpop.f32.mrb[0].mxu0
  %971 = vdwg.mxu0
  %974 = vrot.lane.b32.xlu0 %v964, 24
  %v975 = vpop.permute.xlu0 %974
  %976 = vrot.lane.b32.xlu0 %v969, 24
  %v977 = vpop.permute.xlu0 %976
  %vm980 = vcmask 261312
  %981 = vst.msk [vmem:[#allocation2] sm:$0xff] %vm980, %v975
  %982 = vst.msk [vmem:[#allocation2 + $0x8] sm:$0xff] %vm980, %v977
  %v983 = vld [vmem:[#allocation2] sm:$0xff]
  %v984 = vld [vmem:[#allocation2 + $0x8] sm:$0xff]
  %v985 = vld [vmem:[%s4] sm:$0xff]
  %v986 = vld [vmem:[%s4 + $0x8] sm:$0xff]
  %v987 = vld [vmem:[%s4 + $0x10] sm:$0xff]
  %v988 = vld [vmem:[%s4 + $0x18] sm:$0xff]
  %v989 = vld [vmem:[%s5] sm:$0x1]
  %v991 = vlaneseq
  %v992 = vshrl.u32 %v991, 7
  %v993 = vsub.s32 0, %v992
  %v994 = vrot.slane %v989, %v993
  %v997 = vsel %vm60, %v983, 0
  %v1000 = vsel %vm60, %v984, 0
  %1002 = vmatprep.subr.mxu0 0.0
  %1003 = vmatpush1.msra.mxu0 %v985
  %1004 = vmatprep.subr.mxu0 0.0
  %1005 = vmatpush1.msra.mxu0 %v986
  %1006 = vmatprep.subr.mxu0 0.0
  %1007 = vmatpush1.msra.mxu0 %v987
  %1008 = vmatprep.subr.mxu0 0.0
  %1009 = vmatpush1.msra.mxu0 %v988
  %1010 = vmatprep.subr.mxu0 0.0
  %1011 = vmatpush1.msra.mxu0 0.0
  %1012 = vmatprep.subr.mxu0 0.0
  %1013 = vmatpush1.msra.mxu0 0.0
  %1014 = vmatprep.subr.mxu0 0.0
  %1015 = vmatpush1.msra.mxu0 0.0
  %1016 = vmatprep.subr.mxu0 0.0
  %1017 = vmatpush1.msra.mxu0 0.0
  %1018 = vmatprep.subr.mxu0 0.0
  %1019 = vmatpush1.msra.mxu0 0.0
  %1020 = vmatprep.subr.mxu0 0.0
  %1021 = vmatpush1.msra.mxu0 0.0
  %1022 = vmatprep.subr.mxu0 0.0
  %1023 = vmatpush1.msra.mxu0 0.0
  %1024 = vmatprep.subr.mxu0 0.0
  %1025 = vmatpush1.msra.mxu0 0.0
  %1026 = vmatprep.subr.mxu0 0.0
  %1027 = vmatpush1.msra.mxu0 0.0
  %1028 = vmatprep.subr.mxu0 0.0
  %1029 = vmatpush1.msra.mxu0 0.0
  %1030 = vmatprep.subr.mxu0 0.0
  %1031 = vmatpush1.msra.mxu0 0.0
  %1032 = vmatprep.subr.mxu0 0.0
  %1033 = vmatpush1.msra.mxu0 0.0
  %1034 = vmatprep.subr.mxu0 0.0
  %1035 = vmatpush1.msra.mxu0 0.0
  %1036 = vmatprep.subr.mxu0 0.0
  %1037 = vmatpush1.msra.mxu0 0.0
  %1038 = vmatprep.subr.mxu0 0.0
  %1039 = vmatpush1.msra.mxu0 0.0
  %1040 = vmatprep.subr.mxu0 0.0
  %1041 = vmatpush1.msra.mxu0 0.0
  %1042 = vmatprep.subr.mxu0 0.0
  %1043 = vmatpush1.msra.mxu0 0.0
  %1044 = vmatprep.subr.mxu0 0.0
  %1045 = vmatpush1.msra.mxu0 0.0
  %1046 = vmatprep.subr.mxu0 0.0
  %1047 = vmatpush1.msra.mxu0 0.0
  %1048 = vmatprep.subr.mxu0 0.0
  %1049 = vmatpush1.msra.mxu0 0.0
  %1050 = vmatprep.subr.mxu0 0.0
  %1051 = vmatpush1.msra.mxu0 0.0
  %1052 = vmatprep.subr.mxu0 0.0
  %1053 = vmatpush1.msra.mxu0 0.0
  %1054 = vmatprep.subr.mxu0 0.0
  %1055 = vmatpush1.msra.mxu0 0.0
  %1056 = vmatprep.subr.mxu0 0.0
  %1057 = vmatpush1.msra.mxu0 0.0
  %1058 = vmatprep.subr.mxu0 0.0
  %1059 = vmatpush1.msra.mxu0 0.0
  %1060 = vmatprep.subr.mxu0 0.0
  %1061 = vmatpush1.msra.mxu0 0.0
  %1062 = vmatprep.subr.mxu0 0.0
  %1063 = vmatpush1.msra.mxu0 0.0
  %1064 = vmatprep.subr.mxu0 0.0
  %1065 = vmatpush1.msra.mxu0 0.0
  %1066 = vmatprep.mubr.f32.mxu0 0.0
  %1067 = vmatmul.mubr.f32.gmra.mrb[0].mxu0 %v997
  %v1068 = vpop.f32.mrb[0].mxu0
  %v1069 = vadd.f32 %v994, %v1068
  %v1070 = vpop.f32.mrb[0].mxu0
  %1071 = vmatprep.mubr.f32.mxu0 0.0
  %1072 = vmatmul.mubr.f32.gmra.mrb[0].mxu0 %v1000
  %v1073 = vpop.f32.mrb[0].mxu0
  %v1074 = vadd.f32 %v994, %v1073
  %v1075 = vpop.f32.mrb[0].mxu0
  %1076 = vdwg.mxu0
  %v1077 = vadd.f32 %v47, %v1069
  %v1078 = vadd.f32 %v48, %v1074
  %v1079 = vld [vmem:[%s6] sm:$0x1]
  %v1080 = vld [vmem:[%s7] sm:$0x1]
  %v1081 = vsel %vm60, %v1077, 0.0
  %1082 = vadd.xlane.f32.xlu0 %v1081
  %v1083 = vpop.xlane.xlu0 %1082
  %v1084 = vsel %vm60, %v1078, 0.0
  %1085 = vadd.xlane.f32.xlu0 %v1084
  %v1086 = vpop.xlane.xlu0 %1085
  %v1087 = vrcp.pop 32.0
  %v1088 = vmul.f32 %v1083, %v1087
  %v1089 = vmul.f32 %v1086, %v1087
  %v1090 = vsub.f32 %v1077, %v1088
  %v1091 = vsub.f32 %v1078, %v1089
  %v1092 = vmul.f32 %v1090, %v1090
  %v1093 = vmul.f32 %v1091, %v1091
  %v1094 = vsel %vm60, %v1092, 0.0
  %1095 = vadd.xlane.f32.xlu0 %v1094
  %v1096 = vpop.xlane.xlu0 %1095
  %v1097 = vsel %vm60, %v1093, 0.0
  %1098 = vadd.xlane.f32.xlu0 %v1097
  %v1099 = vpop.xlane.xlu0 %1098
  %v1100 = vmul.f32 %v1096, %v1087
  %v1101 = vmul.f32 %v1099, %v1087
  %v1102 = vadd.f32 %v1100, 1e-05
  %v1103 = vadd.f32 %v1101, 1e-05
  %v1104 = vrsqrt.pop %v1102
  %v1105 = vrsqrt.pop %v1103
  %v1106 = vmul.f32 %v1090, %v1104
  %v1107 = vmul.f32 %v1091, %v1105
  %v1109 = vlaneseq
  %v1110 = vshrl.u32 %v1109, 7
  %v1111 = vsub.s32 0, %v1110
  %v1112 = vrot.slane %v1079, %v1111
  %v1114 = vmul.f32 %v1106, %v1112
  %v1115 = vmul.f32 %v1107, %v1112
  %v1117 = vlaneseq
  %v1118 = vshrl.u32 %v1117, 7
  %v1119 = vsub.s32 0, %v1118
  %v1120 = vrot.slane %v1080, %v1119
  %v1122 = vadd.f32 %v1114, %v1120
  %v1123 = vadd.f32 %v1115, %v1120
  %v1124 = vld [vmem:[%s8] sm:$0xff]
  %v1125 = vld [vmem:[%s8 + $0x8] sm:$0xff]
  %v1126 = vld [vmem:[%s8 + $0x10] sm:$0xff]
  %v1127 = vld [vmem:[%s8 + $0x18] sm:$0xff]
  %v1128 = vld [vmem:[%s9] sm:$0x1]
  %v1130 = vlaneseq
  %v1131 = vshrl.u32 %v1130, 7
  %v1132 = vsub.s32 0, %v1131
  %v1133 = vrot.slane %v1128, %v1132
  %v1136 = vsel %vm60, %v1122, 0
  %v1139 = vsel %vm60, %v1123, 0
  %1141 = vmatprep.subr.mxu0 0.0
  %1142 = vmatpush1.msra.mxu0 %v1124
  %1143 = vmatprep.subr.mxu0 0.0
  %1144 = vmatpush1.msra.mxu0 %v1125
  %1145 = vmatprep.subr.mxu0 0.0
  %1146 = vmatpush1.msra.mxu0 %v1126
  %1147 = vmatprep.subr.mxu0 0.0
  %1148 = vmatpush1.msra.mxu0 %v1127
  %1149 = vmatprep.subr.mxu0 0.0
  %1150 = vmatpush1.msra.mxu0 0.0
  %1151 = vmatprep.subr.mxu0 0.0
  %1152 = vmatpush1.msra.mxu0 0.0
  %1153 = vmatprep.subr.mxu0 0.0
  %1154 = vmatpush1.msra.mxu0 0.0
  %1155 = vmatprep.subr.mxu0 0.0
  %1156 = vmatpush1.msra.mxu0 0.0
  %1157 = vmatprep.subr.mxu0 0.0
  %1158 = vmatpush1.msra.mxu0 0.0
  %1159 = vmatprep.subr.mxu0 0.0
  %1160 = vmatpush1.msra.mxu0 0.0
  %1161 = vmatprep.subr.mxu0 0.0
  %1162 = vmatpush1.msra.mxu0 0.0
  %1163 = vmatprep.subr.mxu0 0.0
  %1164 = vmatpush1.msra.mxu0 0.0
  %1165 = vmatprep.subr.mxu0 0.0
  %1166 = vmatpush1.msra.mxu0 0.0
  %1167 = vmatprep.subr.mxu0 0.0
  %1168 = vmatpush1.msra.mxu0 0.0
  %1169 = vmatprep.subr.mxu0 0.0
  %1170 = vmatpush1.msra.mxu0 0.0
  %1171 = vmatprep.subr.mxu0 0.0
  %1172 = vmatpush1.msra.mxu0 0.0
  %1173 = vmatprep.subr.mxu0 0.0
  %1174 = vmatpush1.msra.mxu0 0.0
  %1175 = vmatprep.subr.mxu0 0.0
  %1176 = vmatpush1.msra.mxu0 0.0
  %1177 = vmatprep.subr.mxu0 0.0
  %1178 = vmatpush1.msra.mxu0 0.0
  %1179 = vmatprep.subr.mxu0 0.0
  %1180 = vmatpush1.msra.mxu0 0.0
  %1181 = vmatprep.subr.mxu0 0.0
  %1182 = vmatpush1.msra.mxu0 0.0
  %1183 = vmatprep.subr.mxu0 0.0
  %1184 = vmatpush1.msra.mxu0 0.0
  %1185 = vmatprep.subr.mxu0 0.0
  %1186 = vmatpush1.msra.mxu0 0.0
  %1187 = vmatprep.subr.mxu0 0.0
  %1188 = vmatpush1.msra.mxu0 0.0
  %1189 = vmatprep.subr.mxu0 0.0
  %1190 = vmatpush1.msra.mxu0 0.0
  %1191 = vmatprep.subr.mxu0 0.0
  %1192 = vmatpush1.msra.mxu0 0.0
  %1193 = vmatprep.subr.mxu0 0.0
  %1194 = vmatpush1.msra.mxu0 0.0
  %1195 = vmatprep.subr.mxu0 0.0
  %1196 = vmatpush1.msra.mxu0 0.0
  %1197 = vmatprep.subr.mxu0 0.0
  %1198 = vmatpush1.msra.mxu0 0.0
  %1199 = vmatprep.subr.mxu0 0.0
  %1200 = vmatpush1.msra.mxu0 0.0
  %1201 = vmatprep.subr.mxu0 0.0
  %1202 = vmatpush1.msra.mxu0 0.0
  %1203 = vmatprep.subr.mxu0 0.0
  %1204 = vmatpush1.msra.mxu0 0.0
  %1205 = vmatprep.mubr.f32.mxu0 0.0
  %1206 = vmatmul.mubr.f32.gmra.mrb[0].mxu0 %v1136
  %v1207 = vpop.f32.mrb[0].mxu0
  %v1208 = vadd.f32 %v1133, %v1207
  %v1209 = vpop.f32.mrb[0].mxu0
  %1210 = vmatprep.mubr.f32.mxu0 0.0
  %1211 = vmatmul.mubr.f32.gmra.mrb[0].mxu0 %v1139
  %v1212 = vpop.f32.mrb[0].mxu0
  %v1213 = vadd.f32 %v1133, %v1212
  %v1214 = vpop.f32.mrb[0].mxu0
  %1215 = vdwg.mxu0
  %v1216 = vmax.f32 %v1208, 0.0
  %v1217 = vmax.f32 %v1213, 0.0
  %v1218 = vld [vmem:[%s10] sm:$0xff]
  %v1219 = vld [vmem:[%s10 + $0x8] sm:$0xff]
  %v1220 = vld [vmem:[%s10 + $0x10] sm:$0xff]
  %v1221 = vld [vmem:[%s10 + $0x18] sm:$0xff]
  %v1222 = vld [vmem:[%s10 + $0x20] sm:$0xff]
  %v1223 = vld [vmem:[%s10 + $0x28] sm:$0xff]
  %v1224 = vld [vmem:[%s10 + $0x30] sm:$0xff]
  %v1225 = vld [vmem:[%s10 + $0x38] sm:$0xff]
  %v1226 = vld [vmem:[%s11] sm:$0x1]
  %v1228 = vlaneseq
  %v1229 = vshrl.u32 %v1228, 7
  %v1230 = vsub.s32 0, %v1229
  %v1231 = vrot.slane %v1226, %v1230
  %vm1233 = vcmask 523264
  %v1235 = vsel %vm1233, %v1216, 0
  %v1238 = vsel %vm1233, %v1217, 0
  %1240 = vmatprep.subr.mxu0 0.0
  %1241 = vmatpush1.msra.mxu0 %v1218
  %1242 = vmatprep.subr.mxu0 0.0
  %1243 = vmatpush1.msra.mxu0 %v1219
  %1244 = vmatprep.subr.mxu0 0.0
  %1245 = vmatpush1.msra.mxu0 %v1220
  %1246 = vmatprep.subr.mxu0 0.0
  %1247 = vmatpush1.msra.mxu0 %v1221
  %1248 = vmatprep.subr.mxu0 0.0
  %1249 = vmatpush1.msra.mxu0 %v1222
  %1250 = vmatprep.subr.mxu0 0.0
  %1251 = vmatpush1.msra.mxu0 %v1223
  %1252 = vmatprep.subr.mxu0 0.0
  %1253 = vmatpush1.msra.mxu0 %v1224
  %1254 = vmatprep.subr.mxu0 0.0
  %1255 = vmatpush1.msra.mxu0 %v1225
  %1256 = vmatprep.subr.mxu0 0.0
  %1257 = vmatpush1.msra.mxu0 0.0
  %1258 = vmatprep.subr.mxu0 0.0
  %1259 = vmatpush1.msra.mxu0 0.0
  %1260 = vmatprep.subr.mxu0 0.0
  %1261 = vmatpush1.msra.mxu0 0.0
  %1262 = vmatprep.subr.mxu0 0.0
  %1263 = vmatpush1.msra.mxu0 0.0
  %1264 = vmatprep.subr.mxu0 0.0
  %1265 = vmatpush1.msra.mxu0 0.0
  %1266 = vmatprep.subr.mxu0 0.0
  %1267 = vmatpush1.msra.mxu0 0.0
  %1268 = vmatprep.subr.mxu0 0.0
  %1269 = vmatpush1.msra.mxu0 0.0
  %1270 = vmatprep.subr.mxu0 0.0
  %1271 = vmatpush1.msra.mxu0 0.0
  %1272 = vmatprep.subr.mxu0 0.0
  %1273 = vmatpush1.msra.mxu0 0.0
  %1274 = vmatprep.subr.mxu0 0.0
  %1275 = vmatpush1.msra.mxu0 0.0
  %1276 = vmatprep.subr.mxu0 0.0
  %1277 = vmatpush1.msra.mxu0 0.0
  %1278 = vmatprep.subr.mxu0 0.0
  %1279 = vmatpush1.msra.mxu0 0.0
  %1280 = vmatprep.subr.mxu0 0.0
  %1281 = vmatpush1.msra.mxu0 0.0
  %1282 = vmatprep.subr.mxu0 0.0
  %1283 = vmatpush1.msra.mxu0 0.0
  %1284 = vmatprep.subr.mxu0 0.0
  %1285 = vmatpush1.msra.mxu0 0.0
  %1286 = vmatprep.subr.mxu0 0.0
  %1287 = vmatpush1.msra.mxu0 0.0
  %1288 = vmatprep.subr.mxu0 0.0
  %1289 = vmatpush1.msra.mxu0 0.0
  %1290 = vmatprep.subr.mxu0 0.0
  %1291 = vmatpush1.msra.mxu0 0.0
  %1292 = vmatprep.subr.mxu0 0.0
  %1293 = vmatpush1.msra.mxu0 0.0
  %1294 = vmatprep.subr.mxu0 0.0
  %1295 = vmatpush1.msra.mxu0 0.0
  %1296 = vmatprep.subr.mxu0 0.0
  %1297 = vmatpush1.msra.mxu0 0.0
  %1298 = vmatprep.subr.mxu0 0.0
  %1299 = vmatpush1.msra.mxu0 0.0
  %1300 = vmatprep.subr.mxu0 0.0
  %1301 = vmatpush1.msra.mxu0 0.0
  %1302 = vmatprep.subr.mxu0 0.0
  %1303 = vmatpush1.msra.mxu0 0.0
  %1304 = vmatprep.mubr.f32.mxu0 0.0
  %1305 = vmatmul.mubr.f32.gmra.mrb[0].mxu0 %v1235
  %v1306 = vpop.f32.mrb[0].mxu0
  %v1307 = vadd.f32 %v1231, %v1306
  %v1308 = vpop.f32.mrb[0].mxu0
  %1309 = vmatprep.mubr.f32.mxu0 0.0
  %1310 = vmatmul.mubr.f32.gmra.mrb[0].mxu0 %v1238
  %v1311 = vpop.f32.mrb[0].mxu0
  %v1312 = vadd.f32 %v1231, %v1311
  %v1313 = vpop.f32.mrb[0].mxu0
  %1314 = vdwg.mxu0
  %v1315 = vadd.f32 %v1122, %v1307
  %v1316 = vadd.f32 %v1123, %v1312
  %v1317 = vld [vmem:[%s12] sm:$0x1]
  %v1318 = vld [vmem:[%s13] sm:$0x1]
  %v1319 = vsel %vm60, %v1315, 0.0
  %1320 = vadd.xlane.f32.xlu0 %v1319
  %v1321 = vpop.xlane.xlu0 %1320
  %v1322 = vsel %vm60, %v1316, 0.0
  %1323 = vadd.xlane.f32.xlu0 %v1322
  %v1324 = vpop.xlane.xlu0 %1323
  %v1325 = vmul.f32 %v1321, %v1087
  %v1326 = vmul.f32 %v1324, %v1087
  %v1327 = vsub.f32 %v1315, %v1325
  %v1328 = vsub.f32 %v1316, %v1326
  %v1329 = vmul.f32 %v1327, %v1327
  %v1330 = vmul.f32 %v1328, %v1328
  %v1331 = vsel %vm60, %v1329, 0.0
  %1332 = vadd.xlane.f32.xlu0 %v1331
  %v1333 = vpop.xlane.xlu0 %1332
  %v1334 = vsel %vm60, %v1330, 0.0
  %1335 = vadd.xlane.f32.xlu0 %v1334
  %v1336 = vpop.xlane.xlu0 %1335
  %v1337 = vmul.f32 %v1333, %v1087
  %v1338 = vmul.f32 %v1336, %v1087
  %v1339 = vadd.f32 %v1337, 1e-05
  %v1340 = vadd.f32 %v1338, 1e-05
  %v1341 = vrsqrt.pop %v1339
  %v1342 = vrsqrt.pop %v1340
  %v1343 = vmul.f32 %v1327, %v1341
  %v1344 = vmul.f32 %v1328, %v1342
  %v1346 = vlaneseq
  %v1347 = vshrl.u32 %v1346, 7
  %v1348 = vsub.s32 0, %v1347
  %v1349 = vrot.slane %v1317, %v1348
  %v1351 = vmul.f32 %v1343, %v1349
  %v1352 = vmul.f32 %v1344, %v1349
  %v1354 = vlaneseq
  %v1355 = vshrl.u32 %v1354, 7
  %v1356 = vsub.s32 0, %v1355
  %v1357 = vrot.slane %v1318, %v1356
  %v1359 = vadd.f32 %v1351, %v1357
  %v1360 = vadd.f32 %v1352, %v1357
  %1361 = vst.msk [vmem:[%s14] sm:$0xff] %vm60, %v1359
  %1362 = vst.msk [vmem:[%s14 + $0x8] sm:$0xff] %vm60, %v1360
  // Predicated region
  $region58: #{my_model_forward.5} parent=0 // pred_check
    _
  $region59: #{my_model_forward.5} parent=0 // pred_check_branch
    %1364 = sbr.rel (0) target = $region61
  $region60: #{my_model_forward.5} parent=0 // pred_region
    _
  $region61: #{my_model_forward.5} parent=0 // pred_fallthru
    _
  // Predicated region
  $region62: #{my_model_forward.5} parent=0 // pred_check
    _
  $region63: #{my_model_forward.5} parent=0 // pred_check_branch
    %1366 = sbr.rel (0) target = $region65
  $region64: #{my_model_forward.5} parent=0 // pred_region
    _
  $region65: #{my_model_forward.5} parent=0 // pred_fallthru
    _

</llo_original>
